<compile_context>
chip_gen: v6e
topology: v6e:2x2x1
jax: 0.10.0
libtpu: 0.0.40
codegen_flags: <defaults>
</compile_context>

<pallas_src>
import jax
import jax.numpy as jnp
from jax.experimental import pallas as pl
from jax.experimental.pallas import tpu as pltpu


def _rnn_kernel(xg0_ref, whh0_ref, w1_ref, b1_ref, wout_ref, bout_ref, out_ref):
    T, B, G4 = xg0_ref.shape
    G = G4 // 4

    # Hoist weight loads / bias broadcast out of the (unrolled) time loop.
    whh0 = whh0_ref[...]                                   # (G, 4G)
    w1 = w1_ref[...]                                       # (2G, 4G)
    b1 = jnp.broadcast_to(b1_ref[...], (B, G4))            # (B, 4G)

    def gate_act(gates, c):
        # gate order (i, f, o, g): one sigmoid slab + one tanh slab.
        sfo = jax.nn.sigmoid(gates[:, :3 * G])             # (B, 3G)
        g_g = jnp.tanh(gates[:, 3 * G:])                   # (B, G)
        i_g = sfo[:, 0 * G:1 * G]
        f_g = sfo[:, 1 * G:2 * G]
        o_g = sfo[:, 2 * G:3 * G]
        c_new = f_g * c + i_g * g_g
        h_new = o_g * jnp.tanh(c_new)
        return h_new, c_new

    def step(t, carry):
        h0, c0, h1, c1 = carry
        # Layer 0: input projection precomputed; one recurrent matmul.
        g0 = xg0_ref[t] + jnp.dot(h0, whh0, preferred_element_type=jnp.float32)
        h0, c0 = gate_act(g0, c0)
        # Layer 1: fused input+recurrent matmul on concatenated [h0, h1].
        g1 = jnp.dot(jnp.concatenate([h0, h1], axis=-1), w1,
                     preferred_element_type=jnp.float32) + b1
        h1, c1 = gate_act(g1, c1)
        return h0, c0, h1, c1

    z = jnp.zeros((B, G), jnp.float32)
    _, _, h1, _ = jax.lax.fori_loop(0, T, step, (z, z, z, z), unroll=True)

    # ReLU -> folded (middle_fc @ fc) in a single matmul; lane-dense output.
    r = jnp.maximum(h1, 0.0)
    out_ref[...] = (jnp.dot(r, wout_ref[...], preferred_element_type=jnp.float32)
                    + bout_ref[...]).astype(out_ref.dtype)


def rnn_model_forward(x, params):
    """x: (B, T, input_size) float32 (batch_first, like the PyTorch module)."""
    B, T, I = x.shape
    G = params["whh0"].shape[0]        # LSTM hidden = hidden_size * 4
    O = params["wfc"].shape[1]         # output_size

    B_pad = max(8, ((B + 7) // 8) * 8)
    O_pad = max(128, ((O + 127) // 128) * 128)

    # ---- weight prep (all outside the recurrence) --------------------------
    def reorder(w):  # columns (.., 4G): PyTorch (i,f,g,o) -> kernel (i,f,o,g)
        return jnp.concatenate(
            [w[..., 0:G], w[..., G:2 * G], w[..., 3 * G:4 * G], w[..., 2 * G:3 * G]],
            axis=-1)

    wih0 = reorder(params["wih0"])
    whh0 = reorder(params["whh0"])
    b0 = reorder(params["b0"])
    wih1 = reorder(params["wih1"])
    whh1 = reorder(params["whh1"])
    b1 = reorder(params["b1"])

    # Fused layer-1 weight: [W_ih1; W_hh1] -> (2G, 4G)
    w1 = jnp.concatenate([wih1, whh1], axis=0)

    # Folded output head: (G, O_pad) and (1, O_pad), zero-padded on lanes.
    wout = params["wmid"] @ params["wfc"]
    bout = params["bmid"] @ params["wfc"] + params["bfc"]
    wout = jnp.pad(wout, ((0, 0), (0, O_pad - O)))
    bout = jnp.pad(bout, ((0, 0), (0, O_pad - O)))

    # Pad batch to a full sublane tile; hoist layer-0 input projection over
    # all time steps into one well-shaped matmul.
    x_pad = jnp.pad(x, ((0, B_pad - B), (0, 0), (0, 0)))          # (B_pad, T, I)
    xg0 = jnp.einsum("bti,ig->btg", x_pad, wih0) + b0             # (B_pad, T, 4G)
    xg0 = jnp.transpose(xg0, (1, 0, 2)).astype(jnp.float32)       # (T, B_pad, 4G)

    out = pl.pallas_call(
        _rnn_kernel,
        out_shape=jax.ShapeDtypeStruct((B_pad, O_pad), jnp.float32),
        grid=(1,),
        in_specs=[
            pl.BlockSpec((T, B_pad, 4 * G), lambda i: (0, 0, 0)),  # xg0
            pl.BlockSpec((G, 4 * G), lambda i: (0, 0)),            # whh0
            pl.BlockSpec((2 * G, 4 * G), lambda i: (0, 0)),        # w1
            pl.BlockSpec((1, 4 * G), lambda i: (0, 0)),            # b1
            pl.BlockSpec((G, O_pad), lambda i: (0, 0)),            # wout (folded)
            pl.BlockSpec((1, O_pad), lambda i: (0, 0)),            # bout (folded)
        ],
        out_specs=pl.BlockSpec((B_pad, O_pad), lambda i: (0, 0)),
        compiler_params=pltpu.CompilerParams(
            dimension_semantics=("arbitrary",)),
    )(xg0, whh0, w1, b1, wout, bout)

    return out[:B, :O]


def make_params(key, input_size, hidden_size, output_size):
    """Deterministic synthetic params matching nn.LSTM / nn.Linear shapes.

    Stored transposed relative to PyTorch (so the math is x @ W), in PyTorch
    gate order (i, f, g, o):
      PyTorch weight_ih_l0: (4G, I)  ->  wih0: (I, 4G), etc., with G = 4*hidden.
    Biases b_ih + b_hh are pre-summed into a single (1, 4G) bias per layer.
    """
    G = hidden_size * 4
    ks = jax.random.split(key, 8)
    s = 0.05
    return {
        "wih0": jax.random.normal(ks[0], (input_size, 4 * G), jnp.float32) * s,
        "whh0": jax.random.normal(ks[1], (G, 4 * G), jnp.float32) * s,
        "b0":   jax.random.normal(ks[2], (1, 4 * G), jnp.float32) * s,
        "wih1": jax.random.normal(ks[3], (G, 4 * G), jnp.float32) * s,
        "whh1": jax.random.normal(ks[4], (G, 4 * G), jnp.float32) * s,
        "b1":   jax.random.normal(ks[5], (1, 4 * G), jnp.float32) * s,
        "wmid": jax.random.normal(ks[6], (G, hidden_size), jnp.float32) * s,
        "bmid": jnp.zeros((1, hidden_size), jnp.float32),
        "wfc":  jax.random.normal(ks[7], (hidden_size, output_size), jnp.float32) * s,
        "bfc":  jnp.zeros((1, output_size), jnp.float32),
    }


def reference_forward(x, p):
    """Pure-JAX reference of the eval-mode PyTorch forward (i,f,g,o order,
    unfused weights, unfolded linears) for verification."""
    B, T, I = x.shape
    G = p["whh0"].shape[0]

    def cell(h, c, xin, wih, whh, b):
        gates = xin @ wih + h @ whh + b
        i = jax.nn.sigmoid(gates[:, 0 * G:1 * G])
        f = jax.nn.sigmoid(gates[:, 1 * G:2 * G])
        g = jnp.tanh(gates[:, 2 * G:3 * G])
        o = jax.nn.sigmoid(gates[:, 3 * G:4 * G])
        c = f * c + i * g
        h = o * jnp.tanh(c)
        return h, c

    h0 = c0 = h1 = c1 = jnp.zeros((B, G), jnp.float32)
    for t in range(T):
        h0, c0 = cell(h0, c0, x[:, t, :], p["wih0"], p["whh0"], p["b0"])
        h1, c1 = cell(h1, c1, h0, p["wih1"], p["whh1"], p["b1"])
    r = jnp.maximum(h1, 0.0)
    mid = r @ p["wmid"] + p["bmid"]
    return mid @ p["wfc"] + p["bfc"]


if __name__ == "__main__":
    B, T = 2, 8
    input_size, hidden_size, output_size = 16, 32, 8   # LSTM hidden G = 128

    key = jax.random.PRNGKey(0)
    kx, kp = jax.random.split(key)
    x = jax.random.normal(kx, (B, T, input_size), jnp.float32)
    params = make_params(kp, input_size, hidden_size, output_size)

    out = rnn_model_forward(x, params)
    out = jax.block_until_ready(out)

    ref = reference_forward(x, params)
    assert out.shape == (B, output_size)
    assert jnp.allclose(out, ref, atol=1e-4, rtol=1e-4), "mismatch vs reference"

    print("KERNEL_OK")
</pallas_src>

<mosaic_0001>
module attributes {stable_mosaic.version = 11 : i64} {
  func.func @_rnn_kernel(%arg0: i32, %arg1: memref<8x8x512xf32, #tpu.memory_space<vmem>>, %arg2: memref<128x512xf32, #tpu.memory_space<vmem>>, %arg3: memref<256x512xf32, #tpu.memory_space<vmem>>, %arg4: memref<1x512xf32, #tpu.memory_space<vmem>>, %arg5: memref<128x128xf32, #tpu.memory_space<vmem>>, %arg6: memref<1x128xf32, #tpu.memory_space<vmem>>, %arg7: memref<8x128xf32, #tpu.memory_space<vmem>>) attributes {dimension_semantics = [#tpu.dimension_semantics<arbitrary>], iteration_bounds = array<i64: 1>, scalar_prefetch = 0 : i64, scratch_operands = 0 : i64, tpu.core_type = #tpu.core_type<tc>, window_params = [{pipeline_mode = #tpu.pipeline_mode<synchronous>, transform_indices = @transform_0, window_bounds = array<i64: 8, 8, 512>}, {pipeline_mode = #tpu.pipeline_mode<synchronous>, transform_indices = @transform_1, window_bounds = array<i64: 128, 512>}, {pipeline_mode = #tpu.pipeline_mode<synchronous>, transform_indices = @transform_2, window_bounds = array<i64: 256, 512>}, {pipeline_mode = #tpu.pipeline_mode<synchronous>, transform_indices = @transform_3, window_bounds = array<i64: 1, 512>}, {pipeline_mode = #tpu.pipeline_mode<synchronous>, transform_indices = @transform_4, window_bounds = array<i64: 128, 128>}, {pipeline_mode = #tpu.pipeline_mode<synchronous>, transform_indices = @transform_5, window_bounds = array<i64: 1, 128>}, {pipeline_mode = #tpu.pipeline_mode<synchronous>, transform_indices = @transform_6, window_bounds = array<i64: 8, 128>}]} {
    %c0 = arith.constant 0 : index
    %c0_0 = arith.constant 0 : index
    %0 = vector.load %arg2[%c0, %c0_0] : memref<128x512xf32, #tpu.memory_space<vmem>>, vector<128x512xf32>
    %c0_1 = arith.constant 0 : index
    %c0_2 = arith.constant 0 : index
    %1 = vector.load %arg3[%c0_1, %c0_2] : memref<256x512xf32, #tpu.memory_space<vmem>>, vector<256x512xf32>
    %c0_3 = arith.constant 0 : index
    %c0_4 = arith.constant 0 : index
    %2 = vector.load %arg4[%c0_3, %c0_4] : memref<1x512xf32, #tpu.memory_space<vmem>>, vector<1x512xf32>
    %3 = vector.shape_cast %2 : vector<1x512xf32> to vector<1x512xf32>
    %4 = vector.broadcast %3 : vector<1x512xf32> to vector<8x512xf32>
    %cst = arith.constant 0.000000e+00 : f32
    %5 = vector.broadcast %cst : f32 to vector<8x128xf32>
    %c0_i32 = arith.constant 0 : i32
    %6 = arith.index_cast %c0_i32 : i32 to index
    %c0_5 = arith.constant 0 : index
    %c0_6 = arith.constant 0 : index
    %7 = vector.load %arg1[%6, %c0_5, %c0_6] : memref<8x8x512xf32, #tpu.memory_space<vmem>>, vector<1x8x512xf32>
    %8 = vector.shape_cast %7 : vector<1x8x512xf32> to vector<8x512xf32>
    %cst_7 = arith.constant dense<0.000000e+00> : vector<8x512xf32>
    %9 = tpu.matmul %5, %0, %cst_7 {dimension_numbers = #tpu.dot_dimension_numbers<[1], [0], [0], [1], [0, 0, 1, 1], [], []>} : vector<8x128xf32>, vector<128x512xf32>, vector<8x512xf32> -> vector<8x512xf32>
    %10 = arith.addf %8, %9 : vector<8x512xf32>
    %11 = vector.extract_strided_slice %10 {offsets = [0, 0], sizes = [8, 384], strides = [1, 1]} : vector<8x512xf32> to vector<8x384xf32>
    %12 = arith.negf %11 : vector<8x384xf32>
    %13 = math.exp %12 : vector<8x384xf32>
    %cst_8 = arith.constant 1.000000e+00 : f32
    %14 = vector.broadcast %cst_8 : f32 to vector<8x384xf32>
    %15 = arith.addf %14, %13 : vector<8x384xf32>
    %16 = arith.divf %14, %15 : vector<8x384xf32>
    %17 = vector.extract_strided_slice %10 {offsets = [0, 384], sizes = [8, 128], strides = [1, 1]} : vector<8x512xf32> to vector<8x128xf32>
    %18 = math.tanh %17 : vector<8x128xf32>
    %19 = vector.extract_strided_slice %16 {offsets = [0, 0], sizes = [8, 128], strides = [1, 1]} : vector<8x384xf32> to vector<8x128xf32>
    %20 = vector.extract_strided_slice %16 {offsets = [0, 128], sizes = [8, 128], strides = [1, 1]} : vector<8x384xf32> to vector<8x128xf32>
    %21 = vector.extract_strided_slice %16 {offsets = [0, 256], sizes = [8, 128], strides = [1, 1]} : vector<8x384xf32> to vector<8x128xf32>
    %22 = arith.mulf %20, %5 : vector<8x128xf32>
    %23 = arith.mulf %19, %18 : vector<8x128xf32>
    %24 = arith.addf %22, %23 : vector<8x128xf32>
    %25 = math.tanh %24 : vector<8x128xf32>
    %26 = arith.mulf %21, %25 : vector<8x128xf32>
    %27 = tpu.concatenate %26, %5 in 1 : vector<8x128xf32>, vector<8x128xf32> -> vector<8x256xf32>
    %cst_9 = arith.constant dense<0.000000e+00> : vector<8x512xf32>
    %28 = tpu.matmul %27, %1, %cst_9 {dimension_numbers = #tpu.dot_dimension_numbers<[1], [0], [0], [1], [0, 0, 1, 1], [], []>} : vector<8x256xf32>, vector<256x512xf32>, vector<8x512xf32> -> vector<8x512xf32>
    %29 = arith.addf %28, %4 : vector<8x512xf32>
    %30 = vector.extract_strided_slice %29 {offsets = [0, 0], sizes = [8, 384], strides = [1, 1]} : vector<8x512xf32> to vector<8x384xf32>
    %31 = arith.negf %30 : vector<8x384xf32>
    %32 = math.exp %31 : vector<8x384xf32>
    %cst_10 = arith.constant 1.000000e+00 : f32
    %33 = vector.broadcast %cst_10 : f32 to vector<8x384xf32>
    %34 = arith.addf %33, %32 : vector<8x384xf32>
    %35 = arith.divf %33, %34 : vector<8x384xf32>
    %36 = vector.extract_strided_slice %29 {offsets = [0, 384], sizes = [8, 128], strides = [1, 1]} : vector<8x512xf32> to vector<8x128xf32>
    %37 = math.tanh %36 : vector<8x128xf32>
    %38 = vector.extract_strided_slice %35 {offsets = [0, 0], sizes = [8, 128], strides = [1, 1]} : vector<8x384xf32> to vector<8x128xf32>
    %39 = vector.extract_strided_slice %35 {offsets = [0, 128], sizes = [8, 128], strides = [1, 1]} : vector<8x384xf32> to vector<8x128xf32>
    %40 = vector.extract_strided_slice %35 {offsets = [0, 256], sizes = [8, 128], strides = [1, 1]} : vector<8x384xf32> to vector<8x128xf32>
    %41 = arith.mulf %39, %5 : vector<8x128xf32>
    %42 = arith.mulf %38, %37 : vector<8x128xf32>
    %43 = arith.addf %41, %42 : vector<8x128xf32>
    %44 = math.tanh %43 : vector<8x128xf32>
    %45 = arith.mulf %40, %44 : vector<8x128xf32>
    %c1_i32 = arith.constant 1 : i32
    %46 = arith.index_cast %c1_i32 : i32 to index
    %c0_11 = arith.constant 0 : index
    %c0_12 = arith.constant 0 : index
    %47 = vector.load %arg1[%46, %c0_11, %c0_12] : memref<8x8x512xf32, #tpu.memory_space<vmem>>, vector<1x8x512xf32>
    %48 = vector.shape_cast %47 : vector<1x8x512xf32> to vector<8x512xf32>
    %cst_13 = arith.constant dense<0.000000e+00> : vector<8x512xf32>
    %49 = tpu.matmul %26, %0, %cst_13 {dimension_numbers = #tpu.dot_dimension_numbers<[1], [0], [0], [1], [0, 0, 1, 1], [], []>} : vector<8x128xf32>, vector<128x512xf32>, vector<8x512xf32> -> vector<8x512xf32>
    %50 = arith.addf %48, %49 : vector<8x512xf32>
    %51 = vector.extract_strided_slice %50 {offsets = [0, 0], sizes = [8, 384], strides = [1, 1]} : vector<8x512xf32> to vector<8x384xf32>
    %52 = arith.negf %51 : vector<8x384xf32>
    %53 = math.exp %52 : vector<8x384xf32>
    %cst_14 = arith.constant 1.000000e+00 : f32
    %54 = vector.broadcast %cst_14 : f32 to vector<8x384xf32>
    %55 = arith.addf %54, %53 : vector<8x384xf32>
    %56 = arith.divf %54, %55 : vector<8x384xf32>
    %57 = vector.extract_strided_slice %50 {offsets = [0, 384], sizes = [8, 128], strides = [1, 1]} : vector<8x512xf32> to vector<8x128xf32>
    %58 = math.tanh %57 : vector<8x128xf32>
    %59 = vector.extract_strided_slice %56 {offsets = [0, 0], sizes = [8, 128], strides = [1, 1]} : vector<8x384xf32> to vector<8x128xf32>
    %60 = vector.extract_strided_slice %56 {offsets = [0, 128], sizes = [8, 128], strides = [1, 1]} : vector<8x384xf32> to vector<8x128xf32>
    %61 = vector.extract_strided_slice %56 {offsets = [0, 256], sizes = [8, 128], strides = [1, 1]} : vector<8x384xf32> to vector<8x128xf32>
    %62 = arith.mulf %60, %24 : vector<8x128xf32>
    %63 = arith.mulf %59, %58 : vector<8x128xf32>
    %64 = arith.addf %62, %63 : vector<8x128xf32>
    %65 = math.tanh %64 : vector<8x128xf32>
    %66 = arith.mulf %61, %65 : vector<8x128xf32>
    %67 = tpu.concatenate %66, %45 in 1 : vector<8x128xf32>, vector<8x128xf32> -> vector<8x256xf32>
    %cst_15 = arith.constant dense<0.000000e+00> : vector<8x512xf32>
    %68 = tpu.matmul %67, %1, %cst_15 {dimension_numbers = #tpu.dot_dimension_numbers<[1], [0], [0], [1], [0, 0, 1, 1], [], []>} : vector<8x256xf32>, vector<256x512xf32>, vector<8x512xf32> -> vector<8x512xf32>
    %69 = arith.addf %68, %4 : vector<8x512xf32>
    %70 = vector.extract_strided_slice %69 {offsets = [0, 0], sizes = [8, 384], strides = [1, 1]} : vector<8x512xf32> to vector<8x384xf32>
    %71 = arith.negf %70 : vector<8x384xf32>
    %72 = math.exp %71 : vector<8x384xf32>
    %cst_16 = arith.constant 1.000000e+00 : f32
    %73 = vector.broadcast %cst_16 : f32 to vector<8x384xf32>
    %74 = arith.addf %73, %72 : vector<8x384xf32>
    %75 = arith.divf %73, %74 : vector<8x384xf32>
    %76 = vector.extract_strided_slice %69 {offsets = [0, 384], sizes = [8, 128], strides = [1, 1]} : vector<8x512xf32> to vector<8x128xf32>
    %77 = math.tanh %76 : vector<8x128xf32>
    %78 = vector.extract_strided_slice %75 {offsets = [0, 0], sizes = [8, 128], strides = [1, 1]} : vector<8x384xf32> to vector<8x128xf32>
    %79 = vector.extract_strided_slice %75 {offsets = [0, 128], sizes = [8, 128], strides = [1, 1]} : vector<8x384xf32> to vector<8x128xf32>
    %80 = vector.extract_strided_slice %75 {offsets = [0, 256], sizes = [8, 128], strides = [1, 1]} : vector<8x384xf32> to vector<8x128xf32>
    %81 = arith.mulf %79, %43 : vector<8x128xf32>
    %82 = arith.mulf %78, %77 : vector<8x128xf32>
    %83 = arith.addf %81, %82 : vector<8x128xf32>
    %84 = math.tanh %83 : vector<8x128xf32>
    %85 = arith.mulf %80, %84 : vector<8x128xf32>
    %c2_i32 = arith.constant 2 : i32
    %86 = arith.index_cast %c2_i32 : i32 to index
    %c0_17 = arith.constant 0 : index
    %c0_18 = arith.constant 0 : index
    %87 = vector.load %arg1[%86, %c0_17, %c0_18] : memref<8x8x512xf32, #tpu.memory_space<vmem>>, vector<1x8x512xf32>
    %88 = vector.shape_cast %87 : vector<1x8x512xf32> to vector<8x512xf32>
    %cst_19 = arith.constant dense<0.000000e+00> : vector<8x512xf32>
    %89 = tpu.matmul %66, %0, %cst_19 {dimension_numbers = #tpu.dot_dimension_numbers<[1], [0], [0], [1], [0, 0, 1, 1], [], []>} : vector<8x128xf32>, vector<128x512xf32>, vector<8x512xf32> -> vector<8x512xf32>
    %90 = arith.addf %88, %89 : vector<8x512xf32>
    %91 = vector.extract_strided_slice %90 {offsets = [0, 0], sizes = [8, 384], strides = [1, 1]} : vector<8x512xf32> to vector<8x384xf32>
    %92 = arith.negf %91 : vector<8x384xf32>
    %93 = math.exp %92 : vector<8x384xf32>
    %cst_20 = arith.constant 1.000000e+00 : f32
    %94 = vector.broadcast %cst_20 : f32 to vector<8x384xf32>
    %95 = arith.addf %94, %93 : vector<8x384xf32>
    %96 = arith.divf %94, %95 : vector<8x384xf32>
    %97 = vector.extract_strided_slice %90 {offsets = [0, 384], sizes = [8, 128], strides = [1, 1]} : vector<8x512xf32> to vector<8x128xf32>
    %98 = math.tanh %97 : vector<8x128xf32>
    %99 = vector.extract_strided_slice %96 {offsets = [0, 0], sizes = [8, 128], strides = [1, 1]} : vector<8x384xf32> to vector<8x128xf32>
    %100 = vector.extract_strided_slice %96 {offsets = [0, 128], sizes = [8, 128], strides = [1, 1]} : vector<8x384xf32> to vector<8x128xf32>
    %101 = vector.extract_strided_slice %96 {offsets = [0, 256], sizes = [8, 128], strides = [1, 1]} : vector<8x384xf32> to vector<8x128xf32>
    %102 = arith.mulf %100, %64 : vector<8x128xf32>
    %103 = arith.mulf %99, %98 : vector<8x128xf32>
    %104 = arith.addf %102, %103 : vector<8x128xf32>
    %105 = math.tanh %104 : vector<8x128xf32>
    %106 = arith.mulf %101, %105 : vector<8x128xf32>
    %107 = tpu.concatenate %106, %85 in 1 : vector<8x128xf32>, vector<8x128xf32> -> vector<8x256xf32>
    %cst_21 = arith.constant dense<0.000000e+00> : vector<8x512xf32>
    %108 = tpu.matmul %107, %1, %cst_21 {dimension_numbers = #tpu.dot_dimension_numbers<[1], [0], [0], [1], [0, 0, 1, 1], [], []>} : vector<8x256xf32>, vector<256x512xf32>, vector<8x512xf32> -> vector<8x512xf32>
    %109 = arith.addf %108, %4 : vector<8x512xf32>
    %110 = vector.extract_strided_slice %109 {offsets = [0, 0], sizes = [8, 384], strides = [1, 1]} : vector<8x512xf32> to vector<8x384xf32>
    %111 = arith.negf %110 : vector<8x384xf32>
    %112 = math.exp %111 : vector<8x384xf32>
    %cst_22 = arith.constant 1.000000e+00 : f32
    %113 = vector.broadcast %cst_22 : f32 to vector<8x384xf32>
    %114 = arith.addf %113, %112 : vector<8x384xf32>
    %115 = arith.divf %113, %114 : vector<8x384xf32>
    %116 = vector.extract_strided_slice %109 {offsets = [0, 384], sizes = [8, 128], strides = [1, 1]} : vector<8x512xf32> to vector<8x128xf32>
    %117 = math.tanh %116 : vector<8x128xf32>
    %118 = vector.extract_strided_slice %115 {offsets = [0, 0], sizes = [8, 128], strides = [1, 1]} : vector<8x384xf32> to vector<8x128xf32>
    %119 = vector.extract_strided_slice %115 {offsets = [0, 128], sizes = [8, 128], strides = [1, 1]} : vector<8x384xf32> to vector<8x128xf32>
    %120 = vector.extract_strided_slice %115 {offsets = [0, 256], sizes = [8, 128], strides = [1, 1]} : vector<8x384xf32> to vector<8x128xf32>
    %121 = arith.mulf %119, %83 : vector<8x128xf32>
    %122 = arith.mulf %118, %117 : vector<8x128xf32>
    %123 = arith.addf %121, %122 : vector<8x128xf32>
    %124 = math.tanh %123 : vector<8x128xf32>
    %125 = arith.mulf %120, %124 : vector<8x128xf32>
    %c3_i32 = arith.constant 3 : i32
    %126 = arith.index_cast %c3_i32 : i32 to index
    %c0_23 = arith.constant 0 : index
    %c0_24 = arith.constant 0 : index
    %127 = vector.load %arg1[%126, %c0_23, %c0_24] : memref<8x8x512xf32, #tpu.memory_space<vmem>>, vector<1x8x512xf32>
    %128 = vector.shape_cast %127 : vector<1x8x512xf32> to vector<8x512xf32>
    %cst_25 = arith.constant dense<0.000000e+00> : vector<8x512xf32>
    %129 = tpu.matmul %106, %0, %cst_25 {dimension_numbers = #tpu.dot_dimension_numbers<[1], [0], [0], [1], [0, 0, 1, 1], [], []>} : vector<8x128xf32>, vector<128x512xf32>, vector<8x512xf32> -> vector<8x512xf32>
    %130 = arith.addf %128, %129 : vector<8x512xf32>
    %131 = vector.extract_strided_slice %130 {offsets = [0, 0], sizes = [8, 384], strides = [1, 1]} : vector<8x512xf32> to vector<8x384xf32>
    %132 = arith.negf %131 : vector<8x384xf32>
    %133 = math.exp %132 : vector<8x384xf32>
    %cst_26 = arith.constant 1.000000e+00 : f32
    %134 = vector.broadcast %cst_26 : f32 to vector<8x384xf32>
    %135 = arith.addf %134, %133 : vector<8x384xf32>
    %136 = arith.divf %134, %135 : vector<8x384xf32>
    %137 = vector.extract_strided_slice %130 {offsets = [0, 384], sizes = [8, 128], strides = [1, 1]} : vector<8x512xf32> to vector<8x128xf32>
    %138 = math.tanh %137 : vector<8x128xf32>
    %139 = vector.extract_strided_slice %136 {offsets = [0, 0], sizes = [8, 128], strides = [1, 1]} : vector<8x384xf32> to vector<8x128xf32>
    %140 = vector.extract_strided_slice %136 {offsets = [0, 128], sizes = [8, 128], strides = [1, 1]} : vector<8x384xf32> to vector<8x128xf32>
    %141 = vector.extract_strided_slice %136 {offsets = [0, 256], sizes = [8, 128], strides = [1, 1]} : vector<8x384xf32> to vector<8x128xf32>
    %142 = arith.mulf %140, %104 : vector<8x128xf32>
    %143 = arith.mulf %139, %138 : vector<8x128xf32>
    %144 = arith.addf %142, %143 : vector<8x128xf32>
    %145 = math.tanh %144 : vector<8x128xf32>
    %146 = arith.mulf %141, %145 : vector<8x128xf32>
    %147 = tpu.concatenate %146, %125 in 1 : vector<8x128xf32>, vector<8x128xf32> -> vector<8x256xf32>
    %cst_27 = arith.constant dense<0.000000e+00> : vector<8x512xf32>
    %148 = tpu.matmul %147, %1, %cst_27 {dimension_numbers = #tpu.dot_dimension_numbers<[1], [0], [0], [1], [0, 0, 1, 1], [], []>} : vector<8x256xf32>, vector<256x512xf32>, vector<8x512xf32> -> vector<8x512xf32>
    %149 = arith.addf %148, %4 : vector<8x512xf32>
    %150 = vector.extract_strided_slice %149 {offsets = [0, 0], sizes = [8, 384], strides = [1, 1]} : vector<8x512xf32> to vector<8x384xf32>
    %151 = arith.negf %150 : vector<8x384xf32>
    %152 = math.exp %151 : vector<8x384xf32>
    %cst_28 = arith.constant 1.000000e+00 : f32
    %153 = vector.broadcast %cst_28 : f32 to vector<8x384xf32>
    %154 = arith.addf %153, %152 : vector<8x384xf32>
    %155 = arith.divf %153, %154 : vector<8x384xf32>
    %156 = vector.extract_strided_slice %149 {offsets = [0, 384], sizes = [8, 128], strides = [1, 1]} : vector<8x512xf32> to vector<8x128xf32>
    %157 = math.tanh %156 : vector<8x128xf32>
    %158 = vector.extract_strided_slice %155 {offsets = [0, 0], sizes = [8, 128], strides = [1, 1]} : vector<8x384xf32> to vector<8x128xf32>
    %159 = vector.extract_strided_slice %155 {offsets = [0, 128], sizes = [8, 128], strides = [1, 1]} : vector<8x384xf32> to vector<8x128xf32>
    %160 = vector.extract_strided_slice %155 {offsets = [0, 256], sizes = [8, 128], strides = [1, 1]} : vector<8x384xf32> to vector<8x128xf32>
    %161 = arith.mulf %159, %123 : vector<8x128xf32>
    %162 = arith.mulf %158, %157 : vector<8x128xf32>
    %163 = arith.addf %161, %162 : vector<8x128xf32>
    %164 = math.tanh %163 : vector<8x128xf32>
    %165 = arith.mulf %160, %164 : vector<8x128xf32>
    %c4_i32 = arith.constant 4 : i32
    %166 = arith.index_cast %c4_i32 : i32 to index
    %c0_29 = arith.constant 0 : index
    %c0_30 = arith.constant 0 : index
    %167 = vector.load %arg1[%166, %c0_29, %c0_30] : memref<8x8x512xf32, #tpu.memory_space<vmem>>, vector<1x8x512xf32>
    %168 = vector.shape_cast %167 : vector<1x8x512xf32> to vector<8x512xf32>
    %cst_31 = arith.constant dense<0.000000e+00> : vector<8x512xf32>
    %169 = tpu.matmul %146, %0, %cst_31 {dimension_numbers = #tpu.dot_dimension_numbers<[1], [0], [0], [1], [0, 0, 1, 1], [], []>} : vector<8x128xf32>, vector<128x512xf32>, vector<8x512xf32> -> vector<8x512xf32>
    %170 = arith.addf %168, %169 : vector<8x512xf32>
    %171 = vector.extract_strided_slice %170 {offsets = [0, 0], sizes = [8, 384], strides = [1, 1]} : vector<8x512xf32> to vector<8x384xf32>
    %172 = arith.negf %171 : vector<8x384xf32>
    %173 = math.exp %172 : vector<8x384xf32>
    %cst_32 = arith.constant 1.000000e+00 : f32
    %174 = vector.broadcast %cst_32 : f32 to vector<8x384xf32>
    %175 = arith.addf %174, %173 : vector<8x384xf32>
    %176 = arith.divf %174, %175 : vector<8x384xf32>
    %177 = vector.extract_strided_slice %170 {offsets = [0, 384], sizes = [8, 128], strides = [1, 1]} : vector<8x512xf32> to vector<8x128xf32>
    %178 = math.tanh %177 : vector<8x128xf32>
    %179 = vector.extract_strided_slice %176 {offsets = [0, 0], sizes = [8, 128], strides = [1, 1]} : vector<8x384xf32> to vector<8x128xf32>
    %180 = vector.extract_strided_slice %176 {offsets = [0, 128], sizes = [8, 128], strides = [1, 1]} : vector<8x384xf32> to vector<8x128xf32>
    %181 = vector.extract_strided_slice %176 {offsets = [0, 256], sizes = [8, 128], strides = [1, 1]} : vector<8x384xf32> to vector<8x128xf32>
    %182 = arith.mulf %180, %144 : vector<8x128xf32>
    %183 = arith.mulf %179, %178 : vector<8x128xf32>
    %184 = arith.addf %182, %183 : vector<8x128xf32>
    %185 = math.tanh %184 : vector<8x128xf32>
    %186 = arith.mulf %181, %185 : vector<8x128xf32>
    %187 = tpu.concatenate %186, %165 in 1 : vector<8x128xf32>, vector<8x128xf32> -> vector<8x256xf32>
    %cst_33 = arith.constant dense<0.000000e+00> : vector<8x512xf32>
    %188 = tpu.matmul %187, %1, %cst_33 {dimension_numbers = #tpu.dot_dimension_numbers<[1], [0], [0], [1], [0, 0, 1, 1], [], []>} : vector<8x256xf32>, vector<256x512xf32>, vector<8x512xf32> -> vector<8x512xf32>
    %189 = arith.addf %188, %4 : vector<8x512xf32>
    %190 = vector.extract_strided_slice %189 {offsets = [0, 0], sizes = [8, 384], strides = [1, 1]} : vector<8x512xf32> to vector<8x384xf32>
    %191 = arith.negf %190 : vector<8x384xf32>
    %192 = math.exp %191 : vector<8x384xf32>
    %cst_34 = arith.constant 1.000000e+00 : f32
    %193 = vector.broadcast %cst_34 : f32 to vector<8x384xf32>
    %194 = arith.addf %193, %192 : vector<8x384xf32>
    %195 = arith.divf %193, %194 : vector<8x384xf32>
    %196 = vector.extract_strided_slice %189 {offsets = [0, 384], sizes = [8, 128], strides = [1, 1]} : vector<8x512xf32> to vector<8x128xf32>
    %197 = math.tanh %196 : vector<8x128xf32>
    %198 = vector.extract_strided_slice %195 {offsets = [0, 0], sizes = [8, 128], strides = [1, 1]} : vector<8x384xf32> to vector<8x128xf32>
    %199 = vector.extract_strided_slice %195 {offsets = [0, 128], sizes = [8, 128], strides = [1, 1]} : vector<8x384xf32> to vector<8x128xf32>
    %200 = vector.extract_strided_slice %195 {offsets = [0, 256], sizes = [8, 128], strides = [1, 1]} : vector<8x384xf32> to vector<8x128xf32>
    %201 = arith.mulf %199, %163 : vector<8x128xf32>
    %202 = arith.mulf %198, %197 : vector<8x128xf32>
    %203 = arith.addf %201, %202 : vector<8x128xf32>
    %204 = math.tanh %203 : vector<8x128xf32>
    %205 = arith.mulf %200, %204 : vector<8x128xf32>
    %c5_i32 = arith.constant 5 : i32
    %206 = arith.index_cast %c5_i32 : i32 to index
    %c0_35 = arith.constant 0 : index
    %c0_36 = arith.constant 0 : index
    %207 = vector.load %arg1[%206, %c0_35, %c0_36] : memref<8x8x512xf32, #tpu.memory_space<vmem>>, vector<1x8x512xf32>
    %208 = vector.shape_cast %207 : vector<1x8x512xf32> to vector<8x512xf32>
    %cst_37 = arith.constant dense<0.000000e+00> : vector<8x512xf32>
    %209 = tpu.matmul %186, %0, %cst_37 {dimension_numbers = #tpu.dot_dimension_numbers<[1], [0], [0], [1], [0, 0, 1, 1], [], []>} : vector<8x128xf32>, vector<128x512xf32>, vector<8x512xf32> -> vector<8x512xf32>
    %210 = arith.addf %208, %209 : vector<8x512xf32>
    %211 = vector.extract_strided_slice %210 {offsets = [0, 0], sizes = [8, 384], strides = [1, 1]} : vector<8x512xf32> to vector<8x384xf32>
    %212 = arith.negf %211 : vector<8x384xf32>
    %213 = math.exp %212 : vector<8x384xf32>
    %cst_38 = arith.constant 1.000000e+00 : f32
    %214 = vector.broadcast %cst_38 : f32 to vector<8x384xf32>
    %215 = arith.addf %214, %213 : vector<8x384xf32>
    %216 = arith.divf %214, %215 : vector<8x384xf32>
    %217 = vector.extract_strided_slice %210 {offsets = [0, 384], sizes = [8, 128], strides = [1, 1]} : vector<8x512xf32> to vector<8x128xf32>
    %218 = math.tanh %217 : vector<8x128xf32>
    %219 = vector.extract_strided_slice %216 {offsets = [0, 0], sizes = [8, 128], strides = [1, 1]} : vector<8x384xf32> to vector<8x128xf32>
    %220 = vector.extract_strided_slice %216 {offsets = [0, 128], sizes = [8, 128], strides = [1, 1]} : vector<8x384xf32> to vector<8x128xf32>
    %221 = vector.extract_strided_slice %216 {offsets = [0, 256], sizes = [8, 128], strides = [1, 1]} : vector<8x384xf32> to vector<8x128xf32>
    %222 = arith.mulf %220, %184 : vector<8x128xf32>
    %223 = arith.mulf %219, %218 : vector<8x128xf32>
    %224 = arith.addf %222, %223 : vector<8x128xf32>
    %225 = math.tanh %224 : vector<8x128xf32>
    %226 = arith.mulf %221, %225 : vector<8x128xf32>
    %227 = tpu.concatenate %226, %205 in 1 : vector<8x128xf32>, vector<8x128xf32> -> vector<8x256xf32>
    %cst_39 = arith.constant dense<0.000000e+00> : vector<8x512xf32>
    %228 = tpu.matmul %227, %1, %cst_39 {dimension_numbers = #tpu.dot_dimension_numbers<[1], [0], [0], [1], [0, 0, 1, 1], [], []>} : vector<8x256xf32>, vector<256x512xf32>, vector<8x512xf32> -> vector<8x512xf32>
    %229 = arith.addf %228, %4 : vector<8x512xf32>
    %230 = vector.extract_strided_slice %229 {offsets = [0, 0], sizes = [8, 384], strides = [1, 1]} : vector<8x512xf32> to vector<8x384xf32>
    %231 = arith.negf %230 : vector<8x384xf32>
    %232 = math.exp %231 : vector<8x384xf32>
    %cst_40 = arith.constant 1.000000e+00 : f32
    %233 = vector.broadcast %cst_40 : f32 to vector<8x384xf32>
    %234 = arith.addf %233, %232 : vector<8x384xf32>
    %235 = arith.divf %233, %234 : vector<8x384xf32>
    %236 = vector.extract_strided_slice %229 {offsets = [0, 384], sizes = [8, 128], strides = [1, 1]} : vector<8x512xf32> to vector<8x128xf32>
    %237 = math.tanh %236 : vector<8x128xf32>
    %238 = vector.extract_strided_slice %235 {offsets = [0, 0], sizes = [8, 128], strides = [1, 1]} : vector<8x384xf32> to vector<8x128xf32>
    %239 = vector.extract_strided_slice %235 {offsets = [0, 128], sizes = [8, 128], strides = [1, 1]} : vector<8x384xf32> to vector<8x128xf32>
    %240 = vector.extract_strided_slice %235 {offsets = [0, 256], sizes = [8, 128], strides = [1, 1]} : vector<8x384xf32> to vector<8x128xf32>
    %241 = arith.mulf %239, %203 : vector<8x128xf32>
    %242 = arith.mulf %238, %237 : vector<8x128xf32>
    %243 = arith.addf %241, %242 : vector<8x128xf32>
    %244 = math.tanh %243 : vector<8x128xf32>
    %245 = arith.mulf %240, %244 : vector<8x128xf32>
    %c6_i32 = arith.constant 6 : i32
    %246 = arith.index_cast %c6_i32 : i32 to index
    %c0_41 = arith.constant 0 : index
    %c0_42 = arith.constant 0 : index
    %247 = vector.load %arg1[%246, %c0_41, %c0_42] : memref<8x8x512xf32, #tpu.memory_space<vmem>>, vector<1x8x512xf32>
    %248 = vector.shape_cast %247 : vector<1x8x512xf32> to vector<8x512xf32>
    %cst_43 = arith.constant dense<0.000000e+00> : vector<8x512xf32>
    %249 = tpu.matmul %226, %0, %cst_43 {dimension_numbers = #tpu.dot_dimension_numbers<[1], [0], [0], [1], [0, 0, 1, 1], [], []>} : vector<8x128xf32>, vector<128x512xf32>, vector<8x512xf32> -> vector<8x512xf32>
    %250 = arith.addf %248, %249 : vector<8x512xf32>
    %251 = vector.extract_strided_slice %250 {offsets = [0, 0], sizes = [8, 384], strides = [1, 1]} : vector<8x512xf32> to vector<8x384xf32>
    %252 = arith.negf %251 : vector<8x384xf32>
    %253 = math.exp %252 : vector<8x384xf32>
    %cst_44 = arith.constant 1.000000e+00 : f32
    %254 = vector.broadcast %cst_44 : f32 to vector<8x384xf32>
    %255 = arith.addf %254, %253 : vector<8x384xf32>
    %256 = arith.divf %254, %255 : vector<8x384xf32>
    %257 = vector.extract_strided_slice %250 {offsets = [0, 384], sizes = [8, 128], strides = [1, 1]} : vector<8x512xf32> to vector<8x128xf32>
    %258 = math.tanh %257 : vector<8x128xf32>
    %259 = vector.extract_strided_slice %256 {offsets = [0, 0], sizes = [8, 128], strides = [1, 1]} : vector<8x384xf32> to vector<8x128xf32>
    %260 = vector.extract_strided_slice %256 {offsets = [0, 128], sizes = [8, 128], strides = [1, 1]} : vector<8x384xf32> to vector<8x128xf32>
    %261 = vector.extract_strided_slice %256 {offsets = [0, 256], sizes = [8, 128], strides = [1, 1]} : vector<8x384xf32> to vector<8x128xf32>
    %262 = arith.mulf %260, %224 : vector<8x128xf32>
    %263 = arith.mulf %259, %258 : vector<8x128xf32>
    %264 = arith.addf %262, %263 : vector<8x128xf32>
    %265 = math.tanh %264 : vector<8x128xf32>
    %266 = arith.mulf %261, %265 : vector<8x128xf32>
    %267 = tpu.concatenate %266, %245 in 1 : vector<8x128xf32>, vector<8x128xf32> -> vector<8x256xf32>
    %cst_45 = arith.constant dense<0.000000e+00> : vector<8x512xf32>
    %268 = tpu.matmul %267, %1, %cst_45 {dimension_numbers = #tpu.dot_dimension_numbers<[1], [0], [0], [1], [0, 0, 1, 1], [], []>} : vector<8x256xf32>, vector<256x512xf32>, vector<8x512xf32> -> vector<8x512xf32>
    %269 = arith.addf %268, %4 : vector<8x512xf32>
    %270 = vector.extract_strided_slice %269 {offsets = [0, 0], sizes = [8, 384], strides = [1, 1]} : vector<8x512xf32> to vector<8x384xf32>
    %271 = arith.negf %270 : vector<8x384xf32>
    %272 = math.exp %271 : vector<8x384xf32>
    %cst_46 = arith.constant 1.000000e+00 : f32
    %273 = vector.broadcast %cst_46 : f32 to vector<8x384xf32>
    %274 = arith.addf %273, %272 : vector<8x384xf32>
    %275 = arith.divf %273, %274 : vector<8x384xf32>
    %276 = vector.extract_strided_slice %269 {offsets = [0, 384], sizes = [8, 128], strides = [1, 1]} : vector<8x512xf32> to vector<8x128xf32>
    %277 = math.tanh %276 : vector<8x128xf32>
    %278 = vector.extract_strided_slice %275 {offsets = [0, 0], sizes = [8, 128], strides = [1, 1]} : vector<8x384xf32> to vector<8x128xf32>
    %279 = vector.extract_strided_slice %275 {offsets = [0, 128], sizes = [8, 128], strides = [1, 1]} : vector<8x384xf32> to vector<8x128xf32>
    %280 = vector.extract_strided_slice %275 {offsets = [0, 256], sizes = [8, 128], strides = [1, 1]} : vector<8x384xf32> to vector<8x128xf32>
    %281 = arith.mulf %279, %243 : vector<8x128xf32>
    %282 = arith.mulf %278, %277 : vector<8x128xf32>
    %283 = arith.addf %281, %282 : vector<8x128xf32>
    %284 = math.tanh %283 : vector<8x128xf32>
    %285 = arith.mulf %280, %284 : vector<8x128xf32>
    %c7_i32 = arith.constant 7 : i32
    %286 = arith.index_cast %c7_i32 : i32 to index
    %c0_47 = arith.constant 0 : index
    %c0_48 = arith.constant 0 : index
    %287 = vector.load %arg1[%286, %c0_47, %c0_48] : memref<8x8x512xf32, #tpu.memory_space<vmem>>, vector<1x8x512xf32>
    %288 = vector.shape_cast %287 : vector<1x8x512xf32> to vector<8x512xf32>
    %cst_49 = arith.constant dense<0.000000e+00> : vector<8x512xf32>
    %289 = tpu.matmul %266, %0, %cst_49 {dimension_numbers = #tpu.dot_dimension_numbers<[1], [0], [0], [1], [0, 0, 1, 1], [], []>} : vector<8x128xf32>, vector<128x512xf32>, vector<8x512xf32> -> vector<8x512xf32>
    %290 = arith.addf %288, %289 : vector<8x512xf32>
    %291 = vector.extract_strided_slice %290 {offsets = [0, 0], sizes = [8, 384], strides = [1, 1]} : vector<8x512xf32> to vector<8x384xf32>
    %292 = arith.negf %291 : vector<8x384xf32>
    %293 = math.exp %292 : vector<8x384xf32>
    %cst_50 = arith.constant 1.000000e+00 : f32
    %294 = vector.broadcast %cst_50 : f32 to vector<8x384xf32>
    %295 = arith.addf %294, %293 : vector<8x384xf32>
    %296 = arith.divf %294, %295 : vector<8x384xf32>
    %297 = vector.extract_strided_slice %290 {offsets = [0, 384], sizes = [8, 128], strides = [1, 1]} : vector<8x512xf32> to vector<8x128xf32>
    %298 = math.tanh %297 : vector<8x128xf32>
    %299 = vector.extract_strided_slice %296 {offsets = [0, 0], sizes = [8, 128], strides = [1, 1]} : vector<8x384xf32> to vector<8x128xf32>
    %300 = vector.extract_strided_slice %296 {offsets = [0, 128], sizes = [8, 128], strides = [1, 1]} : vector<8x384xf32> to vector<8x128xf32>
    %301 = vector.extract_strided_slice %296 {offsets = [0, 256], sizes = [8, 128], strides = [1, 1]} : vector<8x384xf32> to vector<8x128xf32>
    %302 = arith.mulf %300, %264 : vector<8x128xf32>
    %303 = arith.mulf %299, %298 : vector<8x128xf32>
    %304 = arith.addf %302, %303 : vector<8x128xf32>
    %305 = math.tanh %304 : vector<8x128xf32>
    %306 = arith.mulf %301, %305 : vector<8x128xf32>
    %307 = tpu.concatenate %306, %285 in 1 : vector<8x128xf32>, vector<8x128xf32> -> vector<8x256xf32>
    %cst_51 = arith.constant dense<0.000000e+00> : vector<8x512xf32>
    %308 = tpu.matmul %307, %1, %cst_51 {dimension_numbers = #tpu.dot_dimension_numbers<[1], [0], [0], [1], [0, 0, 1, 1], [], []>} : vector<8x256xf32>, vector<256x512xf32>, vector<8x512xf32> -> vector<8x512xf32>
    %309 = arith.addf %308, %4 : vector<8x512xf32>
    %310 = vector.extract_strided_slice %309 {offsets = [0, 0], sizes = [8, 384], strides = [1, 1]} : vector<8x512xf32> to vector<8x384xf32>
    %311 = arith.negf %310 : vector<8x384xf32>
    %312 = math.exp %311 : vector<8x384xf32>
    %cst_52 = arith.constant 1.000000e+00 : f32
    %313 = vector.broadcast %cst_52 : f32 to vector<8x384xf32>
    %314 = arith.addf %313, %312 : vector<8x384xf32>
    %315 = arith.divf %313, %314 : vector<8x384xf32>
    %316 = vector.extract_strided_slice %309 {offsets = [0, 384], sizes = [8, 128], strides = [1, 1]} : vector<8x512xf32> to vector<8x128xf32>
    %317 = math.tanh %316 : vector<8x128xf32>
    %318 = vector.extract_strided_slice %315 {offsets = [0, 0], sizes = [8, 128], strides = [1, 1]} : vector<8x384xf32> to vector<8x128xf32>
    %319 = vector.extract_strided_slice %315 {offsets = [0, 128], sizes = [8, 128], strides = [1, 1]} : vector<8x384xf32> to vector<8x128xf32>
    %320 = vector.extract_strided_slice %315 {offsets = [0, 256], sizes = [8, 128], strides = [1, 1]} : vector<8x384xf32> to vector<8x128xf32>
    %321 = arith.mulf %319, %283 : vector<8x128xf32>
    %322 = arith.mulf %318, %317 : vector<8x128xf32>
    %323 = arith.addf %321, %322 : vector<8x128xf32>
    %324 = math.tanh %323 : vector<8x128xf32>
    %325 = arith.mulf %320, %324 : vector<8x128xf32>
    %c8_i32 = arith.constant 8 : i32
    %cst_53 = arith.constant 0.000000e+00 : f32
    %326 = vector.broadcast %cst_53 : f32 to vector<8x128xf32>
    %327 = arith.maximumf %325, %326 : vector<8x128xf32>
    %c0_54 = arith.constant 0 : index
    %c0_55 = arith.constant 0 : index
    %328 = vector.load %arg5[%c0_54, %c0_55] : memref<128x128xf32, #tpu.memory_space<vmem>>, vector<128x128xf32>
    %cst_56 = arith.constant dense<0.000000e+00> : vector<8x128xf32>
    %329 = tpu.matmul %327, %328, %cst_56 {dimension_numbers = #tpu.dot_dimension_numbers<[1], [0], [0], [1], [0, 0, 1, 1], [], []>} : vector<8x128xf32>, vector<128x128xf32>, vector<8x128xf32> -> vector<8x128xf32>
    %c0_57 = arith.constant 0 : index
    %c0_58 = arith.constant 0 : index
    %330 = vector.load %arg6[%c0_57, %c0_58] : memref<1x128xf32, #tpu.memory_space<vmem>>, vector<1x128xf32>
    %331 = vector.broadcast %330 : vector<1x128xf32> to vector<8x128xf32>
    %332 = arith.addf %329, %331 : vector<8x128xf32>
    %c0_59 = arith.constant 0 : index
    %c0_60 = arith.constant 0 : index
    %333 = vector.load %arg7[%c0_59, %c0_60] : memref<8x128xf32, #tpu.memory_space<vmem>>, vector<8x128xf32>
    tpu.vector_store %arg7[%c0_59, %c0_60], %332 {strides = array<i32>} : memref<8x128xf32, #tpu.memory_space<vmem>>, vector<8x128xf32>,
    return
  }
  func.func @transform_0(%arg0: i32) -> (i32, i32, i32) {
    %c0_i32 = arith.constant 0 : i32
    %c0_i32_0 = arith.constant 0 : i32
    %c0_i32_1 = arith.constant 0 : i32
    %c0_i32_2 = arith.constant 0 : i32
    return %c0_i32, %c0_i32_0, %c0_i32_1 : i32, i32, i32
  }
  func.func @transform_1(%arg0: i32) -> (i32, i32) {
    %c0_i32 = arith.constant 0 : i32
    %c0_i32_0 = arith.constant 0 : i32
    %c0_i32_1 = arith.constant 0 : i32
    return %c0_i32, %c0_i32_0 : i32, i32
  }
  func.func @transform_2(%arg0: i32) -> (i32, i32) {
    %c0_i32 = arith.constant 0 : i32
    %c0_i32_0 = arith.constant 0 : i32
    %c0_i32_1 = arith.constant 0 : i32
    return %c0_i32, %c0_i32_0 : i32, i32
  }
  func.func @transform_3(%arg0: i32) -> (i32, i32) {
    %c0_i32 = arith.constant 0 : i32
    %c0_i32_0 = arith.constant 0 : i32
    %c0_i32_1 = arith.constant 0 : i32
    return %c0_i32, %c0_i32_0 : i32, i32
  }
  func.func @transform_4(%arg0: i32) -> (i32, i32) {
    %c0_i32 = arith.constant 0 : i32
    %c0_i32_0 = arith.constant 0 : i32
    %c0_i32_1 = arith.constant 0 : i32
    return %c0_i32, %c0_i32_0 : i32, i32
  }
  func.func @transform_5(%arg0: i32) -> (i32, i32) {
    %c0_i32 = arith.constant 0 : i32
    %c0_i32_0 = arith.constant 0 : i32
    %c0_i32_1 = arith.constant 0 : i32
    return %c0_i32, %c0_i32_0 : i32, i32
  }
  func.func @transform_6(%arg0: i32) -> (i32, i32) {
    %c0_i32 = arith.constant 0 : i32
    %c0_i32_0 = arith.constant 0 : i32
    %c0_i32_1 = arith.constant 0 : i32
    return %c0_i32, %c0_i32_0 : i32, i32
  }
}

</mosaic_0001>

<llo_original>
// kernel: tpu_custom_call.1
$region0: #{tpu_custom_call.1}
  #allocation0 [shape = 'u32[]', space=smem, size = 0x4, offset = 0x4, fixed_abs, tag = 'smem constant byte address 0x4 - core index']
  #allocation1 [shape = 'u32[144,128]{1,0:T(1,128)}', space=vmem, size = 0x12000, scoped, tag = 'internal scratch']
  %s0 = inlined_call_operand.hbm [shape: f32[8,8,512], index: 0, kind: input, shape index: {}]
  %s1 = inlined_call_operand.hbm [shape: f32[128,512], index: 1, kind: input, shape index: {}]
  %s2 = inlined_call_operand.hbm [shape: f32[256,512], index: 2, kind: input, shape index: {}]
  %s3 = inlined_call_operand.vmem [shape: f32[1,512], index: 3, kind: input, shape index: {}]
  %s4 = inlined_call_operand.hbm [shape: f32[128,128], index: 4, kind: input, shape index: {}]
  %s5 = inlined_call_operand.vmem [shape: f32[1,128], index: 5, kind: input, shape index: {}]
  %s6 = inlined_call_operand.hbm [shape: f32[8,128], index: 6, kind: output, shape index: {}]
  %s7 = sld [smem:[#allocation0]]
  $region50: #{tpu_custom_call.1} parent=0
    _
  %s9 = ssub.s32 1, %s7
  %s10 = scalar_select 0, %s9, %s7
  $region1: #{tpu_custom_call.1} parent=0
    #allocation2 [shape = 'u8[131072]{0}', space=vmem, size = 0x20000, scoped, tag = 'input window, operand 0, single buffered']
    #allocation3 [shape = 's32[1]{0}', space=sflag, size = 0x4, scoped, tag = 'scoped memory for tpu_custom_call.1']
    #allocation4 [shape = 's32[1]{0}', space=sflag, size = 0x4, scoped, tag = 'scoped memory for tpu_custom_call.1']
    #allocation5 [shape = 'u8[262144]{0}', space=vmem, size = 0x40000, scoped, tag = 'input window, operand 1, single buffered']
    #allocation6 [shape = 's32[1]{0}', space=sflag, size = 0x4, scoped, tag = 'scoped memory for tpu_custom_call.1']
    #allocation7 [shape = 'u8[524288]{0}', space=vmem, size = 0x80000, scoped, tag = 'input window, operand 2, single buffered']
    #allocation8 [shape = 'u8[65536]{0}', space=vmem, size = 0x10000, scoped, tag = 'input window, operand 4, single buffered']
    #allocation9 [shape = 's32[1]{0}', space=sflag, size = 0x4, scoped, tag = 'scoped memory for tpu_custom_call.1']
    #allocation10 [shape = 'u8[4096]{0}', space=vmem, size = 0x1000, scoped, tag = 'output window, operand 0, single buffered']
    %11 = vsyncpa [#allocation3], 0
    %12 = vsyncpa [#allocation6], 0
    %13 = vsyncpa [#allocation9], 0
    %14 = vsyncpa [#allocation4], 0
    // Predicated region
    $region2: #{tpu_custom_call.1} parent=1 // pred_check
      _
    $region3: #{tpu_custom_call.1} parent=1 // pred_check_branch
      %16 = sbr.rel (0) target = $region5
    $region4: #{tpu_custom_call.1} parent=1 // pred_region
      %s18 = ssub.s32 4096, 4096
      %19 = vsyncadd [#allocation3], %s18
      %s20 = sshll.u32 [#allocation2], 4
      %s21 = int_to_ptr.vmem [resolvable:$true] %s20
      %26 = dma.hbm_to_vmem [thread:$0]  %s0, 4096, %s21, [#allocation3], 512, 512, 32
    $region5: #{tpu_custom_call.1} parent=1 // pred_fallthru
      _
    // Predicated region
    $region6: #{tpu_custom_call.1} parent=1 // pred_check
      _
    $region7: #{tpu_custom_call.1} parent=1 // pred_check_branch
      %28 = sbr.rel (0) target = $region9
    $region8: #{tpu_custom_call.1} parent=1 // pred_region
      %s30 = ssub.s32 8192, 8192
      %31 = vsyncadd [#allocation6], %s30
      %s32 = sshll.u32 [#allocation5], 4
      %s33 = int_to_ptr.vmem [resolvable:$true] %s32
      %38 = dma.hbm_to_vmem [thread:$0]  %s1, 8192, %s33, [#allocation6], 512, 512, 32
    $region9: #{tpu_custom_call.1} parent=1 // pred_fallthru
      _
    // Predicated region
    $region10: #{tpu_custom_call.1} parent=1 // pred_check
      _
    $region11: #{tpu_custom_call.1} parent=1 // pred_check_branch
      %40 = sbr.rel (0) target = $region13
    $region12: #{tpu_custom_call.1} parent=1 // pred_region
      %s42 = ssub.s32 16384, 16384
      %43 = vsyncadd [#allocation6], %s42
      %s44 = sshll.u32 [#allocation7], 4
      %s45 = int_to_ptr.vmem [resolvable:$true] %s44
      %50 = dma.hbm_to_vmem [thread:$0]  %s2, 16384, %s45, [#allocation6], 512, 512, 32
    $region13: #{tpu_custom_call.1} parent=1 // pred_fallthru
      _
    // Predicated region
    $region14: #{tpu_custom_call.1} parent=1 // pred_check
      _
    $region15: #{tpu_custom_call.1} parent=1 // pred_check_branch
      %52 = sbr.rel (0) target = $region17
    $region16: #{tpu_custom_call.1} parent=1 // pred_region
      _
    $region17: #{tpu_custom_call.1} parent=1 // pred_fallthru
      _
    // Predicated region
    $region18: #{tpu_custom_call.1} parent=1 // pred_check
      _
    $region19: #{tpu_custom_call.1} parent=1 // pred_check_branch
      %54 = sbr.rel (0) target = $region21
    $region20: #{tpu_custom_call.1} parent=1 // pred_region
      %s56 = ssub.s32 2048, 2048
      %57 = vsyncadd [#allocation9], %s56
      %s58 = sshll.u32 [#allocation8], 4
      %s59 = int_to_ptr.vmem [resolvable:$true] %s58
      %64 = dma.hbm_to_vmem [thread:$0]  %s4, 2048, %s59, [#allocation9], 128, 128, 8
    $region21: #{tpu_custom_call.1} parent=1 // pred_fallthru
      _
    // Predicated region
    $region22: #{tpu_custom_call.1} parent=1 // pred_check
      _
    $region23: #{tpu_custom_call.1} parent=1 // pred_check_branch
      %66 = sbr.rel (0) target = $region25
    $region24: #{tpu_custom_call.1} parent=1 // pred_region
      _
    $region25: #{tpu_custom_call.1} parent=1 // pred_fallthru
      _
    // Predicated region
    $region26: #{tpu_custom_call.1} parent=1 // pred_check
      _
    $region27: #{tpu_custom_call.1} parent=1 // pred_check_branch
      %68 = sbr.rel (0) target = $region29
    $region28: #{tpu_custom_call.1} parent=1 // pred_region
      %69 = dma.done [#allocation3], 4096
    $region29: #{tpu_custom_call.1} parent=1 // pred_fallthru
      _
    // Predicated region
    $region30: #{tpu_custom_call.1} parent=1 // pred_check
      _
    $region31: #{tpu_custom_call.1} parent=1 // pred_check_branch
      %71 = sbr.rel (0) target = $region33
    $region32: #{tpu_custom_call.1} parent=1 // pred_region
      %72 = dma.done [#allocation6], 8192
    $region33: #{tpu_custom_call.1} parent=1 // pred_fallthru
      _
    // Predicated region
    $region34: #{tpu_custom_call.1} parent=1 // pred_check
      _
    $region35: #{tpu_custom_call.1} parent=1 // pred_check_branch
      %74 = sbr.rel (0) target = $region37
    $region36: #{tpu_custom_call.1} parent=1 // pred_region
      %75 = dma.done [#allocation6], 16384
    $region37: #{tpu_custom_call.1} parent=1 // pred_fallthru
      _
    // Predicated region
    $region38: #{tpu_custom_call.1} parent=1 // pred_check
      _
    $region39: #{tpu_custom_call.1} parent=1 // pred_check_branch
      %77 = sbr.rel (0) target = $region41
    $region40: #{tpu_custom_call.1} parent=1 // pred_region
      %78 = dma.done [#allocation9], 2048
    $region41: #{tpu_custom_call.1} parent=1 // pred_fallthru
      _
    %v79 = vld [vmem:[#allocation5] sm:$0xff]
    %v80 = vld [vmem:[#allocation5 + $0x8] sm:$0xff]
    %v81 = vld [vmem:[#allocation5 + $0x10] sm:$0xff]
    %v82 = vld [vmem:[#allocation5 + $0x18] sm:$0xff]
    %v83 = vld [vmem:[#allocation5 + $0x20] sm:$0xff]
    %v84 = vld [vmem:[#allocation5 + $0x28] sm:$0xff]
    %v85 = vld [vmem:[#allocation5 + $0x30] sm:$0xff]
    %v86 = vld [vmem:[#allocation5 + $0x38] sm:$0xff]
    %v87 = vld [vmem:[#allocation5 + $0x40] sm:$0xff]
    %v88 = vld [vmem:[#allocation5 + $0x48] sm:$0xff]
    %v89 = vld [vmem:[#allocation5 + $0x50] sm:$0xff]
    %v90 = vld [vmem:[#allocation5 + $0x58] sm:$0xff]
    %v91 = vld [vmem:[#allocation5 + $0x60] sm:$0xff]
    %v92 = vld [vmem:[#allocation5 + $0x68] sm:$0xff]
    %v93 = vld [vmem:[#allocation5 + $0x70] sm:$0xff]
    %v94 = vld [vmem:[#allocation5 + $0x78] sm:$0xff]
    %v95 = vld [vmem:[#allocation5 + $0x80] sm:$0xff]
    %v96 = vld [vmem:[#allocation5 + $0x88] sm:$0xff]
    %v97 = vld [vmem:[#allocation5 + $0x90] sm:$0xff]
    %v98 = vld [vmem:[#allocation5 + $0x98] sm:$0xff]
    %v99 = vld [vmem:[#allocation5 + $0xa0] sm:$0xff]
    %v100 = vld [vmem:[#allocation5 + $0xa8] sm:$0xff]
    %v101 = vld [vmem:[#allocation5 + $0xb0] sm:$0xff]
    %v102 = vld [vmem:[#allocation5 + $0xb8] sm:$0xff]
    %v103 = vld [vmem:[#allocation5 + $0xc0] sm:$0xff]
    %v104 = vld [vmem:[#allocation5 + $0xc8] sm:$0xff]
    %v105 = vld [vmem:[#allocation5 + $0xd0] sm:$0xff]
    %v106 = vld [vmem:[#allocation5 + $0xd8] sm:$0xff]
    %v107 = vld [vmem:[#allocation5 + $0xe0] sm:$0xff]
    %v108 = vld [vmem:[#allocation5 + $0xe8] sm:$0xff]
    %v109 = vld [vmem:[#allocation5 + $0xf0] sm:$0xff]
    %v110 = vld [vmem:[#allocation5 + $0xf8] sm:$0xff]
    %v111 = vld [vmem:[#allocation5 + $0x100] sm:$0xff]
    %v112 = vld [vmem:[#allocation5 + $0x108] sm:$0xff]
    %v113 = vld [vmem:[#allocation5 + $0x110] sm:$0xff]
    %v114 = vld [vmem:[#allocation5 + $0x118] sm:$0xff]
    %v115 = vld [vmem:[#allocation5 + $0x120] sm:$0xff]
    %v116 = vld [vmem:[#allocation5 + $0x128] sm:$0xff]
    %v117 = vld [vmem:[#allocation5 + $0x130] sm:$0xff]
    %v118 = vld [vmem:[#allocation5 + $0x138] sm:$0xff]
    %v119 = vld [vmem:[#allocation5 + $0x140] sm:$0xff]
    %v120 = vld [vmem:[#allocation5 + $0x148] sm:$0xff]
    %v121 = vld [vmem:[#allocation5 + $0x150] sm:$0xff]
    %v122 = vld [vmem:[#allocation5 + $0x158] sm:$0xff]
    %v123 = vld [vmem:[#allocation5 + $0x160] sm:$0xff]
    %v124 = vld [vmem:[#allocation5 + $0x168] sm:$0xff]
    %v125 = vld [vmem:[#allocation5 + $0x170] sm:$0xff]
    %v126 = vld [vmem:[#allocation5 + $0x178] sm:$0xff]
    %v127 = vld [vmem:[#allocation5 + $0x180] sm:$0xff]
    %v128 = vld [vmem:[#allocation5 + $0x188] sm:$0xff]
    %v129 = vld [vmem:[#allocation5 + $0x190] sm:$0xff]
    %v130 = vld [vmem:[#allocation5 + $0x198] sm:$0xff]
    %v131 = vld [vmem:[#allocation5 + $0x1a0] sm:$0xff]
    %v132 = vld [vmem:[#allocation5 + $0x1a8] sm:$0xff]
    %v133 = vld [vmem:[#allocation5 + $0x1b0] sm:$0xff]
    %v134 = vld [vmem:[#allocation5 + $0x1b8] sm:$0xff]
    %v135 = vld [vmem:[#allocation5 + $0x1c0] sm:$0xff]
    %v136 = vld [vmem:[#allocation5 + $0x1c8] sm:$0xff]
    %v137 = vld [vmem:[#allocation5 + $0x1d0] sm:$0xff]
    %v138 = vld [vmem:[#allocation5 + $0x1d8] sm:$0xff]
    %v139 = vld [vmem:[#allocation5 + $0x1e0] sm:$0xff]
    %v140 = vld [vmem:[#allocation5 + $0x1e8] sm:$0xff]
    %v141 = vld [vmem:[#allocation5 + $0x1f0] sm:$0xff]
    %v142 = vld [vmem:[#allocation5 + $0x1f8] sm:$0xff]
    %v143 = vld [vmem:[#allocation7] sm:$0xff]
    %v144 = vld [vmem:[#allocation7 + $0x8] sm:$0xff]
    %v145 = vld [vmem:[#allocation7 + $0x10] sm:$0xff]
    %v146 = vld [vmem:[#allocation7 + $0x18] sm:$0xff]
    %v147 = vld [vmem:[#allocation7 + $0x20] sm:$0xff]
    %v148 = vld [vmem:[#allocation7 + $0x28] sm:$0xff]
    %v149 = vld [vmem:[#allocation7 + $0x30] sm:$0xff]
    %v150 = vld [vmem:[#allocation7 + $0x38] sm:$0xff]
    %v151 = vld [vmem:[#allocation7 + $0x40] sm:$0xff]
    %v152 = vld [vmem:[#allocation7 + $0x48] sm:$0xff]
    %v153 = vld [vmem:[#allocation7 + $0x50] sm:$0xff]
    %v154 = vld [vmem:[#allocation7 + $0x58] sm:$0xff]
    %v155 = vld [vmem:[#allocation7 + $0x60] sm:$0xff]
    %v156 = vld [vmem:[#allocation7 + $0x68] sm:$0xff]
    %v157 = vld [vmem:[#allocation7 + $0x70] sm:$0xff]
    %v158 = vld [vmem:[#allocation7 + $0x78] sm:$0xff]
    %v159 = vld [vmem:[#allocation7 + $0x80] sm:$0xff]
    %v160 = vld [vmem:[#allocation7 + $0x88] sm:$0xff]
    %v161 = vld [vmem:[#allocation7 + $0x90] sm:$0xff]
    %v162 = vld [vmem:[#allocation7 + $0x98] sm:$0xff]
    %v163 = vld [vmem:[#allocation7 + $0xa0] sm:$0xff]
    %v164 = vld [vmem:[#allocation7 + $0xa8] sm:$0xff]
    %v165 = vld [vmem:[#allocation7 + $0xb0] sm:$0xff]
    %v166 = vld [vmem:[#allocation7 + $0xb8] sm:$0xff]
    %v167 = vld [vmem:[#allocation7 + $0xc0] sm:$0xff]
    %v168 = vld [vmem:[#allocation7 + $0xc8] sm:$0xff]
    %v169 = vld [vmem:[#allocation7 + $0xd0] sm:$0xff]
    %v170 = vld [vmem:[#allocation7 + $0xd8] sm:$0xff]
    %v171 = vld [vmem:[#allocation7 + $0xe0] sm:$0xff]
    %v172 = vld [vmem:[#allocation7 + $0xe8] sm:$0xff]
    %v173 = vld [vmem:[#allocation7 + $0xf0] sm:$0xff]
    %v174 = vld [vmem:[#allocation7 + $0xf8] sm:$0xff]
    %v175 = vld [vmem:[#allocation7 + $0x100] sm:$0xff]
    %v176 = vld [vmem:[#allocation7 + $0x108] sm:$0xff]
    %v177 = vld [vmem:[#allocation7 + $0x110] sm:$0xff]
    %v178 = vld [vmem:[#allocation7 + $0x118] sm:$0xff]
    %v179 = vld [vmem:[#allocation7 + $0x120] sm:$0xff]
    %v180 = vld [vmem:[#allocation7 + $0x128] sm:$0xff]
    %v181 = vld [vmem:[#allocation7 + $0x130] sm:$0xff]
    %v182 = vld [vmem:[#allocation7 + $0x138] sm:$0xff]
    %v183 = vld [vmem:[#allocation7 + $0x140] sm:$0xff]
    %v184 = vld [vmem:[#allocation7 + $0x148] sm:$0xff]
    %v185 = vld [vmem:[#allocation7 + $0x150] sm:$0xff]
    %v186 = vld [vmem:[#allocation7 + $0x158] sm:$0xff]
    %v187 = vld [vmem:[#allocation7 + $0x160] sm:$0xff]
    %v188 = vld [vmem:[#allocation7 + $0x168] sm:$0xff]
    %v189 = vld [vmem:[#allocation7 + $0x170] sm:$0xff]
    %v190 = vld [vmem:[#allocation7 + $0x178] sm:$0xff]
    %v191 = vld [vmem:[#allocation7 + $0x180] sm:$0xff]
    %v192 = vld [vmem:[#allocation7 + $0x188] sm:$0xff]
    %v193 = vld [vmem:[#allocation7 + $0x190] sm:$0xff]
    %v194 = vld [vmem:[#allocation7 + $0x198] sm:$0xff]
    %v195 = vld [vmem:[#allocation7 + $0x1a0] sm:$0xff]
    %v196 = vld [vmem:[#allocation7 + $0x1a8] sm:$0xff]
    %v197 = vld [vmem:[#allocation7 + $0x1b0] sm:$0xff]
    %v198 = vld [vmem:[#allocation7 + $0x1b8] sm:$0xff]
    %v199 = vld [vmem:[#allocation7 + $0x1c0] sm:$0xff]
    %v200 = vld [vmem:[#allocation7 + $0x1c8] sm:$0xff]
    %v201 = vld [vmem:[#allocation7 + $0x1d0] sm:$0xff]
    %v202 = vld [vmem:[#allocation7 + $0x1d8] sm:$0xff]
    %v203 = vld [vmem:[#allocation7 + $0x1e0] sm:$0xff]
    %v204 = vld [vmem:[#allocation7 + $0x1e8] sm:$0xff]
    %v205 = vld [vmem:[#allocation7 + $0x1f0] sm:$0xff]
    %v206 = vld [vmem:[#allocation7 + $0x1f8] sm:$0xff]
    %v207 = vld [vmem:[#allocation7 + $0x200] sm:$0xff]
    %v208 = vld [vmem:[#allocation7 + $0x208] sm:$0xff]
    %v209 = vld [vmem:[#allocation7 + $0x210] sm:$0xff]
    %v210 = vld [vmem:[#allocation7 + $0x218] sm:$0xff]
    %v211 = vld [vmem:[#allocation7 + $0x220] sm:$0xff]
    %v212 = vld [vmem:[#allocation7 + $0x228] sm:$0xff]
    %v213 = vld [vmem:[#allocation7 + $0x230] sm:$0xff]
    %v214 = vld [vmem:[#allocation7 + $0x238] sm:$0xff]
    %v215 = vld [vmem:[#allocation7 + $0x240] sm:$0xff]
    %v216 = vld [vmem:[#allocation7 + $0x248] sm:$0xff]
    %v217 = vld [vmem:[#allocation7 + $0x250] sm:$0xff]
    %v218 = vld [vmem:[#allocation7 + $0x258] sm:$0xff]
    %v219 = vld [vmem:[#allocation7 + $0x260] sm:$0xff]
    %v220 = vld [vmem:[#allocation7 + $0x268] sm:$0xff]
    %v221 = vld [vmem:[#allocation7 + $0x270] sm:$0xff]
    %v222 = vld [vmem:[#allocation7 + $0x278] sm:$0xff]
    %v223 = vld [vmem:[#allocation7 + $0x280] sm:$0xff]
    %v224 = vld [vmem:[#allocation7 + $0x288] sm:$0xff]
    %v225 = vld [vmem:[#allocation7 + $0x290] sm:$0xff]
    %v226 = vld [vmem:[#allocation7 + $0x298] sm:$0xff]
    %v227 = vld [vmem:[#allocation7 + $0x2a0] sm:$0xff]
    %v228 = vld [vmem:[#allocation7 + $0x2a8] sm:$0xff]
    %v229 = vld [vmem:[#allocation7 + $0x2b0] sm:$0xff]
    %v230 = vld [vmem:[#allocation7 + $0x2b8] sm:$0xff]
    %v231 = vld [vmem:[#allocation7 + $0x2c0] sm:$0xff]
    %v232 = vld [vmem:[#allocation7 + $0x2c8] sm:$0xff]
    %v233 = vld [vmem:[#allocation7 + $0x2d0] sm:$0xff]
    %v234 = vld [vmem:[#allocation7 + $0x2d8] sm:$0xff]
    %v235 = vld [vmem:[#allocation7 + $0x2e0] sm:$0xff]
    %v236 = vld [vmem:[#allocation7 + $0x2e8] sm:$0xff]
    %v237 = vld [vmem:[#allocation7 + $0x2f0] sm:$0xff]
    %v238 = vld [vmem:[#allocation7 + $0x2f8] sm:$0xff]
    %v239 = vld [vmem:[#allocation7 + $0x300] sm:$0xff]
    %v240 = vld [vmem:[#allocation7 + $0x308] sm:$0xff]
    %v241 = vld [vmem:[#allocation7 + $0x310] sm:$0xff]
    %v242 = vld [vmem:[#allocation7 + $0x318] sm:$0xff]
    %v243 = vld [vmem:[#allocation7 + $0x320] sm:$0xff]
    %v244 = vld [vmem:[#allocation7 + $0x328] sm:$0xff]
    %v245 = vld [vmem:[#allocation7 + $0x330] sm:$0xff]
    %v246 = vld [vmem:[#allocation7 + $0x338] sm:$0xff]
    %v247 = vld [vmem:[#allocation7 + $0x340] sm:$0xff]
    %v248 = vld [vmem:[#allocation7 + $0x348] sm:$0xff]
    %v249 = vld [vmem:[#allocation7 + $0x350] sm:$0xff]
    %v250 = vld [vmem:[#allocation7 + $0x358] sm:$0xff]
    %v251 = vld [vmem:[#allocation7 + $0x360] sm:$0xff]
    %v252 = vld [vmem:[#allocation7 + $0x368] sm:$0xff]
    %v253 = vld [vmem:[#allocation7 + $0x370] sm:$0xff]
    %v254 = vld [vmem:[#allocation7 + $0x378] sm:$0xff]
    %v255 = vld [vmem:[#allocation7 + $0x380] sm:$0xff]
    %v256 = vld [vmem:[#allocation7 + $0x388] sm:$0xff]
    %v257 = vld [vmem:[#allocation7 + $0x390] sm:$0xff]
    %v258 = vld [vmem:[#allocation7 + $0x398] sm:$0xff]
    %v259 = vld [vmem:[#allocation7 + $0x3a0] sm:$0xff]
    %v260 = vld [vmem:[#allocation7 + $0x3a8] sm:$0xff]
    %v261 = vld [vmem:[#allocation7 + $0x3b0] sm:$0xff]
    %v262 = vld [vmem:[#allocation7 + $0x3b8] sm:$0xff]
    %v263 = vld [vmem:[#allocation7 + $0x3c0] sm:$0xff]
    %v264 = vld [vmem:[#allocation7 + $0x3c8] sm:$0xff]
    %v265 = vld [vmem:[#allocation7 + $0x3d0] sm:$0xff]
    %v266 = vld [vmem:[#allocation7 + $0x3d8] sm:$0xff]
    %v267 = vld [vmem:[#allocation7 + $0x3e0] sm:$0xff]
    %v268 = vld [vmem:[#allocation7 + $0x3e8] sm:$0xff]
    %v269 = vld [vmem:[#allocation7 + $0x3f0] sm:$0xff]
    %v270 = vld [vmem:[#allocation7 + $0x3f8] sm:$0xff]
    %v271 = vld [vmem:[%s3] sm:$0xf]
    %v273 = vlaneseq
    %v274 = vshrl.u32 %v273, 7
    %v275 = vsub.s32 0, %v274
    %v276 = vrot.slane %v271, %v275
    %v277 = vlaneseq
    %v278 = vshrl.u32 %v277, 7
    %v279 = vsub.s32 1, %v278
    %v280 = vrot.slane %v271, %v279
    %v281 = vlaneseq
    %v282 = vshrl.u32 %v281, 7
    %v283 = vsub.s32 2, %v282
    %v284 = vrot.slane %v271, %v283
    %v285 = vlaneseq
    %v286 = vshrl.u32 %v285, 7
    %v287 = vsub.s32 3, %v286
    %v288 = vrot.slane %v271, %v287
    %v293 = vld [vmem:[#allocation2] sm:$0xff]
    %v294 = vld [vmem:[#allocation2 + $0x8] sm:$0xff]
    %v295 = vld [vmem:[#allocation2 + $0x10] sm:$0xff]
    %v296 = vld [vmem:[#allocation2 + $0x18] sm:$0xff]
    %297 = vmatprep.subr.mxu0 %v140
    %298 = vmatpush1.msra.mxu0 %v139
    %299 = vmatprep.subr.mxu0 %v136
    %300 = vmatpush1.msra.mxu0 %v135
    %301 = vmatprep.subr.mxu0 %v132
    %302 = vmatpush1.msra.mxu0 %v131
    %303 = vmatprep.subr.mxu0 %v128
    %304 = vmatpush1.msra.mxu0 %v127
    %305 = vmatprep.subr.mxu0 %v124
    %306 = vmatpush1.msra.mxu0 %v123
    %307 = vmatprep.subr.mxu0 %v120
    %308 = vmatpush1.msra.mxu0 %v119
    %309 = vmatprep.subr.mxu0 %v116
    %310 = vmatpush1.msra.mxu0 %v115
    %311 = vmatprep.subr.mxu0 %v112
    %312 = vmatpush1.msra.mxu0 %v111
    %313 = vmatprep.subr.mxu0 %v108
    %314 = vmatpush1.msra.mxu0 %v107
    %315 = vmatprep.subr.mxu0 %v104
    %316 = vmatpush1.msra.mxu0 %v103
    %317 = vmatprep.subr.mxu0 %v100
    %318 = vmatpush1.msra.mxu0 %v99
    %319 = vmatprep.subr.mxu0 %v96
    %320 = vmatpush1.msra.mxu0 %v95
    %321 = vmatprep.subr.mxu0 %v92
    %322 = vmatpush1.msra.mxu0 %v91
    %323 = vmatprep.subr.mxu0 %v88
    %324 = vmatpush1.msra.mxu0 %v87
    %325 = vmatprep.subr.mxu0 %v84
    %326 = vmatpush1.msra.mxu0 %v83
    %327 = vmatprep.subr.mxu0 %v80
    %328 = vmatpush1.msra.mxu0 %v79
    %329 = vmatprep.subr.mxu0 0.0
    %330 = vmatpush2.msra.mxu0 0.0
    %331 = vmatprep.subr.mxu0 0.0
    %332 = vmatpush2.msra.mxu0 0.0
    %333 = vmatprep.subr.mxu0 0.0
    %334 = vmatpush2.msra.mxu0 0.0
    %335 = vmatprep.subr.mxu0 0.0
    %336 = vmatpush2.msra.mxu0 0.0
    %337 = vmatprep.subr.mxu0 0.0
    %338 = vmatpush2.msra.mxu0 0.0
    %339 = vmatprep.subr.mxu0 0.0
    %340 = vmatpush2.msra.mxu0 0.0
    %341 = vmatprep.subr.mxu0 0.0
    %342 = vmatpush2.msra.mxu0 0.0
    %343 = vmatprep.subr.mxu0 0.0
    %344 = vmatpush2.msra.mxu0 0.0
    %345 = vmatprep.subr.mxu0 0.0
    %346 = vmatpush2.msra.mxu0 0.0
    %347 = vmatprep.subr.mxu0 0.0
    %348 = vmatpush2.msra.mxu0 0.0
    %349 = vmatprep.subr.mxu0 0.0
    %350 = vmatpush2.msra.mxu0 0.0
    %351 = vmatprep.subr.mxu0 0.0
    %352 = vmatpush2.msra.mxu0 0.0
    %353 = vmatprep.subr.mxu0 0.0
    %354 = vmatpush2.msra.mxu0 0.0
    %355 = vmatprep.subr.mxu0 0.0
    %356 = vmatpush2.msra.mxu0 0.0
    %357 = vmatprep.subr.mxu0 0.0
    %358 = vmatpush2.msra.mxu0 0.0
    %359 = vmatprep.subr.mxu0 0.0
    %360 = vmatpush2.msra.mxu0 0.0
    %361 = vmatprep.mubr.f32.mxu0 0.0
    %362 = vmatmul.mubr.f32.gmra.mxu0 0.0
    %v363 = vpop.f32.mrf.mxu0
    %v364 = vadd.f32 0.0, %v363
    %v365 = vpop.f32.mrf.mxu0
    %v366 = vadd.f32 0.0, %v365
    %367 = vdwg.mxu0
    %368 = vmatprep.subr.mxu0 %v142
    %369 = vmatpush1.msra.mxu0 %v141
    %370 = vmatprep.subr.mxu0 %v138
    %371 = vmatpush1.msra.mxu0 %v137
    %372 = vmatprep.subr.mxu0 %v134
    %373 = vmatpush1.msra.mxu0 %v133
    %374 = vmatprep.subr.mxu0 %v130
    %375 = vmatpush1.msra.mxu0 %v129
    %376 = vmatprep.subr.mxu0 %v126
    %377 = vmatpush1.msra.mxu0 %v125
    %378 = vmatprep.subr.mxu0 %v122
    %379 = vmatpush1.msra.mxu0 %v121
    %380 = vmatprep.subr.mxu0 %v118
    %381 = vmatpush1.msra.mxu0 %v117
    %382 = vmatprep.subr.mxu0 %v114
    %383 = vmatpush1.msra.mxu0 %v113
    %384 = vmatprep.subr.mxu0 %v110
    %385 = vmatpush1.msra.mxu0 %v109
    %386 = vmatprep.subr.mxu0 %v106
    %387 = vmatpush1.msra.mxu0 %v105
    %388 = vmatprep.subr.mxu0 %v102
    %389 = vmatpush1.msra.mxu0 %v101
    %390 = vmatprep.subr.mxu0 %v98
    %391 = vmatpush1.msra.mxu0 %v97
    %392 = vmatprep.subr.mxu0 %v94
    %393 = vmatpush1.msra.mxu0 %v93
    %394 = vmatprep.subr.mxu0 %v90
    %395 = vmatpush1.msra.mxu0 %v89
    %396 = vmatprep.subr.mxu0 %v86
    %397 = vmatpush1.msra.mxu0 %v85
    %398 = vmatprep.subr.mxu0 %v82
    %399 = vmatpush1.msra.mxu0 %v81
    %400 = vmatprep.subr.mxu0 0.0
    %401 = vmatpush2.msra.mxu0 0.0
    %402 = vmatprep.subr.mxu0 0.0
    %403 = vmatpush2.msra.mxu0 0.0
    %404 = vmatprep.subr.mxu0 0.0
    %405 = vmatpush2.msra.mxu0 0.0
    %406 = vmatprep.subr.mxu0 0.0
    %407 = vmatpush2.msra.mxu0 0.0
    %408 = vmatprep.subr.mxu0 0.0
    %409 = vmatpush2.msra.mxu0 0.0
    %410 = vmatprep.subr.mxu0 0.0
    %411 = vmatpush2.msra.mxu0 0.0
    %412 = vmatprep.subr.mxu0 0.0
    %413 = vmatpush2.msra.mxu0 0.0
    %414 = vmatprep.subr.mxu0 0.0
    %415 = vmatpush2.msra.mxu0 0.0
    %416 = vmatprep.subr.mxu0 0.0
    %417 = vmatpush2.msra.mxu0 0.0
    %418 = vmatprep.subr.mxu0 0.0
    %419 = vmatpush2.msra.mxu0 0.0
    %420 = vmatprep.subr.mxu0 0.0
    %421 = vmatpush2.msra.mxu0 0.0
    %422 = vmatprep.subr.mxu0 0.0
    %423 = vmatpush2.msra.mxu0 0.0
    %424 = vmatprep.subr.mxu0 0.0
    %425 = vmatpush2.msra.mxu0 0.0
    %426 = vmatprep.subr.mxu0 0.0
    %427 = vmatpush2.msra.mxu0 0.0
    %428 = vmatprep.subr.mxu0 0.0
    %429 = vmatpush2.msra.mxu0 0.0
    %430 = vmatprep.subr.mxu0 0.0
    %431 = vmatpush2.msra.mxu0 0.0
    %432 = vmatprep.mubr.f32.mxu0 0.0
    %433 = vmatmul.mubr.f32.gmra.mxu0 0.0
    %v434 = vpop.f32.mrf.mxu0
    %v435 = vadd.f32 0.0, %v434
    %v436 = vpop.f32.mrf.mxu0
    %v437 = vadd.f32 0.0, %v436
    %438 = vdwg.mxu0
    %v439 = vadd.f32 %v293, %v364
    %v440 = vadd.f32 %v294, %v366
    %v441 = vadd.f32 %v295, %v435
    %v442 = vadd.f32 %v296, %v437
    %v443 = vxor.u32 %v439, 2147483648
    %v444 = vxor.u32 %v440, 2147483648
    %v445 = vxor.u32 %v441, 2147483648
    %v446 = vmul.f32 %v443, 1.442695
    %v447 = vpow.pop %v446
    %v448 = vmul.f32 %v444, 1.442695
    %v449 = vpow.pop %v448
    %v450 = vmul.f32 %v445, 1.442695
    %v451 = vpow.pop %v450
    %v452 = vadd.f32 %v447, 1.0
    %v453 = vadd.f32 %v449, 1.0
    %v454 = vadd.f32 %v451, 1.0
    %v455 = vrcp.pop %v452
    %v456 = vmul.f32 1.0, %v455
    %v457 = vrcp.pop %v453
    %v458 = vmul.f32 1.0, %v457
    %v459 = vrcp.pop %v454
    %v460 = vmul.f32 1.0, %v459
    %v461 = vtanh.pop %v442
    %v462 = vmul.f32 %v458, 0.0
    %v463 = vmul.f32 %v456, %v461
    %v464 = vadd.f32 %v462, %v463
    %v465 = vtanh.pop %v464
    %v466 = vmul.f32 %v460, %v465
    %467 = vmatprep.subr.mxu0 %v204
    %468 = vmatpush1.msra.mxu0 %v203
    %469 = vmatprep.subr.mxu0 %v200
    %470 = vmatpush1.msra.mxu0 %v199
    %471 = vmatprep.subr.mxu0 %v196
    %472 = vmatpush1.msra.mxu0 %v195
    %473 = vmatprep.subr.mxu0 %v192
    %474 = vmatpush1.msra.mxu0 %v191
    %475 = vmatprep.subr.mxu0 %v188
    %476 = vmatpush1.msra.mxu0 %v187
    %477 = vmatprep.subr.mxu0 %v184
    %478 = vmatpush1.msra.mxu0 %v183
    %479 = vmatprep.subr.mxu0 %v180
    %480 = vmatpush1.msra.mxu0 %v179
    %481 = vmatprep.subr.mxu0 %v176
    %482 = vmatpush1.msra.mxu0 %v175
    %483 = vmatprep.subr.mxu0 %v172
    %484 = vmatpush1.msra.mxu0 %v171
    %485 = vmatprep.subr.mxu0 %v168
    %486 = vmatpush1.msra.mxu0 %v167
    %487 = vmatprep.subr.mxu0 %v164
    %488 = vmatpush1.msra.mxu0 %v163
    %489 = vmatprep.subr.mxu0 %v160
    %490 = vmatpush1.msra.mxu0 %v159
    %491 = vmatprep.subr.mxu0 %v156
    %492 = vmatpush1.msra.mxu0 %v155
    %493 = vmatprep.subr.mxu0 %v152
    %494 = vmatpush1.msra.mxu0 %v151
    %495 = vmatprep.subr.mxu0 %v148
    %496 = vmatpush1.msra.mxu0 %v147
    %497 = vmatprep.subr.mxu0 %v144
    %498 = vmatpush1.msra.mxu0 %v143
    %499 = vmatprep.subr.mxu0 %v268
    %500 = vmatpush2.msra.mxu0 %v267
    %501 = vmatprep.subr.mxu0 %v264
    %502 = vmatpush2.msra.mxu0 %v263
    %503 = vmatprep.subr.mxu0 %v260
    %504 = vmatpush2.msra.mxu0 %v259
    %505 = vmatprep.subr.mxu0 %v256
    %506 = vmatpush2.msra.mxu0 %v255
    %507 = vmatprep.subr.mxu0 %v252
    %508 = vmatpush2.msra.mxu0 %v251
    %509 = vmatprep.subr.mxu0 %v248
    %510 = vmatpush2.msra.mxu0 %v247
    %511 = vmatprep.subr.mxu0 %v244
    %512 = vmatpush2.msra.mxu0 %v243
    %513 = vmatprep.subr.mxu0 %v240
    %514 = vmatpush2.msra.mxu0 %v239
    %515 = vmatprep.subr.mxu0 %v236
    %516 = vmatpush2.msra.mxu0 %v235
    %517 = vmatprep.subr.mxu0 %v232
    %518 = vmatpush2.msra.mxu0 %v231
    %519 = vmatprep.subr.mxu0 %v228
    %520 = vmatpush2.msra.mxu0 %v227
    %521 = vmatprep.subr.mxu0 %v224
    %522 = vmatpush2.msra.mxu0 %v223
    %523 = vmatprep.subr.mxu0 %v220
    %524 = vmatpush2.msra.mxu0 %v219
    %525 = vmatprep.subr.mxu0 %v216
    %526 = vmatpush2.msra.mxu0 %v215
    %527 = vmatprep.subr.mxu0 %v212
    %528 = vmatpush2.msra.mxu0 %v211
    %529 = vmatprep.subr.mxu0 %v208
    %530 = vmatpush2.msra.mxu0 %v207
    %531 = vmatprep.mubr.f32.mxu0 0.0
    %532 = vmatmul.mubr.f32.gmra.mxu0 %v466
    %v533 = vpop.f32.mrf.mxu0
    %v534 = vadd.f32 %v276, %v533
    %v535 = vpop.f32.mrf.mxu0
    %v536 = vadd.f32 %v280, %v535
    %537 = vdwg.mxu0
    %538 = vmatprep.subr.mxu0 %v206
    %539 = vmatpush1.msra.mxu0 %v205
    %540 = vmatprep.subr.mxu0 %v202
    %541 = vmatpush1.msra.mxu0 %v201
    %542 = vmatprep.subr.mxu0 %v198
    %543 = vmatpush1.msra.mxu0 %v197
    %544 = vmatprep.subr.mxu0 %v194
    %545 = vmatpush1.msra.mxu0 %v193
    %546 = vmatprep.subr.mxu0 %v190
    %547 = vmatpush1.msra.mxu0 %v189
    %548 = vmatprep.subr.mxu0 %v186
    %549 = vmatpush1.msra.mxu0 %v185
    %550 = vmatprep.subr.mxu0 %v182
    %551 = vmatpush1.msra.mxu0 %v181
    %552 = vmatprep.subr.mxu0 %v178
    %553 = vmatpush1.msra.mxu0 %v177
    %554 = vmatprep.subr.mxu0 %v174
    %555 = vmatpush1.msra.mxu0 %v173
    %556 = vmatprep.subr.mxu0 %v170
    %557 = vmatpush1.msra.mxu0 %v169
    %558 = vmatprep.subr.mxu0 %v166
    %559 = vmatpush1.msra.mxu0 %v165
    %560 = vmatprep.subr.mxu0 %v162
    %561 = vmatpush1.msra.mxu0 %v161
    %562 = vmatprep.subr.mxu0 %v158
    %563 = vmatpush1.msra.mxu0 %v157
    %564 = vmatprep.subr.mxu0 %v154
    %565 = vmatpush1.msra.mxu0 %v153
    %566 = vmatprep.subr.mxu0 %v150
    %567 = vmatpush1.msra.mxu0 %v149
    %568 = vmatprep.subr.mxu0 %v146
    %569 = vmatpush1.msra.mxu0 %v145
    %570 = vmatprep.subr.mxu0 %v270
    %571 = vmatpush2.msra.mxu0 %v269
    %572 = vmatprep.subr.mxu0 %v266
    %573 = vmatpush2.msra.mxu0 %v265
    %574 = vmatprep.subr.mxu0 %v262
    %575 = vmatpush2.msra.mxu0 %v261
    %576 = vmatprep.subr.mxu0 %v258
    %577 = vmatpush2.msra.mxu0 %v257
    %578 = vmatprep.subr.mxu0 %v254
    %579 = vmatpush2.msra.mxu0 %v253
    %580 = vmatprep.subr.mxu0 %v250
    %581 = vmatpush2.msra.mxu0 %v249
    %582 = vmatprep.subr.mxu0 %v246
    %583 = vmatpush2.msra.mxu0 %v245
    %584 = vmatprep.subr.mxu0 %v242
    %585 = vmatpush2.msra.mxu0 %v241
    %586 = vmatprep.subr.mxu0 %v238
    %587 = vmatpush2.msra.mxu0 %v237
    %588 = vmatprep.subr.mxu0 %v234
    %589 = vmatpush2.msra.mxu0 %v233
    %590 = vmatprep.subr.mxu0 %v230
    %591 = vmatpush2.msra.mxu0 %v229
    %592 = vmatprep.subr.mxu0 %v226
    %593 = vmatpush2.msra.mxu0 %v225
    %594 = vmatprep.subr.mxu0 %v222
    %595 = vmatpush2.msra.mxu0 %v221
    %596 = vmatprep.subr.mxu0 %v218
    %597 = vmatpush2.msra.mxu0 %v217
    %598 = vmatprep.subr.mxu0 %v214
    %599 = vmatpush2.msra.mxu0 %v213
    %600 = vmatprep.subr.mxu0 %v210
    %601 = vmatpush2.msra.mxu0 %v209
    %602 = vmatprep.mubr.f32.mxu0 0.0
    %603 = vmatmul.mubr.f32.gmra.mxu0 %v466
    %v604 = vpop.f32.mrf.mxu0
    %v605 = vadd.f32 %v284, %v604
    %v606 = vpop.f32.mrf.mxu0
    %v607 = vadd.f32 %v288, %v606
    %608 = vdwg.mxu0
    %v609 = vxor.u32 %v534, 2147483648
    %v610 = vxor.u32 %v536, 2147483648
    %v611 = vxor.u32 %v605, 2147483648
    %v612 = vmul.f32 %v609, 1.442695
    %v613 = vpow.pop %v612
    %v614 = vmul.f32 %v610, 1.442695
    %v615 = vpow.pop %v614
    %v616 = vmul.f32 %v611, 1.442695
    %v617 = vpow.pop %v616
    %v618 = vadd.f32 %v613, 1.0
    %v619 = vadd.f32 %v615, 1.0
    %v620 = vadd.f32 %v617, 1.0
    %v621 = vrcp.pop %v618
    %v622 = vmul.f32 1.0, %v621
    %v623 = vrcp.pop %v619
    %v624 = vmul.f32 1.0, %v623
    %v625 = vrcp.pop %v620
    %v626 = vmul.f32 1.0, %v625
    %v627 = vtanh.pop %v607
    %v628 = vmul.f32 %v624, 0.0
    %v629 = vmul.f32 %v622, %v627
    %v630 = vadd.f32 %v628, %v629
    %v631 = vtanh.pop %v630
    %v632 = vmul.f32 %v626, %v631
    %s633 = scalar_lea.vmem [#allocation2], 32
    %v634 = vld [vmem:[%s633] sm:$0xff]
    %v635 = vld [vmem:[%s633 + $0x8] sm:$0xff]
    %v636 = vld [vmem:[%s633 + $0x10] sm:$0xff]
    %v637 = vld [vmem:[%s633 + $0x18] sm:$0xff]
    %638 = vmatprep.subr.mxu0 %v140
    %639 = vmatpush1.msra.mxu0 %v139
    %640 = vmatprep.subr.mxu0 %v136
    %641 = vmatpush1.msra.mxu0 %v135
    %642 = vmatprep.subr.mxu0 %v132
    %643 = vmatpush1.msra.mxu0 %v131
    %644 = vmatprep.subr.mxu0 %v128
    %645 = vmatpush1.msra.mxu0 %v127
    %646 = vmatprep.subr.mxu0 %v124
    %647 = vmatpush1.msra.mxu0 %v123
    %648 = vmatprep.subr.mxu0 %v120
    %649 = vmatpush1.msra.mxu0 %v119
    %650 = vmatprep.subr.mxu0 %v116
    %651 = vmatpush1.msra.mxu0 %v115
    %652 = vmatprep.subr.mxu0 %v112
    %653 = vmatpush1.msra.mxu0 %v111
    %654 = vmatprep.subr.mxu0 %v108
    %655 = vmatpush1.msra.mxu0 %v107
    %656 = vmatprep.subr.mxu0 %v104
    %657 = vmatpush1.msra.mxu0 %v103
    %658 = vmatprep.subr.mxu0 %v100
    %659 = vmatpush1.msra.mxu0 %v99
    %660 = vmatprep.subr.mxu0 %v96
    %661 = vmatpush1.msra.mxu0 %v95
    %662 = vmatprep.subr.mxu0 %v92
    %663 = vmatpush1.msra.mxu0 %v91
    %664 = vmatprep.subr.mxu0 %v88
    %665 = vmatpush1.msra.mxu0 %v87
    %666 = vmatprep.subr.mxu0 %v84
    %667 = vmatpush1.msra.mxu0 %v83
    %668 = vmatprep.subr.mxu0 %v80
    %669 = vmatpush1.msra.mxu0 %v79
    %670 = vmatprep.subr.mxu0 0.0
    %671 = vmatpush2.msra.mxu0 0.0
    %672 = vmatprep.subr.mxu0 0.0
    %673 = vmatpush2.msra.mxu0 0.0
    %674 = vmatprep.subr.mxu0 0.0
    %675 = vmatpush2.msra.mxu0 0.0
    %676 = vmatprep.subr.mxu0 0.0
    %677 = vmatpush2.msra.mxu0 0.0
    %678 = vmatprep.subr.mxu0 0.0
    %679 = vmatpush2.msra.mxu0 0.0
    %680 = vmatprep.subr.mxu0 0.0
    %681 = vmatpush2.msra.mxu0 0.0
    %682 = vmatprep.subr.mxu0 0.0
    %683 = vmatpush2.msra.mxu0 0.0
    %684 = vmatprep.subr.mxu0 0.0
    %685 = vmatpush2.msra.mxu0 0.0
    %686 = vmatprep.subr.mxu0 0.0
    %687 = vmatpush2.msra.mxu0 0.0
    %688 = vmatprep.subr.mxu0 0.0
    %689 = vmatpush2.msra.mxu0 0.0
    %690 = vmatprep.subr.mxu0 0.0
    %691 = vmatpush2.msra.mxu0 0.0
    %692 = vmatprep.subr.mxu0 0.0
    %693 = vmatpush2.msra.mxu0 0.0
    %694 = vmatprep.subr.mxu0 0.0
    %695 = vmatpush2.msra.mxu0 0.0
    %696 = vmatprep.subr.mxu0 0.0
    %697 = vmatpush2.msra.mxu0 0.0
    %698 = vmatprep.subr.mxu0 0.0
    %699 = vmatpush2.msra.mxu0 0.0
    %700 = vmatprep.subr.mxu0 0.0
    %701 = vmatpush2.msra.mxu0 0.0
    %702 = vmatprep.mubr.f32.mxu0 0.0
    %703 = vmatmul.mubr.f32.gmra.mxu0 %v466
    %v704 = vpop.f32.mrf.mxu0
    %v705 = vadd.f32 0.0, %v704
    %v706 = vpop.f32.mrf.mxu0
    %v707 = vadd.f32 0.0, %v706
    %708 = vdwg.mxu0
    %709 = vmatprep.subr.mxu0 %v142
    %710 = vmatpush1.msra.mxu0 %v141
    %711 = vmatprep.subr.mxu0 %v138
    %712 = vmatpush1.msra.mxu0 %v137
    %713 = vmatprep.subr.mxu0 %v134
    %714 = vmatpush1.msra.mxu0 %v133
    %715 = vmatprep.subr.mxu0 %v130
    %716 = vmatpush1.msra.mxu0 %v129
    %717 = vmatprep.subr.mxu0 %v126
    %718 = vmatpush1.msra.mxu0 %v125
    %719 = vmatprep.subr.mxu0 %v122
    %720 = vmatpush1.msra.mxu0 %v121
    %721 = vmatprep.subr.mxu0 %v118
    %722 = vmatpush1.msra.mxu0 %v117
    %723 = vmatprep.subr.mxu0 %v114
    %724 = vmatpush1.msra.mxu0 %v113
    %725 = vmatprep.subr.mxu0 %v110
    %726 = vmatpush1.msra.mxu0 %v109
    %727 = vmatprep.subr.mxu0 %v106
    %728 = vmatpush1.msra.mxu0 %v105
    %729 = vmatprep.subr.mxu0 %v102
    %730 = vmatpush1.msra.mxu0 %v101
    %731 = vmatprep.subr.mxu0 %v98
    %732 = vmatpush1.msra.mxu0 %v97
    %733 = vmatprep.subr.mxu0 %v94
    %734 = vmatpush1.msra.mxu0 %v93
    %735 = vmatprep.subr.mxu0 %v90
    %736 = vmatpush1.msra.mxu0 %v89
    %737 = vmatprep.subr.mxu0 %v86
    %738 = vmatpush1.msra.mxu0 %v85
    %739 = vmatprep.subr.mxu0 %v82
    %740 = vmatpush1.msra.mxu0 %v81
    %741 = vmatprep.subr.mxu0 0.0
    %742 = vmatpush2.msra.mxu0 0.0
    %743 = vmatprep.subr.mxu0 0.0
    %744 = vmatpush2.msra.mxu0 0.0
    %745 = vmatprep.subr.mxu0 0.0
    %746 = vmatpush2.msra.mxu0 0.0
    %747 = vmatprep.subr.mxu0 0.0
    %748 = vmatpush2.msra.mxu0 0.0
    %749 = vmatprep.subr.mxu0 0.0
    %750 = vmatpush2.msra.mxu0 0.0
    %751 = vmatprep.subr.mxu0 0.0
    %752 = vmatpush2.msra.mxu0 0.0
    %753 = vmatprep.subr.mxu0 0.0
    %754 = vmatpush2.msra.mxu0 0.0
    %755 = vmatprep.subr.mxu0 0.0
    %756 = vmatpush2.msra.mxu0 0.0
    %757 = vmatprep.subr.mxu0 0.0
    %758 = vmatpush2.msra.mxu0 0.0
    %759 = vmatprep.subr.mxu0 0.0
    %760 = vmatpush2.msra.mxu0 0.0
    %761 = vmatprep.subr.mxu0 0.0
    %762 = vmatpush2.msra.mxu0 0.0
    %763 = vmatprep.subr.mxu0 0.0
    %764 = vmatpush2.msra.mxu0 0.0
    %765 = vmatprep.subr.mxu0 0.0
    %766 = vmatpush2.msra.mxu0 0.0
    %767 = vmatprep.subr.mxu0 0.0
    %768 = vmatpush2.msra.mxu0 0.0
    %769 = vmatprep.subr.mxu0 0.0
    %770 = vmatpush2.msra.mxu0 0.0
    %771 = vmatprep.subr.mxu0 0.0
    %772 = vmatpush2.msra.mxu0 0.0
    %773 = vmatprep.mubr.f32.mxu0 0.0
    %774 = vmatmul.mubr.f32.gmra.mxu0 %v466
    %v775 = vpop.f32.mrf.mxu0
    %v776 = vadd.f32 0.0, %v775
    %v777 = vpop.f32.mrf.mxu0
    %v778 = vadd.f32 0.0, %v777
    %779 = vdwg.mxu0
    %v780 = vadd.f32 %v634, %v705
    %v781 = vadd.f32 %v635, %v707
    %v782 = vadd.f32 %v636, %v776
    %v783 = vadd.f32 %v637, %v778
    %v784 = vxor.u32 %v780, 2147483648
    %v785 = vxor.u32 %v781, 2147483648
    %v786 = vxor.u32 %v782, 2147483648
    %v787 = vmul.f32 %v784, 1.442695
    %v788 = vpow.pop %v787
    %v789 = vmul.f32 %v785, 1.442695
    %v790 = vpow.pop %v789
    %v791 = vmul.f32 %v786, 1.442695
    %v792 = vpow.pop %v791
    %v793 = vadd.f32 %v788, 1.0
    %v794 = vadd.f32 %v790, 1.0
    %v795 = vadd.f32 %v792, 1.0
    %v796 = vrcp.pop %v793
    %v797 = vmul.f32 1.0, %v796
    %v798 = vrcp.pop %v794
    %v799 = vmul.f32 1.0, %v798
    %v800 = vrcp.pop %v795
    %v801 = vmul.f32 1.0, %v800
    %v802 = vtanh.pop %v783
    %v803 = vmul.f32 %v799, %v464
    %v804 = vmul.f32 %v797, %v802
    %v805 = vadd.f32 %v803, %v804
    %v806 = vtanh.pop %v805
    %v807 = vmul.f32 %v801, %v806
    %808 = vmatprep.subr.mxu0 %v204
    %809 = vmatpush1.msra.mxu0 %v203
    %810 = vmatprep.subr.mxu0 %v200
    %811 = vmatpush1.msra.mxu0 %v199
    %812 = vmatprep.subr.mxu0 %v196
    %813 = vmatpush1.msra.mxu0 %v195
    %814 = vmatprep.subr.mxu0 %v192
    %815 = vmatpush1.msra.mxu0 %v191
    %816 = vmatprep.subr.mxu0 %v188
    %817 = vmatpush1.msra.mxu0 %v187
    %818 = vmatprep.subr.mxu0 %v184
    %819 = vmatpush1.msra.mxu0 %v183
    %820 = vmatprep.subr.mxu0 %v180
    %821 = vmatpush1.msra.mxu0 %v179
    %822 = vmatprep.subr.mxu0 %v176
    %823 = vmatpush1.msra.mxu0 %v175
    %824 = vmatprep.subr.mxu0 %v172
    %825 = vmatpush1.msra.mxu0 %v171
    %826 = vmatprep.subr.mxu0 %v168
    %827 = vmatpush1.msra.mxu0 %v167
    %828 = vmatprep.subr.mxu0 %v164
    %829 = vmatpush1.msra.mxu0 %v163
    %830 = vmatprep.subr.mxu0 %v160
    %831 = vmatpush1.msra.mxu0 %v159
    %832 = vmatprep.subr.mxu0 %v156
    %833 = vmatpush1.msra.mxu0 %v155
    %834 = vmatprep.subr.mxu0 %v152
    %835 = vmatpush1.msra.mxu0 %v151
    %836 = vmatprep.subr.mxu0 %v148
    %837 = vmatpush1.msra.mxu0 %v147
    %838 = vmatprep.subr.mxu0 %v144
    %839 = vmatpush1.msra.mxu0 %v143
    %840 = vmatprep.subr.mxu0 %v268
    %841 = vmatpush2.msra.mxu0 %v267
    %842 = vmatprep.subr.mxu0 %v264
    %843 = vmatpush2.msra.mxu0 %v263
    %844 = vmatprep.subr.mxu0 %v260
    %845 = vmatpush2.msra.mxu0 %v259
    %846 = vmatprep.subr.mxu0 %v256
    %847 = vmatpush2.msra.mxu0 %v255
    %848 = vmatprep.subr.mxu0 %v252
    %849 = vmatpush2.msra.mxu0 %v251
    %850 = vmatprep.subr.mxu0 %v248
    %851 = vmatpush2.msra.mxu0 %v247
    %852 = vmatprep.subr.mxu0 %v244
    %853 = vmatpush2.msra.mxu0 %v243
    %854 = vmatprep.subr.mxu0 %v240
    %855 = vmatpush2.msra.mxu0 %v239
    %856 = vmatprep.subr.mxu0 %v236
    %857 = vmatpush2.msra.mxu0 %v235
    %858 = vmatprep.subr.mxu0 %v232
    %859 = vmatpush2.msra.mxu0 %v231
    %860 = vmatprep.subr.mxu0 %v228
    %861 = vmatpush2.msra.mxu0 %v227
    %862 = vmatprep.subr.mxu0 %v224
    %863 = vmatpush2.msra.mxu0 %v223
    %864 = vmatprep.subr.mxu0 %v220
    %865 = vmatpush2.msra.mxu0 %v219
    %866 = vmatprep.subr.mxu0 %v216
    %867 = vmatpush2.msra.mxu0 %v215
    %868 = vmatprep.subr.mxu0 %v212
    %869 = vmatpush2.msra.mxu0 %v211
    %870 = vmatprep.subr.mxu0 %v208
    %871 = vmatpush2.msra.mxu0 %v207
    %872 = vmatprep.mubr.f32.mxu0 %v632
    %873 = vmatmul.mubr.f32.gmra.mxu0 %v807
    %v874 = vpop.f32.mrf.mxu0
    %v875 = vadd.f32 %v276, %v874
    %v876 = vpop.f32.mrf.mxu0
    %v877 = vadd.f32 %v280, %v876
    %878 = vdwg.mxu0
    %879 = vmatprep.subr.mxu0 %v206
    %880 = vmatpush1.msra.mxu0 %v205
    %881 = vmatprep.subr.mxu0 %v202
    %882 = vmatpush1.msra.mxu0 %v201
    %883 = vmatprep.subr.mxu0 %v198
    %884 = vmatpush1.msra.mxu0 %v197
    %885 = vmatprep.subr.mxu0 %v194
    %886 = vmatpush1.msra.mxu0 %v193
    %887 = vmatprep.subr.mxu0 %v190
    %888 = vmatpush1.msra.mxu0 %v189
    %889 = vmatprep.subr.mxu0 %v186
    %890 = vmatpush1.msra.mxu0 %v185
    %891 = vmatprep.subr.mxu0 %v182
    %892 = vmatpush1.msra.mxu0 %v181
    %893 = vmatprep.subr.mxu0 %v178
    %894 = vmatpush1.msra.mxu0 %v177
    %895 = vmatprep.subr.mxu0 %v174
    %896 = vmatpush1.msra.mxu0 %v173
    %897 = vmatprep.subr.mxu0 %v170
    %898 = vmatpush1.msra.mxu0 %v169
    %899 = vmatprep.subr.mxu0 %v166
    %900 = vmatpush1.msra.mxu0 %v165
    %901 = vmatprep.subr.mxu0 %v162
    %902 = vmatpush1.msra.mxu0 %v161
    %903 = vmatprep.subr.mxu0 %v158
    %904 = vmatpush1.msra.mxu0 %v157
    %905 = vmatprep.subr.mxu0 %v154
    %906 = vmatpush1.msra.mxu0 %v153
    %907 = vmatprep.subr.mxu0 %v150
    %908 = vmatpush1.msra.mxu0 %v149
    %909 = vmatprep.subr.mxu0 %v146
    %910 = vmatpush1.msra.mxu0 %v145
    %911 = vmatprep.subr.mxu0 %v270
    %912 = vmatpush2.msra.mxu0 %v269
    %913 = vmatprep.subr.mxu0 %v266
    %914 = vmatpush2.msra.mxu0 %v265
    %915 = vmatprep.subr.mxu0 %v262
    %916 = vmatpush2.msra.mxu0 %v261
    %917 = vmatprep.subr.mxu0 %v258
    %918 = vmatpush2.msra.mxu0 %v257
    %919 = vmatprep.subr.mxu0 %v254
    %920 = vmatpush2.msra.mxu0 %v253
    %921 = vmatprep.subr.mxu0 %v250
    %922 = vmatpush2.msra.mxu0 %v249
    %923 = vmatprep.subr.mxu0 %v246
    %924 = vmatpush2.msra.mxu0 %v245
    %925 = vmatprep.subr.mxu0 %v242
    %926 = vmatpush2.msra.mxu0 %v241
    %927 = vmatprep.subr.mxu0 %v238
    %928 = vmatpush2.msra.mxu0 %v237
    %929 = vmatprep.subr.mxu0 %v234
    %930 = vmatpush2.msra.mxu0 %v233
    %931 = vmatprep.subr.mxu0 %v230
    %932 = vmatpush2.msra.mxu0 %v229
    %933 = vmatprep.subr.mxu0 %v226
    %934 = vmatpush2.msra.mxu0 %v225
    %935 = vmatprep.subr.mxu0 %v222
    %936 = vmatpush2.msra.mxu0 %v221
    %937 = vmatprep.subr.mxu0 %v218
    %938 = vmatpush2.msra.mxu0 %v217
    %939 = vmatprep.subr.mxu0 %v214
    %940 = vmatpush2.msra.mxu0 %v213
    %941 = vmatprep.subr.mxu0 %v210
    %942 = vmatpush2.msra.mxu0 %v209
    %943 = vmatprep.mubr.f32.mxu0 %v632
    %944 = vmatmul.mubr.f32.gmra.mxu0 %v807
    %v945 = vpop.f32.mrf.mxu0
    %v946 = vadd.f32 %v284, %v945
    %v947 = vpop.f32.mrf.mxu0
    %v948 = vadd.f32 %v288, %v947
    %949 = vdwg.mxu0
    %v950 = vxor.u32 %v875, 2147483648
    %v951 = vxor.u32 %v877, 2147483648
    %v952 = vxor.u32 %v946, 2147483648
    %v953 = vmul.f32 %v950, 1.442695
    %v954 = vpow.pop %v953
    %v955 = vmul.f32 %v951, 1.442695
    %v956 = vpow.pop %v955
    %v957 = vmul.f32 %v952, 1.442695
    %v958 = vpow.pop %v957
    %v959 = vadd.f32 %v954, 1.0
    %v960 = vadd.f32 %v956, 1.0
    %v961 = vadd.f32 %v958, 1.0
    %v962 = vrcp.pop %v959
    %v963 = vmul.f32 1.0, %v962
    %v964 = vrcp.pop %v960
    %v965 = vmul.f32 1.0, %v964
    %v966 = vrcp.pop %v961
    %v967 = vmul.f32 1.0, %v966
    %v968 = vtanh.pop %v948
    %v969 = vmul.f32 %v965, %v630
    %v970 = vmul.f32 %v963, %v968
    %v971 = vadd.f32 %v969, %v970
    %v972 = vtanh.pop %v971
    %v973 = vmul.f32 %v967, %v972
    %s974 = scalar_lea.vmem [#allocation2], 64
    %v975 = vld [vmem:[%s974] sm:$0xff]
    %v976 = vld [vmem:[%s974 + $0x8] sm:$0xff]
    %v977 = vld [vmem:[%s974 + $0x10] sm:$0xff]
    %v978 = vld [vmem:[%s974 + $0x18] sm:$0xff]
    %979 = vmatprep.subr.mxu0 %v140
    %980 = vmatpush1.msra.mxu0 %v139
    %981 = vmatprep.subr.mxu0 %v136
    %982 = vmatpush1.msra.mxu0 %v135
    %983 = vmatprep.subr.mxu0 %v132
    %984 = vmatpush1.msra.mxu0 %v131
    %985 = vmatprep.subr.mxu0 %v128
    %986 = vmatpush1.msra.mxu0 %v127
    %987 = vmatprep.subr.mxu0 %v124
    %988 = vmatpush1.msra.mxu0 %v123
    %989 = vmatprep.subr.mxu0 %v120
    %990 = vmatpush1.msra.mxu0 %v119
    %991 = vmatprep.subr.mxu0 %v116
    %992 = vmatpush1.msra.mxu0 %v115
    %993 = vmatprep.subr.mxu0 %v112
    %994 = vmatpush1.msra.mxu0 %v111
    %995 = vmatprep.subr.mxu0 %v108
    %996 = vmatpush1.msra.mxu0 %v107
    %997 = vmatprep.subr.mxu0 %v104
    %998 = vmatpush1.msra.mxu0 %v103
    %999 = vmatprep.subr.mxu0 %v100
    %1000 = vmatpush1.msra.mxu0 %v99
    %1001 = vmatprep.subr.mxu0 %v96
    %1002 = vmatpush1.msra.mxu0 %v95
    %1003 = vmatprep.subr.mxu0 %v92
    %1004 = vmatpush1.msra.mxu0 %v91
    %1005 = vmatprep.subr.mxu0 %v88
    %1006 = vmatpush1.msra.mxu0 %v87
    %1007 = vmatprep.subr.mxu0 %v84
    %1008 = vmatpush1.msra.mxu0 %v83
    %1009 = vmatprep.subr.mxu0 %v80
    %1010 = vmatpush1.msra.mxu0 %v79
    %1011 = vmatprep.subr.mxu0 0.0
    %1012 = vmatpush2.msra.mxu0 0.0
    %1013 = vmatprep.subr.mxu0 0.0
    %1014 = vmatpush2.msra.mxu0 0.0
    %1015 = vmatprep.subr.mxu0 0.0
    %1016 = vmatpush2.msra.mxu0 0.0
    %1017 = vmatprep.subr.mxu0 0.0
    %1018 = vmatpush2.msra.mxu0 0.0
    %1019 = vmatprep.subr.mxu0 0.0
    %1020 = vmatpush2.msra.mxu0 0.0
    %1021 = vmatprep.subr.mxu0 0.0
    %1022 = vmatpush2.msra.mxu0 0.0
    %1023 = vmatprep.subr.mxu0 0.0
    %1024 = vmatpush2.msra.mxu0 0.0
    %1025 = vmatprep.subr.mxu0 0.0
    %1026 = vmatpush2.msra.mxu0 0.0
    %1027 = vmatprep.subr.mxu0 0.0
    %1028 = vmatpush2.msra.mxu0 0.0
    %1029 = vmatprep.subr.mxu0 0.0
    %1030 = vmatpush2.msra.mxu0 0.0
    %1031 = vmatprep.subr.mxu0 0.0
    %1032 = vmatpush2.msra.mxu0 0.0
    %1033 = vmatprep.subr.mxu0 0.0
    %1034 = vmatpush2.msra.mxu0 0.0
    %1035 = vmatprep.subr.mxu0 0.0
    %1036 = vmatpush2.msra.mxu0 0.0
    %1037 = vmatprep.subr.mxu0 0.0
    %1038 = vmatpush2.msra.mxu0 0.0
    %1039 = vmatprep.subr.mxu0 0.0
    %1040 = vmatpush2.msra.mxu0 0.0
    %1041 = vmatprep.subr.mxu0 0.0
    %1042 = vmatpush2.msra.mxu0 0.0
    %1043 = vmatprep.mubr.f32.mxu0 0.0
    %1044 = vmatmul.mubr.f32.gmra.mxu0 %v807
    %v1045 = vpop.f32.mrf.mxu0
    %v1046 = vadd.f32 0.0, %v1045
    %v1047 = vpop.f32.mrf.mxu0
    %v1048 = vadd.f32 0.0, %v1047
    %1049 = vdwg.mxu0
    %1050 = vmatprep.subr.mxu0 %v142
    %1051 = vmatpush1.msra.mxu0 %v141
    %1052 = vmatprep.subr.mxu0 %v138
    %1053 = vmatpush1.msra.mxu0 %v137
    %1054 = vmatprep.subr.mxu0 %v134
    %1055 = vmatpush1.msra.mxu0 %v133
    %1056 = vmatprep.subr.mxu0 %v130
    %1057 = vmatpush1.msra.mxu0 %v129
    %1058 = vmatprep.subr.mxu0 %v126
    %1059 = vmatpush1.msra.mxu0 %v125
    %1060 = vmatprep.subr.mxu0 %v122
    %1061 = vmatpush1.msra.mxu0 %v121
    %1062 = vmatprep.subr.mxu0 %v118
    %1063 = vmatpush1.msra.mxu0 %v117
    %1064 = vmatprep.subr.mxu0 %v114
    %1065 = vmatpush1.msra.mxu0 %v113
    %1066 = vmatprep.subr.mxu0 %v110
    %1067 = vmatpush1.msra.mxu0 %v109
    %1068 = vmatprep.subr.mxu0 %v106
    %1069 = vmatpush1.msra.mxu0 %v105
    %1070 = vmatprep.subr.mxu0 %v102
    %1071 = vmatpush1.msra.mxu0 %v101
    %1072 = vmatprep.subr.mxu0 %v98
    %1073 = vmatpush1.msra.mxu0 %v97
    %1074 = vmatprep.subr.mxu0 %v94
    %1075 = vmatpush1.msra.mxu0 %v93
    %1076 = vmatprep.subr.mxu0 %v90
    %1077 = vmatpush1.msra.mxu0 %v89
    %1078 = vmatprep.subr.mxu0 %v86
    %1079 = vmatpush1.msra.mxu0 %v85
    %1080 = vmatprep.subr.mxu0 %v82
    %1081 = vmatpush1.msra.mxu0 %v81
    %1082 = vmatprep.subr.mxu0 0.0
    %1083 = vmatpush2.msra.mxu0 0.0
    %1084 = vmatprep.subr.mxu0 0.0
    %1085 = vmatpush2.msra.mxu0 0.0
    %1086 = vmatprep.subr.mxu0 0.0
    %1087 = vmatpush2.msra.mxu0 0.0
    %1088 = vmatprep.subr.mxu0 0.0
    %1089 = vmatpush2.msra.mxu0 0.0
    %1090 = vmatprep.subr.mxu0 0.0
    %1091 = vmatpush2.msra.mxu0 0.0
    %1092 = vmatprep.subr.mxu0 0.0
    %1093 = vmatpush2.msra.mxu0 0.0
    %1094 = vmatprep.subr.mxu0 0.0
    %1095 = vmatpush2.msra.mxu0 0.0
    %1096 = vmatprep.subr.mxu0 0.0
    %1097 = vmatpush2.msra.mxu0 0.0
    %1098 = vmatprep.subr.mxu0 0.0
    %1099 = vmatpush2.msra.mxu0 0.0
    %1100 = vmatprep.subr.mxu0 0.0
    %1101 = vmatpush2.msra.mxu0 0.0
    %1102 = vmatprep.subr.mxu0 0.0
    %1103 = vmatpush2.msra.mxu0 0.0
    %1104 = vmatprep.subr.mxu0 0.0
    %1105 = vmatpush2.msra.mxu0 0.0
    %1106 = vmatprep.subr.mxu0 0.0
    %1107 = vmatpush2.msra.mxu0 0.0
    %1108 = vmatprep.subr.mxu0 0.0
    %1109 = vmatpush2.msra.mxu0 0.0
    %1110 = vmatprep.subr.mxu0 0.0
    %1111 = vmatpush2.msra.mxu0 0.0
    %1112 = vmatprep.subr.mxu0 0.0
    %1113 = vmatpush2.msra.mxu0 0.0
    %1114 = vmatprep.mubr.f32.mxu0 0.0
    %1115 = vmatmul.mubr.f32.gmra.mxu0 %v807
    %v1116 = vpop.f32.mrf.mxu0
    %v1117 = vadd.f32 0.0, %v1116
    %v1118 = vpop.f32.mrf.mxu0
    %v1119 = vadd.f32 0.0, %v1118
    %1120 = vdwg.mxu0
    %v1121 = vadd.f32 %v975, %v1046
    %v1122 = vadd.f32 %v976, %v1048
    %v1123 = vadd.f32 %v977, %v1117
    %v1124 = vadd.f32 %v978, %v1119
    %v1125 = vxor.u32 %v1121, 2147483648
    %v1126 = vxor.u32 %v1122, 2147483648
    %v1127 = vxor.u32 %v1123, 2147483648
    %v1128 = vmul.f32 %v1125, 1.442695
    %v1129 = vpow.pop %v1128
    %v1130 = vmul.f32 %v1126, 1.442695
    %v1131 = vpow.pop %v1130
    %v1132 = vmul.f32 %v1127, 1.442695
    %v1133 = vpow.pop %v1132
    %v1134 = vadd.f32 %v1129, 1.0
    %v1135 = vadd.f32 %v1131, 1.0
    %v1136 = vadd.f32 %v1133, 1.0
    %v1137 = vrcp.pop %v1134
    %v1138 = vmul.f32 1.0, %v1137
    %v1139 = vrcp.pop %v1135
    %v1140 = vmul.f32 1.0, %v1139
    %v1141 = vrcp.pop %v1136
    %v1142 = vmul.f32 1.0, %v1141
    %v1143 = vtanh.pop %v1124
    %v1144 = vmul.f32 %v1140, %v805
    %v1145 = vmul.f32 %v1138, %v1143
    %v1146 = vadd.f32 %v1144, %v1145
    %v1147 = vtanh.pop %v1146
    %v1148 = vmul.f32 %v1142, %v1147
    %1149 = vmatprep.subr.mxu0 %v204
    %1150 = vmatpush1.msra.mxu0 %v203
    %1151 = vmatprep.subr.mxu0 %v200
    %1152 = vmatpush1.msra.mxu0 %v199
    %1153 = vmatprep.subr.mxu0 %v196
    %1154 = vmatpush1.msra.mxu0 %v195
    %1155 = vmatprep.subr.mxu0 %v192
    %1156 = vmatpush1.msra.mxu0 %v191
    %1157 = vmatprep.subr.mxu0 %v188
    %1158 = vmatpush1.msra.mxu0 %v187
    %1159 = vmatprep.subr.mxu0 %v184
    %1160 = vmatpush1.msra.mxu0 %v183
    %1161 = vmatprep.subr.mxu0 %v180
    %1162 = vmatpush1.msra.mxu0 %v179
    %1163 = vmatprep.subr.mxu0 %v176
    %1164 = vmatpush1.msra.mxu0 %v175
    %1165 = vmatprep.subr.mxu0 %v172
    %1166 = vmatpush1.msra.mxu0 %v171
    %1167 = vmatprep.subr.mxu0 %v168
    %1168 = vmatpush1.msra.mxu0 %v167
    %1169 = vmatprep.subr.mxu0 %v164
    %1170 = vmatpush1.msra.mxu0 %v163
    %1171 = vmatprep.subr.mxu0 %v160
    %1172 = vmatpush1.msra.mxu0 %v159
    %1173 = vmatprep.subr.mxu0 %v156
    %1174 = vmatpush1.msra.mxu0 %v155
    %1175 = vmatprep.subr.mxu0 %v152
    %1176 = vmatpush1.msra.mxu0 %v151
    %1177 = vmatprep.subr.mxu0 %v148
    %1178 = vmatpush1.msra.mxu0 %v147
    %1179 = vmatprep.subr.mxu0 %v144
    %1180 = vmatpush1.msra.mxu0 %v143
    %1181 = vmatprep.subr.mxu0 %v268
    %1182 = vmatpush2.msra.mxu0 %v267
    %1183 = vmatprep.subr.mxu0 %v264
    %1184 = vmatpush2.msra.mxu0 %v263
    %1185 = vmatprep.subr.mxu0 %v260
    %1186 = vmatpush2.msra.mxu0 %v259
    %1187 = vmatprep.subr.mxu0 %v256
    %1188 = vmatpush2.msra.mxu0 %v255
    %1189 = vmatprep.subr.mxu0 %v252
    %1190 = vmatpush2.msra.mxu0 %v251
    %1191 = vmatprep.subr.mxu0 %v248
    %1192 = vmatpush2.msra.mxu0 %v247
    %1193 = vmatprep.subr.mxu0 %v244
    %1194 = vmatpush2.msra.mxu0 %v243
    %1195 = vmatprep.subr.mxu0 %v240
    %1196 = vmatpush2.msra.mxu0 %v239
    %1197 = vmatprep.subr.mxu0 %v236
    %1198 = vmatpush2.msra.mxu0 %v235
    %1199 = vmatprep.subr.mxu0 %v232
    %1200 = vmatpush2.msra.mxu0 %v231
    %1201 = vmatprep.subr.mxu0 %v228
    %1202 = vmatpush2.msra.mxu0 %v227
    %1203 = vmatprep.subr.mxu0 %v224
    %1204 = vmatpush2.msra.mxu0 %v223
    %1205 = vmatprep.subr.mxu0 %v220
    %1206 = vmatpush2.msra.mxu0 %v219
    %1207 = vmatprep.subr.mxu0 %v216
    %1208 = vmatpush2.msra.mxu0 %v215
    %1209 = vmatprep.subr.mxu0 %v212
    %1210 = vmatpush2.msra.mxu0 %v211
    %1211 = vmatprep.subr.mxu0 %v208
    %1212 = vmatpush2.msra.mxu0 %v207
    %1213 = vmatprep.mubr.f32.mxu0 %v973
    %1214 = vmatmul.mubr.f32.gmra.mxu0 %v1148
    %v1215 = vpop.f32.mrf.mxu0
    %v1216 = vadd.f32 %v276, %v1215
    %v1217 = vpop.f32.mrf.mxu0
    %v1218 = vadd.f32 %v280, %v1217
    %1219 = vdwg.mxu0
    %1220 = vmatprep.subr.mxu0 %v206
    %1221 = vmatpush1.msra.mxu0 %v205
    %1222 = vmatprep.subr.mxu0 %v202
    %1223 = vmatpush1.msra.mxu0 %v201
    %1224 = vmatprep.subr.mxu0 %v198
    %1225 = vmatpush1.msra.mxu0 %v197
    %1226 = vmatprep.subr.mxu0 %v194
    %1227 = vmatpush1.msra.mxu0 %v193
    %1228 = vmatprep.subr.mxu0 %v190
    %1229 = vmatpush1.msra.mxu0 %v189
    %1230 = vmatprep.subr.mxu0 %v186
    %1231 = vmatpush1.msra.mxu0 %v185
    %1232 = vmatprep.subr.mxu0 %v182
    %1233 = vmatpush1.msra.mxu0 %v181
    %1234 = vmatprep.subr.mxu0 %v178
    %1235 = vmatpush1.msra.mxu0 %v177
    %1236 = vmatprep.subr.mxu0 %v174
    %1237 = vmatpush1.msra.mxu0 %v173
    %1238 = vmatprep.subr.mxu0 %v170
    %1239 = vmatpush1.msra.mxu0 %v169
    %1240 = vmatprep.subr.mxu0 %v166
    %1241 = vmatpush1.msra.mxu0 %v165
    %1242 = vmatprep.subr.mxu0 %v162
    %1243 = vmatpush1.msra.mxu0 %v161
    %1244 = vmatprep.subr.mxu0 %v158
    %1245 = vmatpush1.msra.mxu0 %v157
    %1246 = vmatprep.subr.mxu0 %v154
    %1247 = vmatpush1.msra.mxu0 %v153
    %1248 = vmatprep.subr.mxu0 %v150
    %1249 = vmatpush1.msra.mxu0 %v149
    %1250 = vmatprep.subr.mxu0 %v146
    %1251 = vmatpush1.msra.mxu0 %v145
    %1252 = vmatprep.subr.mxu0 %v270
    %1253 = vmatpush2.msra.mxu0 %v269
    %1254 = vmatprep.subr.mxu0 %v266
    %1255 = vmatpush2.msra.mxu0 %v265
    %1256 = vmatprep.subr.mxu0 %v262
    %1257 = vmatpush2.msra.mxu0 %v261
    %1258 = vmatprep.subr.mxu0 %v258
    %1259 = vmatpush2.msra.mxu0 %v257
    %1260 = vmatprep.subr.mxu0 %v254
    %1261 = vmatpush2.msra.mxu0 %v253
    %1262 = vmatprep.subr.mxu0 %v250
    %1263 = vmatpush2.msra.mxu0 %v249
    %1264 = vmatprep.subr.mxu0 %v246
    %1265 = vmatpush2.msra.mxu0 %v245
    %1266 = vmatprep.subr.mxu0 %v242
    %1267 = vmatpush2.msra.mxu0 %v241
    %1268 = vmatprep.subr.mxu0 %v238
    %1269 = vmatpush2.msra.mxu0 %v237
    %1270 = vmatprep.subr.mxu0 %v234
    %1271 = vmatpush2.msra.mxu0 %v233
    %1272 = vmatprep.subr.mxu0 %v230
    %1273 = vmatpush2.msra.mxu0 %v229
    %1274 = vmatprep.subr.mxu0 %v226
    %1275 = vmatpush2.msra.mxu0 %v225
    %1276 = vmatprep.subr.mxu0 %v222
    %1277 = vmatpush2.msra.mxu0 %v221
    %1278 = vmatprep.subr.mxu0 %v218
    %1279 = vmatpush2.msra.mxu0 %v217
    %1280 = vmatprep.subr.mxu0 %v214
    %1281 = vmatpush2.msra.mxu0 %v213
    %1282 = vmatprep.subr.mxu0 %v210
    %1283 = vmatpush2.msra.mxu0 %v209
    %1284 = vmatprep.mubr.f32.mxu0 %v973
    %1285 = vmatmul.mubr.f32.gmra.mxu0 %v1148
    %v1286 = vpop.f32.mrf.mxu0
    %v1287 = vadd.f32 %v284, %v1286
    %v1288 = vpop.f32.mrf.mxu0
    %v1289 = vadd.f32 %v288, %v1288
    %1290 = vdwg.mxu0
    %v1291 = vxor.u32 %v1216, 2147483648
    %v1292 = vxor.u32 %v1218, 2147483648
    %v1293 = vxor.u32 %v1287, 2147483648
    %v1294 = vmul.f32 %v1291, 1.442695
    %v1295 = vpow.pop %v1294
    %v1296 = vmul.f32 %v1292, 1.442695
    %v1297 = vpow.pop %v1296
    %v1298 = vmul.f32 %v1293, 1.442695
    %v1299 = vpow.pop %v1298
    %v1300 = vadd.f32 %v1295, 1.0
    %v1301 = vadd.f32 %v1297, 1.0
    %v1302 = vadd.f32 %v1299, 1.0
    %v1303 = vrcp.pop %v1300
    %v1304 = vmul.f32 1.0, %v1303
    %v1305 = vrcp.pop %v1301
    %v1306 = vmul.f32 1.0, %v1305
    %v1307 = vrcp.pop %v1302
    %v1308 = vmul.f32 1.0, %v1307
    %v1309 = vtanh.pop %v1289
    %v1310 = vmul.f32 %v1306, %v971
    %v1311 = vmul.f32 %v1304, %v1309
    %v1312 = vadd.f32 %v1310, %v1311
    %v1313 = vtanh.pop %v1312
    %v1314 = vmul.f32 %v1308, %v1313
    %s1315 = scalar_lea.vmem [#allocation2], 96
    %v1316 = vld [vmem:[%s1315] sm:$0xff]
    %v1317 = vld [vmem:[%s1315 + $0x8] sm:$0xff]
    %v1318 = vld [vmem:[%s1315 + $0x10] sm:$0xff]
    %v1319 = vld [vmem:[%s1315 + $0x18] sm:$0xff]
    %1320 = vmatprep.subr.mxu0 %v140
    %1321 = vmatpush1.msra.mxu0 %v139
    %1322 = vmatprep.subr.mxu0 %v136
    %1323 = vmatpush1.msra.mxu0 %v135
    %1324 = vmatprep.subr.mxu0 %v132
    %1325 = vmatpush1.msra.mxu0 %v131
    %1326 = vmatprep.subr.mxu0 %v128
    %1327 = vmatpush1.msra.mxu0 %v127
    %1328 = vmatprep.subr.mxu0 %v124
    %1329 = vmatpush1.msra.mxu0 %v123
    %1330 = vmatprep.subr.mxu0 %v120
    %1331 = vmatpush1.msra.mxu0 %v119
    %1332 = vmatprep.subr.mxu0 %v116
    %1333 = vmatpush1.msra.mxu0 %v115
    %1334 = vmatprep.subr.mxu0 %v112
    %1335 = vmatpush1.msra.mxu0 %v111
    %1336 = vmatprep.subr.mxu0 %v108
    %1337 = vmatpush1.msra.mxu0 %v107
    %1338 = vmatprep.subr.mxu0 %v104
    %1339 = vmatpush1.msra.mxu0 %v103
    %1340 = vmatprep.subr.mxu0 %v100
    %1341 = vmatpush1.msra.mxu0 %v99
    %1342 = vmatprep.subr.mxu0 %v96
    %1343 = vmatpush1.msra.mxu0 %v95
    %1344 = vmatprep.subr.mxu0 %v92
    %1345 = vmatpush1.msra.mxu0 %v91
    %1346 = vmatprep.subr.mxu0 %v88
    %1347 = vmatpush1.msra.mxu0 %v87
    %1348 = vmatprep.subr.mxu0 %v84
    %1349 = vmatpush1.msra.mxu0 %v83
    %1350 = vmatprep.subr.mxu0 %v80
    %1351 = vmatpush1.msra.mxu0 %v79
    %1352 = vmatprep.subr.mxu0 0.0
    %1353 = vmatpush2.msra.mxu0 0.0
    %1354 = vmatprep.subr.mxu0 0.0
    %1355 = vmatpush2.msra.mxu0 0.0
    %1356 = vmatprep.subr.mxu0 0.0
    %1357 = vmatpush2.msra.mxu0 0.0
    %1358 = vmatprep.subr.mxu0 0.0
    %1359 = vmatpush2.msra.mxu0 0.0
    %1360 = vmatprep.subr.mxu0 0.0
    %1361 = vmatpush2.msra.mxu0 0.0
    %1362 = vmatprep.subr.mxu0 0.0
    %1363 = vmatpush2.msra.mxu0 0.0
    %1364 = vmatprep.subr.mxu0 0.0
    %1365 = vmatpush2.msra.mxu0 0.0
    %1366 = vmatprep.subr.mxu0 0.0
    %1367 = vmatpush2.msra.mxu0 0.0
    %1368 = vmatprep.subr.mxu0 0.0
    %1369 = vmatpush2.msra.mxu0 0.0
    %1370 = vmatprep.subr.mxu0 0.0
    %1371 = vmatpush2.msra.mxu0 0.0
    %1372 = vmatprep.subr.mxu0 0.0
    %1373 = vmatpush2.msra.mxu0 0.0
    %1374 = vmatprep.subr.mxu0 0.0
    %1375 = vmatpush2.msra.mxu0 0.0
    %1376 = vmatprep.subr.mxu0 0.0
    %1377 = vmatpush2.msra.mxu0 0.0
    %1378 = vmatprep.subr.mxu0 0.0
    %1379 = vmatpush2.msra.mxu0 0.0
    %1380 = vmatprep.subr.mxu0 0.0
    %1381 = vmatpush2.msra.mxu0 0.0
    %1382 = vmatprep.subr.mxu0 0.0
    %1383 = vmatpush2.msra.mxu0 0.0
    %1384 = vmatprep.mubr.f32.mxu0 0.0
    %1385 = vmatmul.mubr.f32.gmra.mxu0 %v1148
    %v1386 = vpop.f32.mrf.mxu0
    %v1387 = vadd.f32 0.0, %v1386
    %v1388 = vpop.f32.mrf.mxu0
    %v1389 = vadd.f32 0.0, %v1388
    %1390 = vdwg.mxu0
    %1391 = vmatprep.subr.mxu0 %v142
    %1392 = vmatpush1.msra.mxu0 %v141
    %1393 = vmatprep.subr.mxu0 %v138
    %1394 = vmatpush1.msra.mxu0 %v137
    %1395 = vmatprep.subr.mxu0 %v134
    %1396 = vmatpush1.msra.mxu0 %v133
    %1397 = vmatprep.subr.mxu0 %v130
    %1398 = vmatpush1.msra.mxu0 %v129
    %1399 = vmatprep.subr.mxu0 %v126
    %1400 = vmatpush1.msra.mxu0 %v125
    %1401 = vmatprep.subr.mxu0 %v122
    %1402 = vmatpush1.msra.mxu0 %v121
    %1403 = vmatprep.subr.mxu0 %v118
    %1404 = vmatpush1.msra.mxu0 %v117
    %1405 = vmatprep.subr.mxu0 %v114
    %1406 = vmatpush1.msra.mxu0 %v113
    %1407 = vmatprep.subr.mxu0 %v110
    %1408 = vmatpush1.msra.mxu0 %v109
    %1409 = vmatprep.subr.mxu0 %v106
    %1410 = vmatpush1.msra.mxu0 %v105
    %1411 = vmatprep.subr.mxu0 %v102
    %1412 = vmatpush1.msra.mxu0 %v101
    %1413 = vmatprep.subr.mxu0 %v98
    %1414 = vmatpush1.msra.mxu0 %v97
    %1415 = vmatprep.subr.mxu0 %v94
    %1416 = vmatpush1.msra.mxu0 %v93
    %1417 = vmatprep.subr.mxu0 %v90
    %1418 = vmatpush1.msra.mxu0 %v89
    %1419 = vmatprep.subr.mxu0 %v86
    %1420 = vmatpush1.msra.mxu0 %v85
    %1421 = vmatprep.subr.mxu0 %v82
    %1422 = vmatpush1.msra.mxu0 %v81
    %1423 = vmatprep.subr.mxu0 0.0
    %1424 = vmatpush2.msra.mxu0 0.0
    %1425 = vmatprep.subr.mxu0 0.0
    %1426 = vmatpush2.msra.mxu0 0.0
    %1427 = vmatprep.subr.mxu0 0.0
    %1428 = vmatpush2.msra.mxu0 0.0
    %1429 = vmatprep.subr.mxu0 0.0
    %1430 = vmatpush2.msra.mxu0 0.0
    %1431 = vmatprep.subr.mxu0 0.0
    %1432 = vmatpush2.msra.mxu0 0.0
    %1433 = vmatprep.subr.mxu0 0.0
    %1434 = vmatpush2.msra.mxu0 0.0
    %1435 = vmatprep.subr.mxu0 0.0
    %1436 = vmatpush2.msra.mxu0 0.0
    %1437 = vmatprep.subr.mxu0 0.0
    %1438 = vmatpush2.msra.mxu0 0.0
    %1439 = vmatprep.subr.mxu0 0.0
    %1440 = vmatpush2.msra.mxu0 0.0
    %1441 = vmatprep.subr.mxu0 0.0
    %1442 = vmatpush2.msra.mxu0 0.0
    %1443 = vmatprep.subr.mxu0 0.0
    %1444 = vmatpush2.msra.mxu0 0.0
    %1445 = vmatprep.subr.mxu0 0.0
    %1446 = vmatpush2.msra.mxu0 0.0
    %1447 = vmatprep.subr.mxu0 0.0
    %1448 = vmatpush2.msra.mxu0 0.0
    %1449 = vmatprep.subr.mxu0 0.0
    %1450 = vmatpush2.msra.mxu0 0.0
    %1451 = vmatprep.subr.mxu0 0.0
    %1452 = vmatpush2.msra.mxu0 0.0
    %1453 = vmatprep.subr.mxu0 0.0
    %1454 = vmatpush2.msra.mxu0 0.0
    %1455 = vmatprep.mubr.f32.mxu0 0.0
    %1456 = vmatmul.mubr.f32.gmra.mxu0 %v1148
    %v1457 = vpop.f32.mrf.mxu0
    %v1458 = vadd.f32 0.0, %v1457
    %v1459 = vpop.f32.mrf.mxu0
    %v1460 = vadd.f32 0.0, %v1459
    %1461 = vdwg.mxu0
    %v1462 = vadd.f32 %v1316, %v1387
    %v1463 = vadd.f32 %v1317, %v1389
    %v1464 = vadd.f32 %v1318, %v1458
    %v1465 = vadd.f32 %v1319, %v1460
    %v1466 = vxor.u32 %v1462, 2147483648
    %v1467 = vxor.u32 %v1463, 2147483648
    %v1468 = vxor.u32 %v1464, 2147483648
    %v1469 = vmul.f32 %v1466, 1.442695
    %v1470 = vpow.pop %v1469
    %v1471 = vmul.f32 %v1467, 1.442695
    %v1472 = vpow.pop %v1471
    %v1473 = vmul.f32 %v1468, 1.442695
    %v1474 = vpow.pop %v1473
    %v1475 = vadd.f32 %v1470, 1.0
    %v1476 = vadd.f32 %v1472, 1.0
    %v1477 = vadd.f32 %v1474, 1.0
    %v1478 = vrcp.pop %v1475
    %v1479 = vmul.f32 1.0, %v1478
    %v1480 = vrcp.pop %v1476
    %v1481 = vmul.f32 1.0, %v1480
    %v1482 = vrcp.pop %v1477
    %v1483 = vmul.f32 1.0, %v1482
    %v1484 = vtanh.pop %v1465
    %v1485 = vmul.f32 %v1481, %v1146
    %v1486 = vmul.f32 %v1479, %v1484
    %v1487 = vadd.f32 %v1485, %v1486
    %v1488 = vtanh.pop %v1487
    %v1489 = vmul.f32 %v1483, %v1488
    %1490 = vmatprep.subr.mxu0 %v204
    %1491 = vmatpush1.msra.mxu0 %v203
    %1492 = vmatprep.subr.mxu0 %v200
    %1493 = vmatpush1.msra.mxu0 %v199
    %1494 = vmatprep.subr.mxu0 %v196
    %1495 = vmatpush1.msra.mxu0 %v195
    %1496 = vmatprep.subr.mxu0 %v192
    %1497 = vmatpush1.msra.mxu0 %v191
    %1498 = vmatprep.subr.mxu0 %v188
    %1499 = vmatpush1.msra.mxu0 %v187
    %1500 = vmatprep.subr.mxu0 %v184
    %1501 = vmatpush1.msra.mxu0 %v183
    %1502 = vmatprep.subr.mxu0 %v180
    %1503 = vmatpush1.msra.mxu0 %v179
    %1504 = vmatprep.subr.mxu0 %v176
    %1505 = vmatpush1.msra.mxu0 %v175
    %1506 = vmatprep.subr.mxu0 %v172
    %1507 = vmatpush1.msra.mxu0 %v171
    %1508 = vmatprep.subr.mxu0 %v168
    %1509 = vmatpush1.msra.mxu0 %v167
    %1510 = vmatprep.subr.mxu0 %v164
    %1511 = vmatpush1.msra.mxu0 %v163
    %1512 = vmatprep.subr.mxu0 %v160
    %1513 = vmatpush1.msra.mxu0 %v159
    %1514 = vmatprep.subr.mxu0 %v156
    %1515 = vmatpush1.msra.mxu0 %v155
    %1516 = vmatprep.subr.mxu0 %v152
    %1517 = vmatpush1.msra.mxu0 %v151
    %1518 = vmatprep.subr.mxu0 %v148
    %1519 = vmatpush1.msra.mxu0 %v147
    %1520 = vmatprep.subr.mxu0 %v144
    %1521 = vmatpush1.msra.mxu0 %v143
    %1522 = vmatprep.subr.mxu0 %v268
    %1523 = vmatpush2.msra.mxu0 %v267
    %1524 = vmatprep.subr.mxu0 %v264
    %1525 = vmatpush2.msra.mxu0 %v263
    %1526 = vmatprep.subr.mxu0 %v260
    %1527 = vmatpush2.msra.mxu0 %v259
    %1528 = vmatprep.subr.mxu0 %v256
    %1529 = vmatpush2.msra.mxu0 %v255
    %1530 = vmatprep.subr.mxu0 %v252
    %1531 = vmatpush2.msra.mxu0 %v251
    %1532 = vmatprep.subr.mxu0 %v248
    %1533 = vmatpush2.msra.mxu0 %v247
    %1534 = vmatprep.subr.mxu0 %v244
    %1535 = vmatpush2.msra.mxu0 %v243
    %1536 = vmatprep.subr.mxu0 %v240
    %1537 = vmatpush2.msra.mxu0 %v239
    %1538 = vmatprep.subr.mxu0 %v236
    %1539 = vmatpush2.msra.mxu0 %v235
    %1540 = vmatprep.subr.mxu0 %v232
    %1541 = vmatpush2.msra.mxu0 %v231
    %1542 = vmatprep.subr.mxu0 %v228
    %1543 = vmatpush2.msra.mxu0 %v227
    %1544 = vmatprep.subr.mxu0 %v224
    %1545 = vmatpush2.msra.mxu0 %v223
    %1546 = vmatprep.subr.mxu0 %v220
    %1547 = vmatpush2.msra.mxu0 %v219
    %1548 = vmatprep.subr.mxu0 %v216
    %1549 = vmatpush2.msra.mxu0 %v215
    %1550 = vmatprep.subr.mxu0 %v212
    %1551 = vmatpush2.msra.mxu0 %v211
    %1552 = vmatprep.subr.mxu0 %v208
    %1553 = vmatpush2.msra.mxu0 %v207
    %1554 = vmatprep.mubr.f32.mxu0 %v1314
    %1555 = vmatmul.mubr.f32.gmra.mxu0 %v1489
    %v1556 = vpop.f32.mrf.mxu0
    %v1557 = vadd.f32 %v276, %v1556
    %v1558 = vpop.f32.mrf.mxu0
    %v1559 = vadd.f32 %v280, %v1558
    %1560 = vdwg.mxu0
    %1561 = vmatprep.subr.mxu0 %v206
    %1562 = vmatpush1.msra.mxu0 %v205
    %1563 = vmatprep.subr.mxu0 %v202
    %1564 = vmatpush1.msra.mxu0 %v201
    %1565 = vmatprep.subr.mxu0 %v198
    %1566 = vmatpush1.msra.mxu0 %v197
    %1567 = vmatprep.subr.mxu0 %v194
    %1568 = vmatpush1.msra.mxu0 %v193
    %1569 = vmatprep.subr.mxu0 %v190
    %1570 = vmatpush1.msra.mxu0 %v189
    %1571 = vmatprep.subr.mxu0 %v186
    %1572 = vmatpush1.msra.mxu0 %v185
    %1573 = vmatprep.subr.mxu0 %v182
    %1574 = vmatpush1.msra.mxu0 %v181
    %1575 = vmatprep.subr.mxu0 %v178
    %1576 = vmatpush1.msra.mxu0 %v177
    %1577 = vmatprep.subr.mxu0 %v174
    %1578 = vmatpush1.msra.mxu0 %v173
    %1579 = vmatprep.subr.mxu0 %v170
    %1580 = vmatpush1.msra.mxu0 %v169
    %1581 = vmatprep.subr.mxu0 %v166
    %1582 = vmatpush1.msra.mxu0 %v165
    %1583 = vmatprep.subr.mxu0 %v162
    %1584 = vmatpush1.msra.mxu0 %v161
    %1585 = vmatprep.subr.mxu0 %v158
    %1586 = vmatpush1.msra.mxu0 %v157
    %1587 = vmatprep.subr.mxu0 %v154
    %1588 = vmatpush1.msra.mxu0 %v153
    %1589 = vmatprep.subr.mxu0 %v150
    %1590 = vmatpush1.msra.mxu0 %v149
    %1591 = vmatprep.subr.mxu0 %v146
    %1592 = vmatpush1.msra.mxu0 %v145
    %1593 = vmatprep.subr.mxu0 %v270
    %1594 = vmatpush2.msra.mxu0 %v269
    %1595 = vmatprep.subr.mxu0 %v266
    %1596 = vmatpush2.msra.mxu0 %v265
    %1597 = vmatprep.subr.mxu0 %v262
    %1598 = vmatpush2.msra.mxu0 %v261
    %1599 = vmatprep.subr.mxu0 %v258
    %1600 = vmatpush2.msra.mxu0 %v257
    %1601 = vmatprep.subr.mxu0 %v254
    %1602 = vmatpush2.msra.mxu0 %v253
    %1603 = vmatprep.subr.mxu0 %v250
    %1604 = vmatpush2.msra.mxu0 %v249
    %1605 = vmatprep.subr.mxu0 %v246
    %1606 = vmatpush2.msra.mxu0 %v245
    %1607 = vmatprep.subr.mxu0 %v242
    %1608 = vmatpush2.msra.mxu0 %v241
    %1609 = vmatprep.subr.mxu0 %v238
    %1610 = vmatpush2.msra.mxu0 %v237
    %1611 = vmatprep.subr.mxu0 %v234
    %1612 = vmatpush2.msra.mxu0 %v233
    %1613 = vmatprep.subr.mxu0 %v230
    %1614 = vmatpush2.msra.mxu0 %v229
    %1615 = vmatprep.subr.mxu0 %v226
    %1616 = vmatpush2.msra.mxu0 %v225
    %1617 = vmatprep.subr.mxu0 %v222
    %1618 = vmatpush2.msra.mxu0 %v221
    %1619 = vmatprep.subr.mxu0 %v218
    %1620 = vmatpush2.msra.mxu0 %v217
    %1621 = vmatprep.subr.mxu0 %v214
    %1622 = vmatpush2.msra.mxu0 %v213
    %1623 = vmatprep.subr.mxu0 %v210
    %1624 = vmatpush2.msra.mxu0 %v209
    %1625 = vmatprep.mubr.f32.mxu0 %v1314
    %1626 = vmatmul.mubr.f32.gmra.mxu0 %v1489
    %v1627 = vpop.f32.mrf.mxu0
    %v1628 = vadd.f32 %v284, %v1627
    %v1629 = vpop.f32.mrf.mxu0
    %v1630 = vadd.f32 %v288, %v1629
    %1631 = vdwg.mxu0
    %v1632 = vxor.u32 %v1557, 2147483648
    %v1633 = vxor.u32 %v1559, 2147483648
    %v1634 = vxor.u32 %v1628, 2147483648
    %v1635 = vmul.f32 %v1632, 1.442695
    %v1636 = vpow.pop %v1635
    %v1637 = vmul.f32 %v1633, 1.442695
    %v1638 = vpow.pop %v1637
    %v1639 = vmul.f32 %v1634, 1.442695
    %v1640 = vpow.pop %v1639
    %v1641 = vadd.f32 %v1636, 1.0
    %v1642 = vadd.f32 %v1638, 1.0
    %v1643 = vadd.f32 %v1640, 1.0
    %v1644 = vrcp.pop %v1641
    %v1645 = vmul.f32 1.0, %v1644
    %v1646 = vrcp.pop %v1642
    %v1647 = vmul.f32 1.0, %v1646
    %v1648 = vrcp.pop %v1643
    %v1649 = vmul.f32 1.0, %v1648
    %v1650 = vtanh.pop %v1630
    %v1651 = vmul.f32 %v1647, %v1312
    %v1652 = vmul.f32 %v1645, %v1650
    %v1653 = vadd.f32 %v1651, %v1652
    %v1654 = vtanh.pop %v1653
    %v1655 = vmul.f32 %v1649, %v1654
    %s1656 = scalar_lea.vmem [#allocation2], 128
    %v1657 = vld [vmem:[%s1656] sm:$0xff]
    %v1658 = vld [vmem:[%s1656 + $0x8] sm:$0xff]
    %v1659 = vld [vmem:[%s1656 + $0x10] sm:$0xff]
    %v1660 = vld [vmem:[%s1656 + $0x18] sm:$0xff]
    %1661 = vmatprep.subr.mxu0 %v140
    %1662 = vmatpush1.msra.mxu0 %v139
    %1663 = vmatprep.subr.mxu0 %v136
    %1664 = vmatpush1.msra.mxu0 %v135
    %1665 = vmatprep.subr.mxu0 %v132
    %1666 = vmatpush1.msra.mxu0 %v131
    %1667 = vmatprep.subr.mxu0 %v128
    %1668 = vmatpush1.msra.mxu0 %v127
    %1669 = vmatprep.subr.mxu0 %v124
    %1670 = vmatpush1.msra.mxu0 %v123
    %1671 = vmatprep.subr.mxu0 %v120
    %1672 = vmatpush1.msra.mxu0 %v119
    %1673 = vmatprep.subr.mxu0 %v116
    %1674 = vmatpush1.msra.mxu0 %v115
    %1675 = vmatprep.subr.mxu0 %v112
    %1676 = vmatpush1.msra.mxu0 %v111
    %1677 = vmatprep.subr.mxu0 %v108
    %1678 = vmatpush1.msra.mxu0 %v107
    %1679 = vmatprep.subr.mxu0 %v104
    %1680 = vmatpush1.msra.mxu0 %v103
    %1681 = vmatprep.subr.mxu0 %v100
    %1682 = vmatpush1.msra.mxu0 %v99
    %1683 = vmatprep.subr.mxu0 %v96
    %1684 = vmatpush1.msra.mxu0 %v95
    %1685 = vmatprep.subr.mxu0 %v92
    %1686 = vmatpush1.msra.mxu0 %v91
    %1687 = vmatprep.subr.mxu0 %v88
    %1688 = vmatpush1.msra.mxu0 %v87
    %1689 = vmatprep.subr.mxu0 %v84
    %1690 = vmatpush1.msra.mxu0 %v83
    %1691 = vmatprep.subr.mxu0 %v80
    %1692 = vmatpush1.msra.mxu0 %v79
    %1693 = vmatprep.subr.mxu0 0.0
    %1694 = vmatpush2.msra.mxu0 0.0
    %1695 = vmatprep.subr.mxu0 0.0
    %1696 = vmatpush2.msra.mxu0 0.0
    %1697 = vmatprep.subr.mxu0 0.0
    %1698 = vmatpush2.msra.mxu0 0.0
    %1699 = vmatprep.subr.mxu0 0.0
    %1700 = vmatpush2.msra.mxu0 0.0
    %1701 = vmatprep.subr.mxu0 0.0
    %1702 = vmatpush2.msra.mxu0 0.0
    %1703 = vmatprep.subr.mxu0 0.0
    %1704 = vmatpush2.msra.mxu0 0.0
    %1705 = vmatprep.subr.mxu0 0.0
    %1706 = vmatpush2.msra.mxu0 0.0
    %1707 = vmatprep.subr.mxu0 0.0
    %1708 = vmatpush2.msra.mxu0 0.0
    %1709 = vmatprep.subr.mxu0 0.0
    %1710 = vmatpush2.msra.mxu0 0.0
    %1711 = vmatprep.subr.mxu0 0.0
    %1712 = vmatpush2.msra.mxu0 0.0
    %1713 = vmatprep.subr.mxu0 0.0
    %1714 = vmatpush2.msra.mxu0 0.0
    %1715 = vmatprep.subr.mxu0 0.0
    %1716 = vmatpush2.msra.mxu0 0.0
    %1717 = vmatprep.subr.mxu0 0.0
    %1718 = vmatpush2.msra.mxu0 0.0
    %1719 = vmatprep.subr.mxu0 0.0
    %1720 = vmatpush2.msra.mxu0 0.0
    %1721 = vmatprep.subr.mxu0 0.0
    %1722 = vmatpush2.msra.mxu0 0.0
    %1723 = vmatprep.subr.mxu0 0.0
    %1724 = vmatpush2.msra.mxu0 0.0
    %1725 = vmatprep.mubr.f32.mxu0 0.0
    %1726 = vmatmul.mubr.f32.gmra.mxu0 %v1489
    %v1727 = vpop.f32.mrf.mxu0
    %v1728 = vadd.f32 0.0, %v1727
    %v1729 = vpop.f32.mrf.mxu0
    %v1730 = vadd.f32 0.0, %v1729
    %1731 = vdwg.mxu0
    %1732 = vmatprep.subr.mxu0 %v142
    %1733 = vmatpush1.msra.mxu0 %v141
    %1734 = vmatprep.subr.mxu0 %v138
    %1735 = vmatpush1.msra.mxu0 %v137
    %1736 = vmatprep.subr.mxu0 %v134
    %1737 = vmatpush1.msra.mxu0 %v133
    %1738 = vmatprep.subr.mxu0 %v130
    %1739 = vmatpush1.msra.mxu0 %v129
    %1740 = vmatprep.subr.mxu0 %v126
    %1741 = vmatpush1.msra.mxu0 %v125
    %1742 = vmatprep.subr.mxu0 %v122
    %1743 = vmatpush1.msra.mxu0 %v121
    %1744 = vmatprep.subr.mxu0 %v118
    %1745 = vmatpush1.msra.mxu0 %v117
    %1746 = vmatprep.subr.mxu0 %v114
    %1747 = vmatpush1.msra.mxu0 %v113
    %1748 = vmatprep.subr.mxu0 %v110
    %1749 = vmatpush1.msra.mxu0 %v109
    %1750 = vmatprep.subr.mxu0 %v106
    %1751 = vmatpush1.msra.mxu0 %v105
    %1752 = vmatprep.subr.mxu0 %v102
    %1753 = vmatpush1.msra.mxu0 %v101
    %1754 = vmatprep.subr.mxu0 %v98
    %1755 = vmatpush1.msra.mxu0 %v97
    %1756 = vmatprep.subr.mxu0 %v94
    %1757 = vmatpush1.msra.mxu0 %v93
    %1758 = vmatprep.subr.mxu0 %v90
    %1759 = vmatpush1.msra.mxu0 %v89
    %1760 = vmatprep.subr.mxu0 %v86
    %1761 = vmatpush1.msra.mxu0 %v85
    %1762 = vmatprep.subr.mxu0 %v82
    %1763 = vmatpush1.msra.mxu0 %v81
    %1764 = vmatprep.subr.mxu0 0.0
    %1765 = vmatpush2.msra.mxu0 0.0
    %1766 = vmatprep.subr.mxu0 0.0
    %1767 = vmatpush2.msra.mxu0 0.0
    %1768 = vmatprep.subr.mxu0 0.0
    %1769 = vmatpush2.msra.mxu0 0.0
    %1770 = vmatprep.subr.mxu0 0.0
    %1771 = vmatpush2.msra.mxu0 0.0
    %1772 = vmatprep.subr.mxu0 0.0
    %1773 = vmatpush2.msra.mxu0 0.0
    %1774 = vmatprep.subr.mxu0 0.0
    %1775 = vmatpush2.msra.mxu0 0.0
    %1776 = vmatprep.subr.mxu0 0.0
    %1777 = vmatpush2.msra.mxu0 0.0
    %1778 = vmatprep.subr.mxu0 0.0
    %1779 = vmatpush2.msra.mxu0 0.0
    %1780 = vmatprep.subr.mxu0 0.0
    %1781 = vmatpush2.msra.mxu0 0.0
    %1782 = vmatprep.subr.mxu0 0.0
    %1783 = vmatpush2.msra.mxu0 0.0
    %1784 = vmatprep.subr.mxu0 0.0
    %1785 = vmatpush2.msra.mxu0 0.0
    %1786 = vmatprep.subr.mxu0 0.0
    %1787 = vmatpush2.msra.mxu0 0.0
    %1788 = vmatprep.subr.mxu0 0.0
    %1789 = vmatpush2.msra.mxu0 0.0
    %1790 = vmatprep.subr.mxu0 0.0
    %1791 = vmatpush2.msra.mxu0 0.0
    %1792 = vmatprep.subr.mxu0 0.0
    %1793 = vmatpush2.msra.mxu0 0.0
    %1794 = vmatprep.subr.mxu0 0.0
    %1795 = vmatpush2.msra.mxu0 0.0
    %1796 = vmatprep.mubr.f32.mxu0 0.0
    %1797 = vmatmul.mubr.f32.gmra.mxu0 %v1489
    %v1798 = vpop.f32.mrf.mxu0
    %v1799 = vadd.f32 0.0, %v1798
    %v1800 = vpop.f32.mrf.mxu0
    %v1801 = vadd.f32 0.0, %v1800
    %1802 = vdwg.mxu0
    %v1803 = vadd.f32 %v1657, %v1728
    %v1804 = vadd.f32 %v1658, %v1730
    %v1805 = vadd.f32 %v1659, %v1799
    %v1806 = vadd.f32 %v1660, %v1801
    %v1807 = vxor.u32 %v1803, 2147483648
    %v1808 = vxor.u32 %v1804, 2147483648
    %v1809 = vxor.u32 %v1805, 2147483648
    %v1810 = vmul.f32 %v1807, 1.442695
    %v1811 = vpow.pop %v1810
    %v1812 = vmul.f32 %v1808, 1.442695
    %v1813 = vpow.pop %v1812
    %v1814 = vmul.f32 %v1809, 1.442695
    %v1815 = vpow.pop %v1814
    %v1816 = vadd.f32 %v1811, 1.0
    %v1817 = vadd.f32 %v1813, 1.0
    %v1818 = vadd.f32 %v1815, 1.0
    %v1819 = vrcp.pop %v1816
    %v1820 = vmul.f32 1.0, %v1819
    %v1821 = vrcp.pop %v1817
    %v1822 = vmul.f32 1.0, %v1821
    %v1823 = vrcp.pop %v1818
    %v1824 = vmul.f32 1.0, %v1823
    %v1825 = vtanh.pop %v1806
    %v1826 = vmul.f32 %v1822, %v1487
    %v1827 = vmul.f32 %v1820, %v1825
    %v1828 = vadd.f32 %v1826, %v1827
    %v1829 = vtanh.pop %v1828
    %v1830 = vmul.f32 %v1824, %v1829
    %1831 = vmatprep.subr.mxu0 %v204
    %1832 = vmatpush1.msra.mxu0 %v203
    %1833 = vmatprep.subr.mxu0 %v200
    %1834 = vmatpush1.msra.mxu0 %v199
    %1835 = vmatprep.subr.mxu0 %v196
    %1836 = vmatpush1.msra.mxu0 %v195
    %1837 = vmatprep.subr.mxu0 %v192
    %1838 = vmatpush1.msra.mxu0 %v191
    %1839 = vmatprep.subr.mxu0 %v188
    %1840 = vmatpush1.msra.mxu0 %v187
    %1841 = vmatprep.subr.mxu0 %v184
    %1842 = vmatpush1.msra.mxu0 %v183
    %1843 = vmatprep.subr.mxu0 %v180
    %1844 = vmatpush1.msra.mxu0 %v179
    %1845 = vmatprep.subr.mxu0 %v176
    %1846 = vmatpush1.msra.mxu0 %v175
    %1847 = vmatprep.subr.mxu0 %v172
    %1848 = vmatpush1.msra.mxu0 %v171
    %1849 = vmatprep.subr.mxu0 %v168
    %1850 = vmatpush1.msra.mxu0 %v167
    %1851 = vmatprep.subr.mxu0 %v164
    %1852 = vmatpush1.msra.mxu0 %v163
    %1853 = vmatprep.subr.mxu0 %v160
    %1854 = vmatpush1.msra.mxu0 %v159
    %1855 = vmatprep.subr.mxu0 %v156
    %1856 = vmatpush1.msra.mxu0 %v155
    %1857 = vmatprep.subr.mxu0 %v152
    %1858 = vmatpush1.msra.mxu0 %v151
    %1859 = vmatprep.subr.mxu0 %v148
    %1860 = vmatpush1.msra.mxu0 %v147
    %1861 = vmatprep.subr.mxu0 %v144
    %1862 = vmatpush1.msra.mxu0 %v143
    %1863 = vmatprep.subr.mxu0 %v268
    %1864 = vmatpush2.msra.mxu0 %v267
    %1865 = vmatprep.subr.mxu0 %v264
    %1866 = vmatpush2.msra.mxu0 %v263
    %1867 = vmatprep.subr.mxu0 %v260
    %1868 = vmatpush2.msra.mxu0 %v259
    %1869 = vmatprep.subr.mxu0 %v256
    %1870 = vmatpush2.msra.mxu0 %v255
    %1871 = vmatprep.subr.mxu0 %v252
    %1872 = vmatpush2.msra.mxu0 %v251
    %1873 = vmatprep.subr.mxu0 %v248
    %1874 = vmatpush2.msra.mxu0 %v247
    %1875 = vmatprep.subr.mxu0 %v244
    %1876 = vmatpush2.msra.mxu0 %v243
    %1877 = vmatprep.subr.mxu0 %v240
    %1878 = vmatpush2.msra.mxu0 %v239
    %1879 = vmatprep.subr.mxu0 %v236
    %1880 = vmatpush2.msra.mxu0 %v235
    %1881 = vmatprep.subr.mxu0 %v232
    %1882 = vmatpush2.msra.mxu0 %v231
    %1883 = vmatprep.subr.mxu0 %v228
    %1884 = vmatpush2.msra.mxu0 %v227
    %1885 = vmatprep.subr.mxu0 %v224
    %1886 = vmatpush2.msra.mxu0 %v223
    %1887 = vmatprep.subr.mxu0 %v220
    %1888 = vmatpush2.msra.mxu0 %v219
    %1889 = vmatprep.subr.mxu0 %v216
    %1890 = vmatpush2.msra.mxu0 %v215
    %1891 = vmatprep.subr.mxu0 %v212
    %1892 = vmatpush2.msra.mxu0 %v211
    %1893 = vmatprep.subr.mxu0 %v208
    %1894 = vmatpush2.msra.mxu0 %v207
    %1895 = vmatprep.mubr.f32.mxu0 %v1655
    %1896 = vmatmul.mubr.f32.gmra.mxu0 %v1830
    %v1897 = vpop.f32.mrf.mxu0
    %v1898 = vadd.f32 %v276, %v1897
    %v1899 = vpop.f32.mrf.mxu0
    %v1900 = vadd.f32 %v280, %v1899
    %1901 = vdwg.mxu0
    %1902 = vmatprep.subr.mxu0 %v206
    %1903 = vmatpush1.msra.mxu0 %v205
    %1904 = vmatprep.subr.mxu0 %v202
    %1905 = vmatpush1.msra.mxu0 %v201
    %1906 = vmatprep.subr.mxu0 %v198
    %1907 = vmatpush1.msra.mxu0 %v197
    %1908 = vmatprep.subr.mxu0 %v194
    %1909 = vmatpush1.msra.mxu0 %v193
    %1910 = vmatprep.subr.mxu0 %v190
    %1911 = vmatpush1.msra.mxu0 %v189
    %1912 = vmatprep.subr.mxu0 %v186
    %1913 = vmatpush1.msra.mxu0 %v185
    %1914 = vmatprep.subr.mxu0 %v182
    %1915 = vmatpush1.msra.mxu0 %v181
    %1916 = vmatprep.subr.mxu0 %v178
    %1917 = vmatpush1.msra.mxu0 %v177
    %1918 = vmatprep.subr.mxu0 %v174
    %1919 = vmatpush1.msra.mxu0 %v173
    %1920 = vmatprep.subr.mxu0 %v170
    %1921 = vmatpush1.msra.mxu0 %v169
    %1922 = vmatprep.subr.mxu0 %v166
    %1923 = vmatpush1.msra.mxu0 %v165
    %1924 = vmatprep.subr.mxu0 %v162
    %1925 = vmatpush1.msra.mxu0 %v161
    %1926 = vmatprep.subr.mxu0 %v158
    %1927 = vmatpush1.msra.mxu0 %v157
    %1928 = vmatprep.subr.mxu0 %v154
    %1929 = vmatpush1.msra.mxu0 %v153
    %1930 = vmatprep.subr.mxu0 %v150
    %1931 = vmatpush1.msra.mxu0 %v149
    %1932 = vmatprep.subr.mxu0 %v146
    %1933 = vmatpush1.msra.mxu0 %v145
    %1934 = vmatprep.subr.mxu0 %v270
    %1935 = vmatpush2.msra.mxu0 %v269
    %1936 = vmatprep.subr.mxu0 %v266
    %1937 = vmatpush2.msra.mxu0 %v265
    %1938 = vmatprep.subr.mxu0 %v262
    %1939 = vmatpush2.msra.mxu0 %v261
    %1940 = vmatprep.subr.mxu0 %v258
    %1941 = vmatpush2.msra.mxu0 %v257
    %1942 = vmatprep.subr.mxu0 %v254
    %1943 = vmatpush2.msra.mxu0 %v253
    %1944 = vmatprep.subr.mxu0 %v250
    %1945 = vmatpush2.msra.mxu0 %v249
    %1946 = vmatprep.subr.mxu0 %v246
    %1947 = vmatpush2.msra.mxu0 %v245
    %1948 = vmatprep.subr.mxu0 %v242
    %1949 = vmatpush2.msra.mxu0 %v241
    %1950 = vmatprep.subr.mxu0 %v238
    %1951 = vmatpush2.msra.mxu0 %v237
    %1952 = vmatprep.subr.mxu0 %v234
    %1953 = vmatpush2.msra.mxu0 %v233
    %1954 = vmatprep.subr.mxu0 %v230
    %1955 = vmatpush2.msra.mxu0 %v229
    %1956 = vmatprep.subr.mxu0 %v226
    %1957 = vmatpush2.msra.mxu0 %v225
    %1958 = vmatprep.subr.mxu0 %v222
    %1959 = vmatpush2.msra.mxu0 %v221
    %1960 = vmatprep.subr.mxu0 %v218
    %1961 = vmatpush2.msra.mxu0 %v217
    %1962 = vmatprep.subr.mxu0 %v214
    %1963 = vmatpush2.msra.mxu0 %v213
    %1964 = vmatprep.subr.mxu0 %v210
    %1965 = vmatpush2.msra.mxu0 %v209
    %1966 = vmatprep.mubr.f32.mxu0 %v1655
    %1967 = vmatmul.mubr.f32.gmra.mxu0 %v1830
    %v1968 = vpop.f32.mrf.mxu0
    %v1969 = vadd.f32 %v284, %v1968
    %v1970 = vpop.f32.mrf.mxu0
    %v1971 = vadd.f32 %v288, %v1970
    %1972 = vdwg.mxu0
    %v1973 = vxor.u32 %v1898, 2147483648
    %v1974 = vxor.u32 %v1900, 2147483648
    %v1975 = vxor.u32 %v1969, 2147483648
    %v1976 = vmul.f32 %v1973, 1.442695
    %v1977 = vpow.pop %v1976
    %v1978 = vmul.f32 %v1974, 1.442695
    %v1979 = vpow.pop %v1978
    %v1980 = vmul.f32 %v1975, 1.442695
    %v1981 = vpow.pop %v1980
    %v1982 = vadd.f32 %v1977, 1.0
    %v1983 = vadd.f32 %v1979, 1.0
    %v1984 = vadd.f32 %v1981, 1.0
    %v1985 = vrcp.pop %v1982
    %v1986 = vmul.f32 1.0, %v1985
    %v1987 = vrcp.pop %v1983
    %v1988 = vmul.f32 1.0, %v1987
    %v1989 = vrcp.pop %v1984
    %v1990 = vmul.f32 1.0, %v1989
    %v1991 = vtanh.pop %v1971
    %v1992 = vmul.f32 %v1988, %v1653
    %v1993 = vmul.f32 %v1986, %v1991
    %v1994 = vadd.f32 %v1992, %v1993
    %v1995 = vtanh.pop %v1994
    %v1996 = vmul.f32 %v1990, %v1995
    %s1997 = scalar_lea.vmem [#allocation2], 160
    %v1998 = vld [vmem:[%s1997] sm:$0xff]
    %v1999 = vld [vmem:[%s1997 + $0x8] sm:$0xff]
    %v2000 = vld [vmem:[%s1997 + $0x10] sm:$0xff]
    %v2001 = vld [vmem:[%s1997 + $0x18] sm:$0xff]
    %2002 = vmatprep.subr.mxu0 %v140
    %2003 = vmatpush1.msra.mxu0 %v139
    %2004 = vmatprep.subr.mxu0 %v136
    %2005 = vmatpush1.msra.mxu0 %v135
    %2006 = vmatprep.subr.mxu0 %v132
    %2007 = vmatpush1.msra.mxu0 %v131
    %2008 = vmatprep.subr.mxu0 %v128
    %2009 = vmatpush1.msra.mxu0 %v127
    %2010 = vmatprep.subr.mxu0 %v124
    %2011 = vmatpush1.msra.mxu0 %v123
    %2012 = vmatprep.subr.mxu0 %v120
    %2013 = vmatpush1.msra.mxu0 %v119
    %2014 = vmatprep.subr.mxu0 %v116
    %2015 = vmatpush1.msra.mxu0 %v115
    %2016 = vmatprep.subr.mxu0 %v112
    %2017 = vmatpush1.msra.mxu0 %v111
    %2018 = vmatprep.subr.mxu0 %v108
    %2019 = vmatpush1.msra.mxu0 %v107
    %2020 = vmatprep.subr.mxu0 %v104
    %2021 = vmatpush1.msra.mxu0 %v103
    %2022 = vmatprep.subr.mxu0 %v100
    %2023 = vmatpush1.msra.mxu0 %v99
    %2024 = vmatprep.subr.mxu0 %v96
    %2025 = vmatpush1.msra.mxu0 %v95
    %2026 = vmatprep.subr.mxu0 %v92
    %2027 = vmatpush1.msra.mxu0 %v91
    %2028 = vmatprep.subr.mxu0 %v88
    %2029 = vmatpush1.msra.mxu0 %v87
    %2030 = vmatprep.subr.mxu0 %v84
    %2031 = vmatpush1.msra.mxu0 %v83
    %2032 = vmatprep.subr.mxu0 %v80
    %2033 = vmatpush1.msra.mxu0 %v79
    %2034 = vmatprep.subr.mxu0 0.0
    %2035 = vmatpush2.msra.mxu0 0.0
    %2036 = vmatprep.subr.mxu0 0.0
    %2037 = vmatpush2.msra.mxu0 0.0
    %2038 = vmatprep.subr.mxu0 0.0
    %2039 = vmatpush2.msra.mxu0 0.0
    %2040 = vmatprep.subr.mxu0 0.0
    %2041 = vmatpush2.msra.mxu0 0.0
    %2042 = vmatprep.subr.mxu0 0.0
    %2043 = vmatpush2.msra.mxu0 0.0
    %2044 = vmatprep.subr.mxu0 0.0
    %2045 = vmatpush2.msra.mxu0 0.0
    %2046 = vmatprep.subr.mxu0 0.0
    %2047 = vmatpush2.msra.mxu0 0.0
    %2048 = vmatprep.subr.mxu0 0.0
    %2049 = vmatpush2.msra.mxu0 0.0
    %2050 = vmatprep.subr.mxu0 0.0
    %2051 = vmatpush2.msra.mxu0 0.0
    %2052 = vmatprep.subr.mxu0 0.0
    %2053 = vmatpush2.msra.mxu0 0.0
    %2054 = vmatprep.subr.mxu0 0.0
    %2055 = vmatpush2.msra.mxu0 0.0
    %2056 = vmatprep.subr.mxu0 0.0
    %2057 = vmatpush2.msra.mxu0 0.0
    %2058 = vmatprep.subr.mxu0 0.0
    %2059 = vmatpush2.msra.mxu0 0.0
    %2060 = vmatprep.subr.mxu0 0.0
    %2061 = vmatpush2.msra.mxu0 0.0
    %2062 = vmatprep.subr.mxu0 0.0
    %2063 = vmatpush2.msra.mxu0 0.0
    %2064 = vmatprep.subr.mxu0 0.0
    %2065 = vmatpush2.msra.mxu0 0.0
    %2066 = vmatprep.mubr.f32.mxu0 0.0
    %2067 = vmatmul.mubr.f32.gmra.mxu0 %v1830
    %v2068 = vpop.f32.mrf.mxu0
    %v2069 = vadd.f32 0.0, %v2068
    %v2070 = vpop.f32.mrf.mxu0
    %v2071 = vadd.f32 0.0, %v2070
    %2072 = vdwg.mxu0
    %2073 = vmatprep.subr.mxu0 %v142
    %2074 = vmatpush1.msra.mxu0 %v141
    %2075 = vmatprep.subr.mxu0 %v138
    %2076 = vmatpush1.msra.mxu0 %v137
    %2077 = vmatprep.subr.mxu0 %v134
    %2078 = vmatpush1.msra.mxu0 %v133
    %2079 = vmatprep.subr.mxu0 %v130
    %2080 = vmatpush1.msra.mxu0 %v129
    %2081 = vmatprep.subr.mxu0 %v126
    %2082 = vmatpush1.msra.mxu0 %v125
    %2083 = vmatprep.subr.mxu0 %v122
    %2084 = vmatpush1.msra.mxu0 %v121
    %2085 = vmatprep.subr.mxu0 %v118
    %2086 = vmatpush1.msra.mxu0 %v117
    %2087 = vmatprep.subr.mxu0 %v114
    %2088 = vmatpush1.msra.mxu0 %v113
    %2089 = vmatprep.subr.mxu0 %v110
    %2090 = vmatpush1.msra.mxu0 %v109
    %2091 = vmatprep.subr.mxu0 %v106
    %2092 = vmatpush1.msra.mxu0 %v105
    %2093 = vmatprep.subr.mxu0 %v102
    %2094 = vmatpush1.msra.mxu0 %v101
    %2095 = vmatprep.subr.mxu0 %v98
    %2096 = vmatpush1.msra.mxu0 %v97
    %2097 = vmatprep.subr.mxu0 %v94
    %2098 = vmatpush1.msra.mxu0 %v93
    %2099 = vmatprep.subr.mxu0 %v90
    %2100 = vmatpush1.msra.mxu0 %v89
    %2101 = vmatprep.subr.mxu0 %v86
    %2102 = vmatpush1.msra.mxu0 %v85
    %2103 = vmatprep.subr.mxu0 %v82
    %2104 = vmatpush1.msra.mxu0 %v81
    %2105 = vmatprep.subr.mxu0 0.0
    %2106 = vmatpush2.msra.mxu0 0.0
    %2107 = vmatprep.subr.mxu0 0.0
    %2108 = vmatpush2.msra.mxu0 0.0
    %2109 = vmatprep.subr.mxu0 0.0
    %2110 = vmatpush2.msra.mxu0 0.0
    %2111 = vmatprep.subr.mxu0 0.0
    %2112 = vmatpush2.msra.mxu0 0.0
    %2113 = vmatprep.subr.mxu0 0.0
    %2114 = vmatpush2.msra.mxu0 0.0
    %2115 = vmatprep.subr.mxu0 0.0
    %2116 = vmatpush2.msra.mxu0 0.0
    %2117 = vmatprep.subr.mxu0 0.0
    %2118 = vmatpush2.msra.mxu0 0.0
    %2119 = vmatprep.subr.mxu0 0.0
    %2120 = vmatpush2.msra.mxu0 0.0
    %2121 = vmatprep.subr.mxu0 0.0
    %2122 = vmatpush2.msra.mxu0 0.0
    %2123 = vmatprep.subr.mxu0 0.0
    %2124 = vmatpush2.msra.mxu0 0.0
    %2125 = vmatprep.subr.mxu0 0.0
    %2126 = vmatpush2.msra.mxu0 0.0
    %2127 = vmatprep.subr.mxu0 0.0
    %2128 = vmatpush2.msra.mxu0 0.0
    %2129 = vmatprep.subr.mxu0 0.0
    %2130 = vmatpush2.msra.mxu0 0.0
    %2131 = vmatprep.subr.mxu0 0.0
    %2132 = vmatpush2.msra.mxu0 0.0
    %2133 = vmatprep.subr.mxu0 0.0
    %2134 = vmatpush2.msra.mxu0 0.0
    %2135 = vmatprep.subr.mxu0 0.0
    %2136 = vmatpush2.msra.mxu0 0.0
    %2137 = vmatprep.mubr.f32.mxu0 0.0
    %2138 = vmatmul.mubr.f32.gmra.mxu0 %v1830
    %v2139 = vpop.f32.mrf.mxu0
    %v2140 = vadd.f32 0.0, %v2139
    %v2141 = vpop.f32.mrf.mxu0
    %v2142 = vadd.f32 0.0, %v2141
    %2143 = vdwg.mxu0
    %v2144 = vadd.f32 %v1998, %v2069
    %v2145 = vadd.f32 %v1999, %v2071
    %v2146 = vadd.f32 %v2000, %v2140
    %v2147 = vadd.f32 %v2001, %v2142
    %v2148 = vxor.u32 %v2144, 2147483648
    %v2149 = vxor.u32 %v2145, 2147483648
    %v2150 = vxor.u32 %v2146, 2147483648
    %v2151 = vmul.f32 %v2148, 1.442695
    %v2152 = vpow.pop %v2151
    %v2153 = vmul.f32 %v2149, 1.442695
    %v2154 = vpow.pop %v2153
    %v2155 = vmul.f32 %v2150, 1.442695
    %v2156 = vpow.pop %v2155
    %v2157 = vadd.f32 %v2152, 1.0
    %v2158 = vadd.f32 %v2154, 1.0
    %v2159 = vadd.f32 %v2156, 1.0
    %v2160 = vrcp.pop %v2157
    %v2161 = vmul.f32 1.0, %v2160
    %v2162 = vrcp.pop %v2158
    %v2163 = vmul.f32 1.0, %v2162
    %v2164 = vrcp.pop %v2159
    %v2165 = vmul.f32 1.0, %v2164
    %v2166 = vtanh.pop %v2147
    %v2167 = vmul.f32 %v2163, %v1828
    %v2168 = vmul.f32 %v2161, %v2166
    %v2169 = vadd.f32 %v2167, %v2168
    %v2170 = vtanh.pop %v2169
    %v2171 = vmul.f32 %v2165, %v2170
    %2172 = vmatprep.subr.mxu0 %v204
    %2173 = vmatpush1.msra.mxu0 %v203
    %2174 = vmatprep.subr.mxu0 %v200
    %2175 = vmatpush1.msra.mxu0 %v199
    %2176 = vmatprep.subr.mxu0 %v196
    %2177 = vmatpush1.msra.mxu0 %v195
    %2178 = vmatprep.subr.mxu0 %v192
    %2179 = vmatpush1.msra.mxu0 %v191
    %2180 = vmatprep.subr.mxu0 %v188
    %2181 = vmatpush1.msra.mxu0 %v187
    %2182 = vmatprep.subr.mxu0 %v184
    %2183 = vmatpush1.msra.mxu0 %v183
    %2184 = vmatprep.subr.mxu0 %v180
    %2185 = vmatpush1.msra.mxu0 %v179
    %2186 = vmatprep.subr.mxu0 %v176
    %2187 = vmatpush1.msra.mxu0 %v175
    %2188 = vmatprep.subr.mxu0 %v172
    %2189 = vmatpush1.msra.mxu0 %v171
    %2190 = vmatprep.subr.mxu0 %v168
    %2191 = vmatpush1.msra.mxu0 %v167
    %2192 = vmatprep.subr.mxu0 %v164
    %2193 = vmatpush1.msra.mxu0 %v163
    %2194 = vmatprep.subr.mxu0 %v160
    %2195 = vmatpush1.msra.mxu0 %v159
    %2196 = vmatprep.subr.mxu0 %v156
    %2197 = vmatpush1.msra.mxu0 %v155
    %2198 = vmatprep.subr.mxu0 %v152
    %2199 = vmatpush1.msra.mxu0 %v151
    %2200 = vmatprep.subr.mxu0 %v148
    %2201 = vmatpush1.msra.mxu0 %v147
    %2202 = vmatprep.subr.mxu0 %v144
    %2203 = vmatpush1.msra.mxu0 %v143
    %2204 = vmatprep.subr.mxu0 %v268
    %2205 = vmatpush2.msra.mxu0 %v267
    %2206 = vmatprep.subr.mxu0 %v264
    %2207 = vmatpush2.msra.mxu0 %v263
    %2208 = vmatprep.subr.mxu0 %v260
    %2209 = vmatpush2.msra.mxu0 %v259
    %2210 = vmatprep.subr.mxu0 %v256
    %2211 = vmatpush2.msra.mxu0 %v255
    %2212 = vmatprep.subr.mxu0 %v252
    %2213 = vmatpush2.msra.mxu0 %v251
    %2214 = vmatprep.subr.mxu0 %v248
    %2215 = vmatpush2.msra.mxu0 %v247
    %2216 = vmatprep.subr.mxu0 %v244
    %2217 = vmatpush2.msra.mxu0 %v243
    %2218 = vmatprep.subr.mxu0 %v240
    %2219 = vmatpush2.msra.mxu0 %v239
    %2220 = vmatprep.subr.mxu0 %v236
    %2221 = vmatpush2.msra.mxu0 %v235
    %2222 = vmatprep.subr.mxu0 %v232
    %2223 = vmatpush2.msra.mxu0 %v231
    %2224 = vmatprep.subr.mxu0 %v228
    %2225 = vmatpush2.msra.mxu0 %v227
    %2226 = vmatprep.subr.mxu0 %v224
    %2227 = vmatpush2.msra.mxu0 %v223
    %2228 = vmatprep.subr.mxu0 %v220
    %2229 = vmatpush2.msra.mxu0 %v219
    %2230 = vmatprep.subr.mxu0 %v216
    %2231 = vmatpush2.msra.mxu0 %v215
    %2232 = vmatprep.subr.mxu0 %v212
    %2233 = vmatpush2.msra.mxu0 %v211
    %2234 = vmatprep.subr.mxu0 %v208
    %2235 = vmatpush2.msra.mxu0 %v207
    %2236 = vmatprep.mubr.f32.mxu0 %v1996
    %2237 = vmatmul.mubr.f32.gmra.mxu0 %v2171
    %v2238 = vpop.f32.mrf.mxu0
    %v2239 = vadd.f32 %v276, %v2238
    %v2240 = vpop.f32.mrf.mxu0
    %v2241 = vadd.f32 %v280, %v2240
    %2242 = vdwg.mxu0
    %2243 = vmatprep.subr.mxu0 %v206
    %2244 = vmatpush1.msra.mxu0 %v205
    %2245 = vmatprep.subr.mxu0 %v202
    %2246 = vmatpush1.msra.mxu0 %v201
    %2247 = vmatprep.subr.mxu0 %v198
    %2248 = vmatpush1.msra.mxu0 %v197
    %2249 = vmatprep.subr.mxu0 %v194
    %2250 = vmatpush1.msra.mxu0 %v193
    %2251 = vmatprep.subr.mxu0 %v190
    %2252 = vmatpush1.msra.mxu0 %v189
    %2253 = vmatprep.subr.mxu0 %v186
    %2254 = vmatpush1.msra.mxu0 %v185
    %2255 = vmatprep.subr.mxu0 %v182
    %2256 = vmatpush1.msra.mxu0 %v181
    %2257 = vmatprep.subr.mxu0 %v178
    %2258 = vmatpush1.msra.mxu0 %v177
    %2259 = vmatprep.subr.mxu0 %v174
    %2260 = vmatpush1.msra.mxu0 %v173
    %2261 = vmatprep.subr.mxu0 %v170
    %2262 = vmatpush1.msra.mxu0 %v169
    %2263 = vmatprep.subr.mxu0 %v166
    %2264 = vmatpush1.msra.mxu0 %v165
    %2265 = vmatprep.subr.mxu0 %v162
    %2266 = vmatpush1.msra.mxu0 %v161
    %2267 = vmatprep.subr.mxu0 %v158
    %2268 = vmatpush1.msra.mxu0 %v157
    %2269 = vmatprep.subr.mxu0 %v154
    %2270 = vmatpush1.msra.mxu0 %v153
    %2271 = vmatprep.subr.mxu0 %v150
    %2272 = vmatpush1.msra.mxu0 %v149
    %2273 = vmatprep.subr.mxu0 %v146
    %2274 = vmatpush1.msra.mxu0 %v145
    %2275 = vmatprep.subr.mxu0 %v270
    %2276 = vmatpush2.msra.mxu0 %v269
    %2277 = vmatprep.subr.mxu0 %v266
    %2278 = vmatpush2.msra.mxu0 %v265
    %2279 = vmatprep.subr.mxu0 %v262
    %2280 = vmatpush2.msra.mxu0 %v261
    %2281 = vmatprep.subr.mxu0 %v258
    %2282 = vmatpush2.msra.mxu0 %v257
    %2283 = vmatprep.subr.mxu0 %v254
    %2284 = vmatpush2.msra.mxu0 %v253
    %2285 = vmatprep.subr.mxu0 %v250
    %2286 = vmatpush2.msra.mxu0 %v249
    %2287 = vmatprep.subr.mxu0 %v246
    %2288 = vmatpush2.msra.mxu0 %v245
    %2289 = vmatprep.subr.mxu0 %v242
    %2290 = vmatpush2.msra.mxu0 %v241
    %2291 = vmatprep.subr.mxu0 %v238
    %2292 = vmatpush2.msra.mxu0 %v237
    %2293 = vmatprep.subr.mxu0 %v234
    %2294 = vmatpush2.msra.mxu0 %v233
    %2295 = vmatprep.subr.mxu0 %v230
    %2296 = vmatpush2.msra.mxu0 %v229
    %2297 = vmatprep.subr.mxu0 %v226
    %2298 = vmatpush2.msra.mxu0 %v225
    %2299 = vmatprep.subr.mxu0 %v222
    %2300 = vmatpush2.msra.mxu0 %v221
    %2301 = vmatprep.subr.mxu0 %v218
    %2302 = vmatpush2.msra.mxu0 %v217
    %2303 = vmatprep.subr.mxu0 %v214
    %2304 = vmatpush2.msra.mxu0 %v213
    %2305 = vmatprep.subr.mxu0 %v210
    %2306 = vmatpush2.msra.mxu0 %v209
    %2307 = vmatprep.mubr.f32.mxu0 %v1996
    %2308 = vmatmul.mubr.f32.gmra.mxu0 %v2171
    %v2309 = vpop.f32.mrf.mxu0
    %v2310 = vadd.f32 %v284, %v2309
    %v2311 = vpop.f32.mrf.mxu0
    %v2312 = vadd.f32 %v288, %v2311
    %2313 = vdwg.mxu0
    %v2314 = vxor.u32 %v2239, 2147483648
    %v2315 = vxor.u32 %v2241, 2147483648
    %v2316 = vxor.u32 %v2310, 2147483648
    %v2317 = vmul.f32 %v2314, 1.442695
    %v2318 = vpow.pop %v2317
    %v2319 = vmul.f32 %v2315, 1.442695
    %v2320 = vpow.pop %v2319
    %v2321 = vmul.f32 %v2316, 1.442695
    %v2322 = vpow.pop %v2321
    %v2323 = vadd.f32 %v2318, 1.0
    %v2324 = vadd.f32 %v2320, 1.0
    %v2325 = vadd.f32 %v2322, 1.0
    %v2326 = vrcp.pop %v2323
    %v2327 = vmul.f32 1.0, %v2326
    %v2328 = vrcp.pop %v2324
    %v2329 = vmul.f32 1.0, %v2328
    %v2330 = vrcp.pop %v2325
    %v2331 = vmul.f32 1.0, %v2330
    %v2332 = vtanh.pop %v2312
    %v2333 = vmul.f32 %v2329, %v1994
    %v2334 = vmul.f32 %v2327, %v2332
    %v2335 = vadd.f32 %v2333, %v2334
    %v2336 = vtanh.pop %v2335
    %v2337 = vmul.f32 %v2331, %v2336
    %s2338 = scalar_lea.vmem [#allocation2], 192
    %v2339 = vld [vmem:[%s2338] sm:$0xff]
    %v2340 = vld [vmem:[%s2338 + $0x8] sm:$0xff]
    %v2341 = vld [vmem:[%s2338 + $0x10] sm:$0xff]
    %v2342 = vld [vmem:[%s2338 + $0x18] sm:$0xff]
    %2343 = vmatprep.subr.mxu0 %v140
    %2344 = vmatpush1.msra.mxu0 %v139
    %2345 = vmatprep.subr.mxu0 %v136
    %2346 = vmatpush1.msra.mxu0 %v135
    %2347 = vmatprep.subr.mxu0 %v132
    %2348 = vmatpush1.msra.mxu0 %v131
    %2349 = vmatprep.subr.mxu0 %v128
    %2350 = vmatpush1.msra.mxu0 %v127
    %2351 = vmatprep.subr.mxu0 %v124
    %2352 = vmatpush1.msra.mxu0 %v123
    %2353 = vmatprep.subr.mxu0 %v120
    %2354 = vmatpush1.msra.mxu0 %v119
    %2355 = vmatprep.subr.mxu0 %v116
    %2356 = vmatpush1.msra.mxu0 %v115
    %2357 = vmatprep.subr.mxu0 %v112
    %2358 = vmatpush1.msra.mxu0 %v111
    %2359 = vmatprep.subr.mxu0 %v108
    %2360 = vmatpush1.msra.mxu0 %v107
    %2361 = vmatprep.subr.mxu0 %v104
    %2362 = vmatpush1.msra.mxu0 %v103
    %2363 = vmatprep.subr.mxu0 %v100
    %2364 = vmatpush1.msra.mxu0 %v99
    %2365 = vmatprep.subr.mxu0 %v96
    %2366 = vmatpush1.msra.mxu0 %v95
    %2367 = vmatprep.subr.mxu0 %v92
    %2368 = vmatpush1.msra.mxu0 %v91
    %2369 = vmatprep.subr.mxu0 %v88
    %2370 = vmatpush1.msra.mxu0 %v87
    %2371 = vmatprep.subr.mxu0 %v84
    %2372 = vmatpush1.msra.mxu0 %v83
    %2373 = vmatprep.subr.mxu0 %v80
    %2374 = vmatpush1.msra.mxu0 %v79
    %2375 = vmatprep.subr.mxu0 0.0
    %2376 = vmatpush2.msra.mxu0 0.0
    %2377 = vmatprep.subr.mxu0 0.0
    %2378 = vmatpush2.msra.mxu0 0.0
    %2379 = vmatprep.subr.mxu0 0.0
    %2380 = vmatpush2.msra.mxu0 0.0
    %2381 = vmatprep.subr.mxu0 0.0
    %2382 = vmatpush2.msra.mxu0 0.0
    %2383 = vmatprep.subr.mxu0 0.0
    %2384 = vmatpush2.msra.mxu0 0.0
    %2385 = vmatprep.subr.mxu0 0.0
    %2386 = vmatpush2.msra.mxu0 0.0
    %2387 = vmatprep.subr.mxu0 0.0
    %2388 = vmatpush2.msra.mxu0 0.0
    %2389 = vmatprep.subr.mxu0 0.0
    %2390 = vmatpush2.msra.mxu0 0.0
    %2391 = vmatprep.subr.mxu0 0.0
    %2392 = vmatpush2.msra.mxu0 0.0
    %2393 = vmatprep.subr.mxu0 0.0
    %2394 = vmatpush2.msra.mxu0 0.0
    %2395 = vmatprep.subr.mxu0 0.0
    %2396 = vmatpush2.msra.mxu0 0.0
    %2397 = vmatprep.subr.mxu0 0.0
    %2398 = vmatpush2.msra.mxu0 0.0
    %2399 = vmatprep.subr.mxu0 0.0
    %2400 = vmatpush2.msra.mxu0 0.0
    %2401 = vmatprep.subr.mxu0 0.0
    %2402 = vmatpush2.msra.mxu0 0.0
    %2403 = vmatprep.subr.mxu0 0.0
    %2404 = vmatpush2.msra.mxu0 0.0
    %2405 = vmatprep.subr.mxu0 0.0
    %2406 = vmatpush2.msra.mxu0 0.0
    %2407 = vmatprep.mubr.f32.mxu0 0.0
    %2408 = vmatmul.mubr.f32.gmra.mxu0 %v2171
    %v2409 = vpop.f32.mrf.mxu0
    %v2410 = vadd.f32 0.0, %v2409
    %v2411 = vpop.f32.mrf.mxu0
    %v2412 = vadd.f32 0.0, %v2411
    %2413 = vdwg.mxu0
    %2414 = vmatprep.subr.mxu0 %v142
    %2415 = vmatpush1.msra.mxu0 %v141
    %2416 = vmatprep.subr.mxu0 %v138
    %2417 = vmatpush1.msra.mxu0 %v137
    %2418 = vmatprep.subr.mxu0 %v134
    %2419 = vmatpush1.msra.mxu0 %v133
    %2420 = vmatprep.subr.mxu0 %v130
    %2421 = vmatpush1.msra.mxu0 %v129
    %2422 = vmatprep.subr.mxu0 %v126
    %2423 = vmatpush1.msra.mxu0 %v125
    %2424 = vmatprep.subr.mxu0 %v122
    %2425 = vmatpush1.msra.mxu0 %v121
    %2426 = vmatprep.subr.mxu0 %v118
    %2427 = vmatpush1.msra.mxu0 %v117
    %2428 = vmatprep.subr.mxu0 %v114
    %2429 = vmatpush1.msra.mxu0 %v113
    %2430 = vmatprep.subr.mxu0 %v110
    %2431 = vmatpush1.msra.mxu0 %v109
    %2432 = vmatprep.subr.mxu0 %v106
    %2433 = vmatpush1.msra.mxu0 %v105
    %2434 = vmatprep.subr.mxu0 %v102
    %2435 = vmatpush1.msra.mxu0 %v101
    %2436 = vmatprep.subr.mxu0 %v98
    %2437 = vmatpush1.msra.mxu0 %v97
    %2438 = vmatprep.subr.mxu0 %v94
    %2439 = vmatpush1.msra.mxu0 %v93
    %2440 = vmatprep.subr.mxu0 %v90
    %2441 = vmatpush1.msra.mxu0 %v89
    %2442 = vmatprep.subr.mxu0 %v86
    %2443 = vmatpush1.msra.mxu0 %v85
    %2444 = vmatprep.subr.mxu0 %v82
    %2445 = vmatpush1.msra.mxu0 %v81
    %2446 = vmatprep.subr.mxu0 0.0
    %2447 = vmatpush2.msra.mxu0 0.0
    %2448 = vmatprep.subr.mxu0 0.0
    %2449 = vmatpush2.msra.mxu0 0.0
    %2450 = vmatprep.subr.mxu0 0.0
    %2451 = vmatpush2.msra.mxu0 0.0
    %2452 = vmatprep.subr.mxu0 0.0
    %2453 = vmatpush2.msra.mxu0 0.0
    %2454 = vmatprep.subr.mxu0 0.0
    %2455 = vmatpush2.msra.mxu0 0.0
    %2456 = vmatprep.subr.mxu0 0.0
    %2457 = vmatpush2.msra.mxu0 0.0
    %2458 = vmatprep.subr.mxu0 0.0
    %2459 = vmatpush2.msra.mxu0 0.0
    %2460 = vmatprep.subr.mxu0 0.0
    %2461 = vmatpush2.msra.mxu0 0.0
    %2462 = vmatprep.subr.mxu0 0.0
    %2463 = vmatpush2.msra.mxu0 0.0
    %2464 = vmatprep.subr.mxu0 0.0
    %2465 = vmatpush2.msra.mxu0 0.0
    %2466 = vmatprep.subr.mxu0 0.0
    %2467 = vmatpush2.msra.mxu0 0.0
    %2468 = vmatprep.subr.mxu0 0.0
    %2469 = vmatpush2.msra.mxu0 0.0
    %2470 = vmatprep.subr.mxu0 0.0
    %2471 = vmatpush2.msra.mxu0 0.0
    %2472 = vmatprep.subr.mxu0 0.0
    %2473 = vmatpush2.msra.mxu0 0.0
    %2474 = vmatprep.subr.mxu0 0.0
    %2475 = vmatpush2.msra.mxu0 0.0
    %2476 = vmatprep.subr.mxu0 0.0
    %2477 = vmatpush2.msra.mxu0 0.0
    %2478 = vmatprep.mubr.f32.mxu0 0.0
    %2479 = vmatmul.mubr.f32.gmra.mxu0 %v2171
    %v2480 = vpop.f32.mrf.mxu0
    %v2481 = vadd.f32 0.0, %v2480
    %v2482 = vpop.f32.mrf.mxu0
    %v2483 = vadd.f32 0.0, %v2482
    %2484 = vdwg.mxu0
    %v2485 = vadd.f32 %v2339, %v2410
    %v2486 = vadd.f32 %v2340, %v2412
    %v2487 = vadd.f32 %v2341, %v2481
    %v2488 = vadd.f32 %v2342, %v2483
    %v2489 = vxor.u32 %v2485, 2147483648
    %v2490 = vxor.u32 %v2486, 2147483648
    %v2491 = vxor.u32 %v2487, 2147483648
    %v2492 = vmul.f32 %v2489, 1.442695
    %v2493 = vpow.pop %v2492
    %v2494 = vmul.f32 %v2490, 1.442695
    %v2495 = vpow.pop %v2494
    %v2496 = vmul.f32 %v2491, 1.442695
    %v2497 = vpow.pop %v2496
    %v2498 = vadd.f32 %v2493, 1.0
    %v2499 = vadd.f32 %v2495, 1.0
    %v2500 = vadd.f32 %v2497, 1.0
    %v2501 = vrcp.pop %v2498
    %v2502 = vmul.f32 1.0, %v2501
    %v2503 = vrcp.pop %v2499
    %v2504 = vmul.f32 1.0, %v2503
    %v2505 = vrcp.pop %v2500
    %v2506 = vmul.f32 1.0, %v2505
    %v2507 = vtanh.pop %v2488
    %v2508 = vmul.f32 %v2504, %v2169
    %v2509 = vmul.f32 %v2502, %v2507
    %v2510 = vadd.f32 %v2508, %v2509
    %v2511 = vtanh.pop %v2510
    %v2512 = vmul.f32 %v2506, %v2511
    %2513 = vmatprep.subr.mxu0 %v204
    %2514 = vmatpush1.msra.mxu0 %v203
    %2515 = vmatprep.subr.mxu0 %v200
    %2516 = vmatpush1.msra.mxu0 %v199
    %2517 = vmatprep.subr.mxu0 %v196
    %2518 = vmatpush1.msra.mxu0 %v195
    %2519 = vmatprep.subr.mxu0 %v192
    %2520 = vmatpush1.msra.mxu0 %v191
    %2521 = vmatprep.subr.mxu0 %v188
    %2522 = vmatpush1.msra.mxu0 %v187
    %2523 = vmatprep.subr.mxu0 %v184
    %2524 = vmatpush1.msra.mxu0 %v183
    %2525 = vmatprep.subr.mxu0 %v180
    %2526 = vmatpush1.msra.mxu0 %v179
    %2527 = vmatprep.subr.mxu0 %v176
    %2528 = vmatpush1.msra.mxu0 %v175
    %2529 = vmatprep.subr.mxu0 %v172
    %2530 = vmatpush1.msra.mxu0 %v171
    %2531 = vmatprep.subr.mxu0 %v168
    %2532 = vmatpush1.msra.mxu0 %v167
    %2533 = vmatprep.subr.mxu0 %v164
    %2534 = vmatpush1.msra.mxu0 %v163
    %2535 = vmatprep.subr.mxu0 %v160
    %2536 = vmatpush1.msra.mxu0 %v159
    %2537 = vmatprep.subr.mxu0 %v156
    %2538 = vmatpush1.msra.mxu0 %v155
    %2539 = vmatprep.subr.mxu0 %v152
    %2540 = vmatpush1.msra.mxu0 %v151
    %2541 = vmatprep.subr.mxu0 %v148
    %2542 = vmatpush1.msra.mxu0 %v147
    %2543 = vmatprep.subr.mxu0 %v144
    %2544 = vmatpush1.msra.mxu0 %v143
    %2545 = vmatprep.subr.mxu0 %v268
    %2546 = vmatpush2.msra.mxu0 %v267
    %2547 = vmatprep.subr.mxu0 %v264
    %2548 = vmatpush2.msra.mxu0 %v263
    %2549 = vmatprep.subr.mxu0 %v260
    %2550 = vmatpush2.msra.mxu0 %v259
    %2551 = vmatprep.subr.mxu0 %v256
    %2552 = vmatpush2.msra.mxu0 %v255
    %2553 = vmatprep.subr.mxu0 %v252
    %2554 = vmatpush2.msra.mxu0 %v251
    %2555 = vmatprep.subr.mxu0 %v248
    %2556 = vmatpush2.msra.mxu0 %v247
    %2557 = vmatprep.subr.mxu0 %v244
    %2558 = vmatpush2.msra.mxu0 %v243
    %2559 = vmatprep.subr.mxu0 %v240
    %2560 = vmatpush2.msra.mxu0 %v239
    %2561 = vmatprep.subr.mxu0 %v236
    %2562 = vmatpush2.msra.mxu0 %v235
    %2563 = vmatprep.subr.mxu0 %v232
    %2564 = vmatpush2.msra.mxu0 %v231
    %2565 = vmatprep.subr.mxu0 %v228
    %2566 = vmatpush2.msra.mxu0 %v227
    %2567 = vmatprep.subr.mxu0 %v224
    %2568 = vmatpush2.msra.mxu0 %v223
    %2569 = vmatprep.subr.mxu0 %v220
    %2570 = vmatpush2.msra.mxu0 %v219
    %2571 = vmatprep.subr.mxu0 %v216
    %2572 = vmatpush2.msra.mxu0 %v215
    %2573 = vmatprep.subr.mxu0 %v212
    %2574 = vmatpush2.msra.mxu0 %v211
    %2575 = vmatprep.subr.mxu0 %v208
    %2576 = vmatpush2.msra.mxu0 %v207
    %2577 = vmatprep.mubr.f32.mxu0 %v2337
    %2578 = vmatmul.mubr.f32.gmra.mxu0 %v2512
    %v2579 = vpop.f32.mrf.mxu0
    %v2580 = vadd.f32 %v276, %v2579
    %v2581 = vpop.f32.mrf.mxu0
    %v2582 = vadd.f32 %v280, %v2581
    %2583 = vdwg.mxu0
    %2584 = vmatprep.subr.mxu0 %v206
    %2585 = vmatpush1.msra.mxu0 %v205
    %2586 = vmatprep.subr.mxu0 %v202
    %2587 = vmatpush1.msra.mxu0 %v201
    %2588 = vmatprep.subr.mxu0 %v198
    %2589 = vmatpush1.msra.mxu0 %v197
    %2590 = vmatprep.subr.mxu0 %v194
    %2591 = vmatpush1.msra.mxu0 %v193
    %2592 = vmatprep.subr.mxu0 %v190
    %2593 = vmatpush1.msra.mxu0 %v189
    %2594 = vmatprep.subr.mxu0 %v186
    %2595 = vmatpush1.msra.mxu0 %v185
    %2596 = vmatprep.subr.mxu0 %v182
    %2597 = vmatpush1.msra.mxu0 %v181
    %2598 = vmatprep.subr.mxu0 %v178
    %2599 = vmatpush1.msra.mxu0 %v177
    %2600 = vmatprep.subr.mxu0 %v174
    %2601 = vmatpush1.msra.mxu0 %v173
    %2602 = vmatprep.subr.mxu0 %v170
    %2603 = vmatpush1.msra.mxu0 %v169
    %2604 = vmatprep.subr.mxu0 %v166
    %2605 = vmatpush1.msra.mxu0 %v165
    %2606 = vmatprep.subr.mxu0 %v162
    %2607 = vmatpush1.msra.mxu0 %v161
    %2608 = vmatprep.subr.mxu0 %v158
    %2609 = vmatpush1.msra.mxu0 %v157
    %2610 = vmatprep.subr.mxu0 %v154
    %2611 = vmatpush1.msra.mxu0 %v153
    %2612 = vmatprep.subr.mxu0 %v150
    %2613 = vmatpush1.msra.mxu0 %v149
    %2614 = vmatprep.subr.mxu0 %v146
    %2615 = vmatpush1.msra.mxu0 %v145
    %2616 = vmatprep.subr.mxu0 %v270
    %2617 = vmatpush2.msra.mxu0 %v269
    %2618 = vmatprep.subr.mxu0 %v266
    %2619 = vmatpush2.msra.mxu0 %v265
    %2620 = vmatprep.subr.mxu0 %v262
    %2621 = vmatpush2.msra.mxu0 %v261
    %2622 = vmatprep.subr.mxu0 %v258
    %2623 = vmatpush2.msra.mxu0 %v257
    %2624 = vmatprep.subr.mxu0 %v254
    %2625 = vmatpush2.msra.mxu0 %v253
    %2626 = vmatprep.subr.mxu0 %v250
    %2627 = vmatpush2.msra.mxu0 %v249
    %2628 = vmatprep.subr.mxu0 %v246
    %2629 = vmatpush2.msra.mxu0 %v245
    %2630 = vmatprep.subr.mxu0 %v242
    %2631 = vmatpush2.msra.mxu0 %v241
    %2632 = vmatprep.subr.mxu0 %v238
    %2633 = vmatpush2.msra.mxu0 %v237
    %2634 = vmatprep.subr.mxu0 %v234
    %2635 = vmatpush2.msra.mxu0 %v233
    %2636 = vmatprep.subr.mxu0 %v230
    %2637 = vmatpush2.msra.mxu0 %v229
    %2638 = vmatprep.subr.mxu0 %v226
    %2639 = vmatpush2.msra.mxu0 %v225
    %2640 = vmatprep.subr.mxu0 %v222
    %2641 = vmatpush2.msra.mxu0 %v221
    %2642 = vmatprep.subr.mxu0 %v218
    %2643 = vmatpush2.msra.mxu0 %v217
    %2644 = vmatprep.subr.mxu0 %v214
    %2645 = vmatpush2.msra.mxu0 %v213
    %2646 = vmatprep.subr.mxu0 %v210
    %2647 = vmatpush2.msra.mxu0 %v209
    %2648 = vmatprep.mubr.f32.mxu0 %v2337
    %2649 = vmatmul.mubr.f32.gmra.mxu0 %v2512
    %v2650 = vpop.f32.mrf.mxu0
    %v2651 = vadd.f32 %v284, %v2650
    %v2652 = vpop.f32.mrf.mxu0
    %v2653 = vadd.f32 %v288, %v2652
    %2654 = vdwg.mxu0
    %v2655 = vxor.u32 %v2580, 2147483648
    %v2656 = vxor.u32 %v2582, 2147483648
    %v2657 = vxor.u32 %v2651, 2147483648
    %v2658 = vmul.f32 %v2655, 1.442695
    %v2659 = vpow.pop %v2658
    %v2660 = vmul.f32 %v2656, 1.442695
    %v2661 = vpow.pop %v2660
    %v2662 = vmul.f32 %v2657, 1.442695
    %v2663 = vpow.pop %v2662
    %v2664 = vadd.f32 %v2659, 1.0
    %v2665 = vadd.f32 %v2661, 1.0
    %v2666 = vadd.f32 %v2663, 1.0
    %v2667 = vrcp.pop %v2664
    %v2668 = vmul.f32 1.0, %v2667
    %v2669 = vrcp.pop %v2665
    %v2670 = vmul.f32 1.0, %v2669
    %v2671 = vrcp.pop %v2666
    %v2672 = vmul.f32 1.0, %v2671
    %v2673 = vtanh.pop %v2653
    %v2674 = vmul.f32 %v2670, %v2335
    %v2675 = vmul.f32 %v2668, %v2673
    %v2676 = vadd.f32 %v2674, %v2675
    %v2677 = vtanh.pop %v2676
    %v2678 = vmul.f32 %v2672, %v2677
    %s2679 = scalar_lea.vmem [#allocation2], 224
    %v2680 = vld [vmem:[%s2679] sm:$0xff]
    %v2681 = vld [vmem:[%s2679 + $0x8] sm:$0xff]
    %v2682 = vld [vmem:[%s2679 + $0x10] sm:$0xff]
    %v2683 = vld [vmem:[%s2679 + $0x18] sm:$0xff]
    %2684 = vmatprep.subr.mxu0 %v140
    %2685 = vmatpush1.msra.mxu0 %v139
    %2686 = vmatprep.subr.mxu0 %v136
    %2687 = vmatpush1.msra.mxu0 %v135
    %2688 = vmatprep.subr.mxu0 %v132
    %2689 = vmatpush1.msra.mxu0 %v131
    %2690 = vmatprep.subr.mxu0 %v128
    %2691 = vmatpush1.msra.mxu0 %v127
    %2692 = vmatprep.subr.mxu0 %v124
    %2693 = vmatpush1.msra.mxu0 %v123
    %2694 = vmatprep.subr.mxu0 %v120
    %2695 = vmatpush1.msra.mxu0 %v119
    %2696 = vmatprep.subr.mxu0 %v116
    %2697 = vmatpush1.msra.mxu0 %v115
    %2698 = vmatprep.subr.mxu0 %v112
    %2699 = vmatpush1.msra.mxu0 %v111
    %2700 = vmatprep.subr.mxu0 %v108
    %2701 = vmatpush1.msra.mxu0 %v107
    %2702 = vmatprep.subr.mxu0 %v104
    %2703 = vmatpush1.msra.mxu0 %v103
    %2704 = vmatprep.subr.mxu0 %v100
    %2705 = vmatpush1.msra.mxu0 %v99
    %2706 = vmatprep.subr.mxu0 %v96
    %2707 = vmatpush1.msra.mxu0 %v95
    %2708 = vmatprep.subr.mxu0 %v92
    %2709 = vmatpush1.msra.mxu0 %v91
    %2710 = vmatprep.subr.mxu0 %v88
    %2711 = vmatpush1.msra.mxu0 %v87
    %2712 = vmatprep.subr.mxu0 %v84
    %2713 = vmatpush1.msra.mxu0 %v83
    %2714 = vmatprep.subr.mxu0 %v80
    %2715 = vmatpush1.msra.mxu0 %v79
    %2716 = vmatprep.subr.mxu0 0.0
    %2717 = vmatpush2.msra.mxu0 0.0
    %2718 = vmatprep.subr.mxu0 0.0
    %2719 = vmatpush2.msra.mxu0 0.0
    %2720 = vmatprep.subr.mxu0 0.0
    %2721 = vmatpush2.msra.mxu0 0.0
    %2722 = vmatprep.subr.mxu0 0.0
    %2723 = vmatpush2.msra.mxu0 0.0
    %2724 = vmatprep.subr.mxu0 0.0
    %2725 = vmatpush2.msra.mxu0 0.0
    %2726 = vmatprep.subr.mxu0 0.0
    %2727 = vmatpush2.msra.mxu0 0.0
    %2728 = vmatprep.subr.mxu0 0.0
    %2729 = vmatpush2.msra.mxu0 0.0
    %2730 = vmatprep.subr.mxu0 0.0
    %2731 = vmatpush2.msra.mxu0 0.0
    %2732 = vmatprep.subr.mxu0 0.0
    %2733 = vmatpush2.msra.mxu0 0.0
    %2734 = vmatprep.subr.mxu0 0.0
    %2735 = vmatpush2.msra.mxu0 0.0
    %2736 = vmatprep.subr.mxu0 0.0
    %2737 = vmatpush2.msra.mxu0 0.0
    %2738 = vmatprep.subr.mxu0 0.0
    %2739 = vmatpush2.msra.mxu0 0.0
    %2740 = vmatprep.subr.mxu0 0.0
    %2741 = vmatpush2.msra.mxu0 0.0
    %2742 = vmatprep.subr.mxu0 0.0
    %2743 = vmatpush2.msra.mxu0 0.0
    %2744 = vmatprep.subr.mxu0 0.0
    %2745 = vmatpush2.msra.mxu0 0.0
    %2746 = vmatprep.subr.mxu0 0.0
    %2747 = vmatpush2.msra.mxu0 0.0
    %2748 = vmatprep.mubr.f32.mxu0 0.0
    %2749 = vmatmul.mubr.f32.gmra.mxu0 %v2512
    %v2750 = vpop.f32.mrf.mxu0
    %v2751 = vadd.f32 0.0, %v2750
    %v2752 = vpop.f32.mrf.mxu0
    %v2753 = vadd.f32 0.0, %v2752
    %2754 = vdwg.mxu0
    %2755 = vmatprep.subr.mxu0 %v142
    %2756 = vmatpush1.msra.mxu0 %v141
    %2757 = vmatprep.subr.mxu0 %v138
    %2758 = vmatpush1.msra.mxu0 %v137
    %2759 = vmatprep.subr.mxu0 %v134
    %2760 = vmatpush1.msra.mxu0 %v133
    %2761 = vmatprep.subr.mxu0 %v130
    %2762 = vmatpush1.msra.mxu0 %v129
    %2763 = vmatprep.subr.mxu0 %v126
    %2764 = vmatpush1.msra.mxu0 %v125
    %2765 = vmatprep.subr.mxu0 %v122
    %2766 = vmatpush1.msra.mxu0 %v121
    %2767 = vmatprep.subr.mxu0 %v118
    %2768 = vmatpush1.msra.mxu0 %v117
    %2769 = vmatprep.subr.mxu0 %v114
    %2770 = vmatpush1.msra.mxu0 %v113
    %2771 = vmatprep.subr.mxu0 %v110
    %2772 = vmatpush1.msra.mxu0 %v109
    %2773 = vmatprep.subr.mxu0 %v106
    %2774 = vmatpush1.msra.mxu0 %v105
    %2775 = vmatprep.subr.mxu0 %v102
    %2776 = vmatpush1.msra.mxu0 %v101
    %2777 = vmatprep.subr.mxu0 %v98
    %2778 = vmatpush1.msra.mxu0 %v97
    %2779 = vmatprep.subr.mxu0 %v94
    %2780 = vmatpush1.msra.mxu0 %v93
    %2781 = vmatprep.subr.mxu0 %v90
    %2782 = vmatpush1.msra.mxu0 %v89
    %2783 = vmatprep.subr.mxu0 %v86
    %2784 = vmatpush1.msra.mxu0 %v85
    %2785 = vmatprep.subr.mxu0 %v82
    %2786 = vmatpush1.msra.mxu0 %v81
    %2787 = vmatprep.subr.mxu0 0.0
    %2788 = vmatpush2.msra.mxu0 0.0
    %2789 = vmatprep.subr.mxu0 0.0
    %2790 = vmatpush2.msra.mxu0 0.0
    %2791 = vmatprep.subr.mxu0 0.0
    %2792 = vmatpush2.msra.mxu0 0.0
    %2793 = vmatprep.subr.mxu0 0.0
    %2794 = vmatpush2.msra.mxu0 0.0
    %2795 = vmatprep.subr.mxu0 0.0
    %2796 = vmatpush2.msra.mxu0 0.0
    %2797 = vmatprep.subr.mxu0 0.0
    %2798 = vmatpush2.msra.mxu0 0.0
    %2799 = vmatprep.subr.mxu0 0.0
    %2800 = vmatpush2.msra.mxu0 0.0
    %2801 = vmatprep.subr.mxu0 0.0
    %2802 = vmatpush2.msra.mxu0 0.0
    %2803 = vmatprep.subr.mxu0 0.0
    %2804 = vmatpush2.msra.mxu0 0.0
    %2805 = vmatprep.subr.mxu0 0.0
    %2806 = vmatpush2.msra.mxu0 0.0
    %2807 = vmatprep.subr.mxu0 0.0
    %2808 = vmatpush2.msra.mxu0 0.0
    %2809 = vmatprep.subr.mxu0 0.0
    %2810 = vmatpush2.msra.mxu0 0.0
    %2811 = vmatprep.subr.mxu0 0.0
    %2812 = vmatpush2.msra.mxu0 0.0
    %2813 = vmatprep.subr.mxu0 0.0
    %2814 = vmatpush2.msra.mxu0 0.0
    %2815 = vmatprep.subr.mxu0 0.0
    %2816 = vmatpush2.msra.mxu0 0.0
    %2817 = vmatprep.subr.mxu0 0.0
    %2818 = vmatpush2.msra.mxu0 0.0
    %2819 = vmatprep.mubr.f32.mxu0 0.0
    %2820 = vmatmul.mubr.f32.gmra.mxu0 %v2512
    %v2821 = vpop.f32.mrf.mxu0
    %v2822 = vadd.f32 0.0, %v2821
    %v2823 = vpop.f32.mrf.mxu0
    %v2824 = vadd.f32 0.0, %v2823
    %2825 = vdwg.mxu0
    %v2826 = vadd.f32 %v2680, %v2751
    %v2827 = vadd.f32 %v2681, %v2753
    %v2828 = vadd.f32 %v2682, %v2822
    %v2829 = vadd.f32 %v2683, %v2824
    %v2830 = vxor.u32 %v2826, 2147483648
    %v2831 = vxor.u32 %v2827, 2147483648
    %v2832 = vxor.u32 %v2828, 2147483648
    %v2833 = vmul.f32 %v2830, 1.442695
    %v2834 = vpow.pop %v2833
    %v2835 = vmul.f32 %v2831, 1.442695
    %v2836 = vpow.pop %v2835
    %v2837 = vmul.f32 %v2832, 1.442695
    %v2838 = vpow.pop %v2837
    %v2839 = vadd.f32 %v2834, 1.0
    %v2840 = vadd.f32 %v2836, 1.0
    %v2841 = vadd.f32 %v2838, 1.0
    %v2842 = vrcp.pop %v2839
    %v2843 = vmul.f32 1.0, %v2842
    %v2844 = vrcp.pop %v2840
    %v2845 = vmul.f32 1.0, %v2844
    %v2846 = vrcp.pop %v2841
    %v2847 = vmul.f32 1.0, %v2846
    %v2848 = vtanh.pop %v2829
    %v2849 = vmul.f32 %v2845, %v2510
    %v2850 = vmul.f32 %v2843, %v2848
    %v2851 = vadd.f32 %v2849, %v2850
    %v2852 = vtanh.pop %v2851
    %v2853 = vmul.f32 %v2847, %v2852
    %2854 = vmatprep.subr.mxu0 %v204
    %2855 = vmatpush1.msra.mxu0 %v203
    %2856 = vmatprep.subr.mxu0 %v200
    %2857 = vmatpush1.msra.mxu0 %v199
    %2858 = vmatprep.subr.mxu0 %v196
    %2859 = vmatpush1.msra.mxu0 %v195
    %2860 = vmatprep.subr.mxu0 %v192
    %2861 = vmatpush1.msra.mxu0 %v191
    %2862 = vmatprep.subr.mxu0 %v188
    %2863 = vmatpush1.msra.mxu0 %v187
    %2864 = vmatprep.subr.mxu0 %v184
    %2865 = vmatpush1.msra.mxu0 %v183
    %2866 = vmatprep.subr.mxu0 %v180
    %2867 = vmatpush1.msra.mxu0 %v179
    %2868 = vmatprep.subr.mxu0 %v176
    %2869 = vmatpush1.msra.mxu0 %v175
    %2870 = vmatprep.subr.mxu0 %v172
    %2871 = vmatpush1.msra.mxu0 %v171
    %2872 = vmatprep.subr.mxu0 %v168
    %2873 = vmatpush1.msra.mxu0 %v167
    %2874 = vmatprep.subr.mxu0 %v164
    %2875 = vmatpush1.msra.mxu0 %v163
    %2876 = vmatprep.subr.mxu0 %v160
    %2877 = vmatpush1.msra.mxu0 %v159
    %2878 = vmatprep.subr.mxu0 %v156
    %2879 = vmatpush1.msra.mxu0 %v155
    %2880 = vmatprep.subr.mxu0 %v152
    %2881 = vmatpush1.msra.mxu0 %v151
    %2882 = vmatprep.subr.mxu0 %v148
    %2883 = vmatpush1.msra.mxu0 %v147
    %2884 = vmatprep.subr.mxu0 %v144
    %2885 = vmatpush1.msra.mxu0 %v143
    %2886 = vmatprep.subr.mxu0 %v268
    %2887 = vmatpush2.msra.mxu0 %v267
    %2888 = vmatprep.subr.mxu0 %v264
    %2889 = vmatpush2.msra.mxu0 %v263
    %2890 = vmatprep.subr.mxu0 %v260
    %2891 = vmatpush2.msra.mxu0 %v259
    %2892 = vmatprep.subr.mxu0 %v256
    %2893 = vmatpush2.msra.mxu0 %v255
    %2894 = vmatprep.subr.mxu0 %v252
    %2895 = vmatpush2.msra.mxu0 %v251
    %2896 = vmatprep.subr.mxu0 %v248
    %2897 = vmatpush2.msra.mxu0 %v247
    %2898 = vmatprep.subr.mxu0 %v244
    %2899 = vmatpush2.msra.mxu0 %v243
    %2900 = vmatprep.subr.mxu0 %v240
    %2901 = vmatpush2.msra.mxu0 %v239
    %2902 = vmatprep.subr.mxu0 %v236
    %2903 = vmatpush2.msra.mxu0 %v235
    %2904 = vmatprep.subr.mxu0 %v232
    %2905 = vmatpush2.msra.mxu0 %v231
    %2906 = vmatprep.subr.mxu0 %v228
    %2907 = vmatpush2.msra.mxu0 %v227
    %2908 = vmatprep.subr.mxu0 %v224
    %2909 = vmatpush2.msra.mxu0 %v223
    %2910 = vmatprep.subr.mxu0 %v220
    %2911 = vmatpush2.msra.mxu0 %v219
    %2912 = vmatprep.subr.mxu0 %v216
    %2913 = vmatpush2.msra.mxu0 %v215
    %2914 = vmatprep.subr.mxu0 %v212
    %2915 = vmatpush2.msra.mxu0 %v211
    %2916 = vmatprep.subr.mxu0 %v208
    %2917 = vmatpush2.msra.mxu0 %v207
    %2918 = vmatprep.mubr.f32.mxu0 %v2678
    %2919 = vmatmul.mubr.f32.gmra.mxu0 %v2853
    %v2920 = vpop.f32.mrf.mxu0
    %v2921 = vadd.f32 %v276, %v2920
    %v2922 = vpop.f32.mrf.mxu0
    %v2923 = vadd.f32 %v280, %v2922
    %2924 = vdwg.mxu0
    %2925 = vmatprep.subr.mxu0 %v206
    %2926 = vmatpush1.msra.mxu0 %v205
    %2927 = vmatprep.subr.mxu0 %v202
    %2928 = vmatpush1.msra.mxu0 %v201
    %2929 = vmatprep.subr.mxu0 %v198
    %2930 = vmatpush1.msra.mxu0 %v197
    %2931 = vmatprep.subr.mxu0 %v194
    %2932 = vmatpush1.msra.mxu0 %v193
    %2933 = vmatprep.subr.mxu0 %v190
    %2934 = vmatpush1.msra.mxu0 %v189
    %2935 = vmatprep.subr.mxu0 %v186
    %2936 = vmatpush1.msra.mxu0 %v185
    %2937 = vmatprep.subr.mxu0 %v182
    %2938 = vmatpush1.msra.mxu0 %v181
    %2939 = vmatprep.subr.mxu0 %v178
    %2940 = vmatpush1.msra.mxu0 %v177
    %2941 = vmatprep.subr.mxu0 %v174
    %2942 = vmatpush1.msra.mxu0 %v173
    %2943 = vmatprep.subr.mxu0 %v170
    %2944 = vmatpush1.msra.mxu0 %v169
    %2945 = vmatprep.subr.mxu0 %v166
    %2946 = vmatpush1.msra.mxu0 %v165
    %2947 = vmatprep.subr.mxu0 %v162
    %2948 = vmatpush1.msra.mxu0 %v161
    %2949 = vmatprep.subr.mxu0 %v158
    %2950 = vmatpush1.msra.mxu0 %v157
    %2951 = vmatprep.subr.mxu0 %v154
    %2952 = vmatpush1.msra.mxu0 %v153
    %2953 = vmatprep.subr.mxu0 %v150
    %2954 = vmatpush1.msra.mxu0 %v149
    %2955 = vmatprep.subr.mxu0 %v146
    %2956 = vmatpush1.msra.mxu0 %v145
    %2957 = vmatprep.subr.mxu0 %v270
    %2958 = vmatpush2.msra.mxu0 %v269
    %2959 = vmatprep.subr.mxu0 %v266
    %2960 = vmatpush2.msra.mxu0 %v265
    %2961 = vmatprep.subr.mxu0 %v262
    %2962 = vmatpush2.msra.mxu0 %v261
    %2963 = vmatprep.subr.mxu0 %v258
    %2964 = vmatpush2.msra.mxu0 %v257
    %2965 = vmatprep.subr.mxu0 %v254
    %2966 = vmatpush2.msra.mxu0 %v253
    %2967 = vmatprep.subr.mxu0 %v250
    %2968 = vmatpush2.msra.mxu0 %v249
    %2969 = vmatprep.subr.mxu0 %v246
    %2970 = vmatpush2.msra.mxu0 %v245
    %2971 = vmatprep.subr.mxu0 %v242
    %2972 = vmatpush2.msra.mxu0 %v241
    %2973 = vmatprep.subr.mxu0 %v238
    %2974 = vmatpush2.msra.mxu0 %v237
    %2975 = vmatprep.subr.mxu0 %v234
    %2976 = vmatpush2.msra.mxu0 %v233
    %2977 = vmatprep.subr.mxu0 %v230
    %2978 = vmatpush2.msra.mxu0 %v229
    %2979 = vmatprep.subr.mxu0 %v226
    %2980 = vmatpush2.msra.mxu0 %v225
    %2981 = vmatprep.subr.mxu0 %v222
    %2982 = vmatpush2.msra.mxu0 %v221
    %2983 = vmatprep.subr.mxu0 %v218
    %2984 = vmatpush2.msra.mxu0 %v217
    %2985 = vmatprep.subr.mxu0 %v214
    %2986 = vmatpush2.msra.mxu0 %v213
    %2987 = vmatprep.subr.mxu0 %v210
    %2988 = vmatpush2.msra.mxu0 %v209
    %2989 = vmatprep.mubr.f32.mxu0 %v2678
    %2990 = vmatmul.mubr.f32.gmra.mxu0 %v2853
    %v2991 = vpop.f32.mrf.mxu0
    %v2992 = vadd.f32 %v284, %v2991
    %v2993 = vpop.f32.mrf.mxu0
    %v2994 = vadd.f32 %v288, %v2993
    %2995 = vdwg.mxu0
    %v2996 = vxor.u32 %v2921, 2147483648
    %v2997 = vxor.u32 %v2923, 2147483648
    %v2998 = vxor.u32 %v2992, 2147483648
    %v2999 = vmul.f32 %v2996, 1.442695
    %v3000 = vpow.pop %v2999
    %v3001 = vmul.f32 %v2997, 1.442695
    %v3002 = vpow.pop %v3001
    %v3003 = vmul.f32 %v2998, 1.442695
    %v3004 = vpow.pop %v3003
    %v3005 = vadd.f32 %v3000, 1.0
    %v3006 = vadd.f32 %v3002, 1.0
    %v3007 = vadd.f32 %v3004, 1.0
    %v3008 = vrcp.pop %v3005
    %v3009 = vmul.f32 1.0, %v3008
    %v3010 = vrcp.pop %v3006
    %v3011 = vmul.f32 1.0, %v3010
    %v3012 = vrcp.pop %v3007
    %v3013 = vmul.f32 1.0, %v3012
    %v3014 = vtanh.pop %v2994
    %v3015 = vmul.f32 %v3011, %v2676
    %v3016 = vmul.f32 %v3009, %v3014
    %v3017 = vadd.f32 %v3015, %v3016
    %v3018 = vtanh.pop %v3017
    %v3019 = vmul.f32 %v3013, %v3018
    %v3020 = vmax.f32 %v3019, 0.0
    %v3021 = vld [vmem:[#allocation8] sm:$0xff]
    %v3022 = vld [vmem:[#allocation8 + $0x8] sm:$0xff]
    %v3023 = vld [vmem:[#allocation8 + $0x10] sm:$0xff]
    %v3024 = vld [vmem:[#allocation8 + $0x18] sm:$0xff]
    %v3025 = vld [vmem:[#allocation8 + $0x20] sm:$0xff]
    %v3026 = vld [vmem:[#allocation8 + $0x28] sm:$0xff]
    %v3027 = vld [vmem:[#allocation8 + $0x30] sm:$0xff]
    %v3028 = vld [vmem:[#allocation8 + $0x38] sm:$0xff]
    %v3029 = vld [vmem:[#allocation8 + $0x40] sm:$0xff]
    %v3030 = vld [vmem:[#allocation8 + $0x48] sm:$0xff]
    %v3031 = vld [vmem:[#allocation8 + $0x50] sm:$0xff]
    %v3032 = vld [vmem:[#allocation8 + $0x58] sm:$0xff]
    %v3033 = vld [vmem:[#allocation8 + $0x60] sm:$0xff]
    %v3034 = vld [vmem:[#allocation8 + $0x68] sm:$0xff]
    %v3035 = vld [vmem:[#allocation8 + $0x70] sm:$0xff]
    %v3036 = vld [vmem:[#allocation8 + $0x78] sm:$0xff]
    %v3037 = vld [vmem:[%s5] sm:$0x1]
    %v3039 = vlaneseq
    %v3040 = vshrl.u32 %v3039, 7
    %v3041 = vsub.s32 0, %v3040
    %v3042 = vrot.slane %v3037, %v3041
    %3044 = vmatprep.subr.mxu0 0.0
    %3045 = vmatpush1.msra.mxu0 %v3036
    %3046 = vmatprep.subr.mxu0 0.0
    %3047 = vmatpush1.msra.mxu0 %v3035
    %3048 = vmatprep.subr.mxu0 0.0
    %3049 = vmatpush1.msra.mxu0 %v3034
    %3050 = vmatprep.subr.mxu0 0.0
    %3051 = vmatpush1.msra.mxu0 %v3033
    %3052 = vmatprep.subr.mxu0 0.0
    %3053 = vmatpush1.msra.mxu0 %v3032
    %3054 = vmatprep.subr.mxu0 0.0
    %3055 = vmatpush1.msra.mxu0 %v3031
    %3056 = vmatprep.subr.mxu0 0.0
    %3057 = vmatpush1.msra.mxu0 %v3030
    %3058 = vmatprep.subr.mxu0 0.0
    %3059 = vmatpush1.msra.mxu0 %v3029
    %3060 = vmatprep.subr.mxu0 0.0
    %3061 = vmatpush1.msra.mxu0 %v3028
    %3062 = vmatprep.subr.mxu0 0.0
    %3063 = vmatpush1.msra.mxu0 %v3027
    %3064 = vmatprep.subr.mxu0 0.0
    %3065 = vmatpush1.msra.mxu0 %v3026
    %3066 = vmatprep.subr.mxu0 0.0
    %3067 = vmatpush1.msra.mxu0 %v3025
    %3068 = vmatprep.subr.mxu0 0.0
    %3069 = vmatpush1.msra.mxu0 %v3024
    %3070 = vmatprep.subr.mxu0 0.0
    %3071 = vmatpush1.msra.mxu0 %v3023
    %3072 = vmatprep.subr.mxu0 0.0
    %3073 = vmatpush1.msra.mxu0 %v3022
    %3074 = vmatprep.subr.mxu0 0.0
    %3075 = vmatpush1.msra.mxu0 %v3021
    %3076 = vmatprep.subr.mxu0 0.0
    %3077 = vmatpush2.msra.mxu0 0.0
    %3078 = vmatprep.subr.mxu0 0.0
    %3079 = vmatpush2.msra.mxu0 0.0
    %3080 = vmatprep.subr.mxu0 0.0
    %3081 = vmatpush2.msra.mxu0 0.0
    %3082 = vmatprep.subr.mxu0 0.0
    %3083 = vmatpush2.msra.mxu0 0.0
    %3084 = vmatprep.subr.mxu0 0.0
    %3085 = vmatpush2.msra.mxu0 0.0
    %3086 = vmatprep.subr.mxu0 0.0
    %3087 = vmatpush2.msra.mxu0 0.0
    %3088 = vmatprep.subr.mxu0 0.0
    %3089 = vmatpush2.msra.mxu0 0.0
    %3090 = vmatprep.subr.mxu0 0.0
    %3091 = vmatpush2.msra.mxu0 0.0
    %3092 = vmatprep.subr.mxu0 0.0
    %3093 = vmatpush2.msra.mxu0 0.0
    %3094 = vmatprep.subr.mxu0 0.0
    %3095 = vmatpush2.msra.mxu0 0.0
    %3096 = vmatprep.subr.mxu0 0.0
    %3097 = vmatpush2.msra.mxu0 0.0
    %3098 = vmatprep.subr.mxu0 0.0
    %3099 = vmatpush2.msra.mxu0 0.0
    %3100 = vmatprep.subr.mxu0 0.0
    %3101 = vmatpush2.msra.mxu0 0.0
    %3102 = vmatprep.subr.mxu0 0.0
    %3103 = vmatpush2.msra.mxu0 0.0
    %3104 = vmatprep.subr.mxu0 0.0
    %3105 = vmatpush2.msra.mxu0 0.0
    %3106 = vmatprep.subr.mxu0 0.0
    %3107 = vmatpush2.msra.mxu0 0.0
    %3108 = vmatprep.mubr.f32.mxu0 0.0
    %3109 = vmatmul.mubr.f32.gmra.mxu0 %v3020
    %v3110 = vpop.f32.mrf.mxu0
    %v3111 = vadd.f32 %v3042, %v3110
    %v3112 = vpop.f32.mrf.mxu0
    %3113 = vdwg.mxu0
    %3114 = vst [vmem:[#allocation10] sm:$0xff] %v3111
    // Predicated region
    $region42: #{tpu_custom_call.1} parent=1 // pred_check
      _
    $region43: #{tpu_custom_call.1} parent=1 // pred_check_branch
      %3116 = sbr.rel (0) target = $region45
    $region44: #{tpu_custom_call.1} parent=1 // pred_region
      %s3118 = ssub.s32 128, 128
      %3119 = vsyncadd [#allocation4], %s3118
      %s3121 = sshll.u32 [#allocation10], 4
      %s3122 = int_to_ptr.vmem [resolvable:$true] %s3121
      %3124 = dma.vmem_to_hbm [thread:$0]  %s3122, 128, %s6, [#allocation4]
    $region45: #{tpu_custom_call.1} parent=1 // pred_fallthru
      _
    // Predicated region
    $region46: #{tpu_custom_call.1} parent=1 // pred_check
      _
    $region47: #{tpu_custom_call.1} parent=1 // pred_check_branch
      %3126 = sbr.rel (0) target = $region49
    $region48: #{tpu_custom_call.1} parent=1 // pred_region
      %3127 = dma.done [#allocation4], 128
    $region49: #{tpu_custom_call.1} parent=1 // pred_fallthru
      _
    %3128 = vsyncpa [#allocation3], 1
    %3129 = vsyncpa [#allocation6], 1
    %3130 = vsyncpa [#allocation9], 1
    %3131 = vsyncpa [#allocation4], 1

</llo_original>
